<compile_context>
chip_gen: v5e
topology: v5e:2x2
jax: 0.10.0
libtpu: 0.0.40
codegen_flags: <defaults>
</compile_context>

<pallas_src>
import functools
import math

import jax
import jax.numpy as jnp
from jax import lax
from jax.experimental import pallas as pl
from jax.experimental.pallas import tpu as pltpu

# ------------------------- "config" (small synthetic) -------------------------
VOCAB = 128
HIDDEN = 32
NUM_LAYERS = 2
NUM_HEADS = 4
HEAD_DIM = HIDDEN // NUM_HEADS
INTER = 64
MAX_POS = 16
TYPE_VOCAB = 2
LN_EPS = 1e-12

# Kept f32 so the toy-sized model matches the PyTorch reference numerics; switch to
# bfloat16 operands (f32 accumulation) at real sizes for full-rate MXU throughput and
# half the weight DMA / VMEM footprint.
MXU_DTYPE = jnp.float32


# ------------------------------ in-kernel helpers ------------------------------
def _mm(a, b):
    """a @ b on the MXU with f32 accumulation."""
    return jnp.dot(a.astype(MXU_DTYPE), b.astype(MXU_DTYPE),
                   preferred_element_type=jnp.float32)


def _mm_nt(a, b):
    """a @ b.T without materializing a transpose (contract last dims on the MXU)."""
    return lax.dot_general(a.astype(MXU_DTYPE), b.astype(MXU_DTYPE),
                           (((1,), (1,)), ((), ())),
                           preferred_element_type=jnp.float32)


def _gelu(x):
    # original BERT gelu: x * 0.5 * (1 + erf(x / sqrt(2)))
    return x * 0.5 * (1.0 + lax.erf(x * (1.0 / math.sqrt(2.0))))


def _ln(x, g, b, eps=LN_EPS):
    mean = jnp.mean(x, axis=-1, keepdims=True)
    var = jnp.mean(jnp.square(x - mean), axis=-1, keepdims=True)
    return (x - mean) * lax.rsqrt(var + eps) * g + b


# ------------------------------- Pallas kernels -------------------------------
def _bert_layer_kernel(h_ref, m_ref, qkvw_ref, qkvb_ref, aow_ref, aob_ref,
                       alng_ref, alnb_ref, iw_ref, ib_ref, ow_ref, ob_ref,
                       olng_ref, olnb_ref, ilng_ref, ilnb_ref, o_ref, *,
                       batch, seq, num_heads, head_dim, apply_input_ln):
    """One full BertLayer for the whole (B*S, H) activation; everything stays in VMEM."""
    hidden = num_heads * head_dim
    x = h_ref[...].astype(jnp.float32)                        # (B*S, H)
    if apply_input_ln:                                        # embedding LN fused (layer 0)
        x = _ln(x, ilng_ref[...], ilnb_ref[...])

    # --- BertSelfAttention: one fused lane-dense QKV projection (not 3*NH tiny matmuls) ---
    qkv = _mm(x, qkvw_ref[...]) + qkvb_ref[...]               # (B*S, 3H)

    # Hoist the additive-mask broadcast out of the head loop (no per-head broadcast_in_dim).
    mask = jnp.broadcast_to(m_ref[...].astype(jnp.float32), (batch, seq, seq))
    scale = 1.0 / math.sqrt(head_dim)

    # Only the inherently per-head score / PV products remain per head; each is a single
    # 3-D dot_general batched over B.  (At real NUM_HEADS these fold further into one
    # head-batched einsum once activations are laid out (B, NH, S, D) in HBM.)
    ctx_heads = []
    for h in range(num_heads):                                # trace-time unroll (NH=4)
        lo = h * head_dim
        q = qkv[:, lo:lo + head_dim].reshape(batch, seq, head_dim)
        k = qkv[:, hidden + lo:hidden + lo + head_dim].reshape(batch, seq, head_dim)
        v = qkv[:, 2 * hidden + lo:2 * hidden + lo + head_dim].reshape(batch, seq, head_dim)
        s = jnp.einsum('bqd,bkd->bqk', q * scale, k,
                       preferred_element_type=jnp.float32) + mask       # (B, S, S)
        s = s - jnp.max(s, axis=-1, keepdims=True)
        p = jnp.exp(s)
        # divide -> EUP reciprocal (frees VALU slots); differs from exact div by ~1 ulp.
        p = p * pl.reciprocal(jnp.sum(p, axis=-1, keepdims=True), approx=True)
        # TODO(synk): attention dropout is identity (eval-mode semantics).
        ctx = jnp.einsum('bqk,bkd->bqd', p, v,
                         preferred_element_type=jnp.float32)            # (B, S, D)
        ctx_heads.append(ctx.reshape(batch * seq, head_dim))
    ctx2d = jnp.concatenate(ctx_heads, axis=-1)               # (B*S, H)

    # Single attention-output projection on the full-width context.
    attn = _mm(ctx2d, aow_ref[...]) + aob_ref[...]

    # BertSelfOutput: residual + LayerNorm fused.
    a = _ln(attn + x, alng_ref[...], alnb_ref[...])

    # BertIntermediate (dense + GELU) and BertOutput (dense + residual + LN).
    it = _gelu(_mm(a, iw_ref[...]) + ib_ref[...])             # (B*S, INTER)
    out = _mm(it, ow_ref[...]) + ob_ref[...]                  # (B*S, H)
    o_ref[...] = _ln(out + a, olng_ref[...], olnb_ref[...]).astype(o_ref.dtype)


def bert_layer(h2d, mask3d, lp, B, S, input_ln=None):
    """One fused pallas_call per BertLayer; single grid step over all B*S rows."""
    T = B * S
    if input_ln is None:
        # dummy pre-LN params (never read: apply_input_ln is a trace-time False)
        ilng = jnp.ones((1, HIDDEN), jnp.float32)
        ilnb = jnp.zeros((1, HIDDEN), jnp.float32)
    else:
        ilng, ilnb = input_ln

    args = (h2d, mask3d, lp["qkv_w"], lp["qkv_b"], lp["ao_w"], lp["ao_b"],
            lp["a_ln_g"], lp["a_ln_b"], lp["i_w"], lp["i_b"], lp["o_w"], lp["o_b"],
            lp["o_ln_g"], lp["o_ln_b"], ilng, ilnb)

    def full_spec(a):
        zeros = (0,) * a.ndim
        return pl.BlockSpec(a.shape, lambda i, z=zeros: z)

    return pl.pallas_call(
        functools.partial(_bert_layer_kernel, batch=B, seq=S,
                          num_heads=NUM_HEADS, head_dim=HEAD_DIM,
                          apply_input_ln=input_ln is not None),
        out_shape=jax.ShapeDtypeStruct((T, HIDDEN), jnp.float32),
        grid=(1,),
        in_specs=[full_spec(a) for a in args],
        out_specs=pl.BlockSpec((T, HIDDEN), lambda i: (0, 0)),
        # Reuse the hidden-state HBM buffer across layers (h -> h in place).
        input_output_aliases={0: 0},
        compiler_params=pltpu.CompilerParams(dimension_semantics=("arbitrary",)),
    )(*args)


def _mlm_head_ce_kernel(hm_ref, cw_ref, cb_ref, g_ref, b_ref, emb_ref, db_ref,
                        lab_ref, loss_ref, *, eps):
    """BertPredictionHeadTransform + tied decoder + per-token CE, fused (logits in VMEM)."""
    t = _gelu(_mm(hm_ref[...], cw_ref[...]) + cb_ref[...])
    t = _ln(t, g_ref[...], b_ref[...], eps)
    logits = _mm_nt(t, emb_ref[...]) + db_ref[...]            # (M, V) = t @ word_emb.T + b
    m = jnp.max(logits, axis=-1, keepdims=True)
    lse = jnp.log(jnp.sum(jnp.exp(logits - m), axis=-1, keepdims=True)) + m
    idx = lax.broadcasted_iota(jnp.int32, logits.shape, 1)
    picked = jnp.sum(jnp.where(idx == lab_ref[...], logits, 0.0), axis=-1, keepdims=True)
    # TODO(synk): out-of-range / ignore-index labels (e.g. -1 padding) yield loss = lse
    # here; the caller must zero them via masked_weights (as the reference pipeline does).
    loss_ref[...] = lse - picked


def mlm_head_ce(hm, cls_w, cls_b, ln_g, ln_b, word_emb, dec_b, labels1d):
    # TODO(synk): at real vocab (~30k) / H=1024 the (V,H) table and (M,V) logits exceed
    # VMEM: tile V on an 'arbitrary' grid axis with running max / log-sum-exp VMEM
    # scratch accumulators (pl.when finalize) and tile M rows on a 'parallel' axis.
    M, H = hm.shape
    V = word_emb.shape[0]
    labels = labels1d.reshape(M, 1).astype(jnp.int32)
    out = pl.pallas_call(
        functools.partial(_mlm_head_ce_kernel, eps=LN_EPS),
        out_shape=jax.ShapeDtypeStruct((M, 1), jnp.float32),
        grid=(1,),
        in_specs=[
            pl.BlockSpec((M, H), lambda i: (0, 0)),
            pl.BlockSpec((H, H), lambda i: (0, 0)),
            pl.BlockSpec((1, H), lambda i: (0, 0)),
            pl.BlockSpec((1, H), lambda i: (0, 0)),
            pl.BlockSpec((1, H), lambda i: (0, 0)),
            pl.BlockSpec((V, H), lambda i: (0, 0)),
            pl.BlockSpec((1, V), lambda i: (0, 0)),
            pl.BlockSpec((M, 1), lambda i: (0, 0)),
        ],
        out_specs=pl.BlockSpec((M, 1), lambda i: (0, 0)),
    )(hm, cls_w, cls_b, ln_g, ln_b, word_emb, dec_b, labels)
    return out[:, 0]


# ------------------------------- model wiring ----------------------------------
def init_params(key):
    keys = iter(jax.random.split(key, 64))

    def w(shape, scale=0.02):
        return jax.random.normal(next(keys), shape, jnp.float32) * scale

    def row_ones(n):
        return jnp.ones((1, n), jnp.float32)

    def row_zeros(n):
        return jnp.zeros((1, n), jnp.float32)

    params = {
        "word_emb": w((VOCAB, HIDDEN)),
        "pos_emb": w((MAX_POS, HIDDEN)),
        "tok_emb": w((TYPE_VOCAB, HIDDEN)),
        "emb_ln_g": row_ones(HIDDEN), "emb_ln_b": row_zeros(HIDDEN),
        "layers": [],
        "cls_w": w((HIDDEN, HIDDEN)),
        "cls_b": row_zeros(HIDDEN),
        "cls_ln_g": row_ones(HIDDEN), "cls_ln_b": row_zeros(HIDDEN),
        "dec_b": row_zeros(VOCAB),
    }
    for _ in range(NUM_LAYERS):
        # Q/K/V packed ONCE into a single (H, 3H) [in, out] matrix; a real checkpoint
        # loader would concatenate PyTorch's three [out, in] matrices once at load time.
        params["layers"].append({
            "qkv_w": jnp.concatenate([w((HIDDEN, HIDDEN)) for _ in range(3)], axis=1),
            "qkv_b": row_zeros(3 * HIDDEN),
            "ao_w": w((HIDDEN, HIDDEN)), "ao_b": row_zeros(HIDDEN),
            "a_ln_g": row_ones(HIDDEN), "a_ln_b": row_zeros(HIDDEN),
            "i_w": w((HIDDEN, INTER)), "i_b": row_zeros(INTER),
            "o_w": w((INTER, HIDDEN)), "o_b": row_zeros(HIDDEN),
            "o_ln_g": row_ones(HIDDEN), "o_ln_b": row_zeros(HIDDEN),
        })
    return params


def unilm_forward(params, input_ids, token_type_ids, attention_mask,
                  masked_lm_labels, masked_pos, masked_weights):
    B, S = input_ids.shape
    # BertEmbeddings: word + position + token_type (gathers stay in plain XLA); the
    # embedding LayerNorm is fused into the first layer kernel below.
    pos_ids = jnp.arange(S)
    emb = (params["word_emb"][input_ids]
           + params["pos_emb"][pos_ids][None, :, :]
           + params["tok_emb"][token_type_ids])
    # TODO(synk): dropout layers are identity here (eval-mode semantics).

    # extended attention mask: (1 - mask) * -10000, broadcast over heads / query pos
    mask_addend = ((1.0 - attention_mask.astype(jnp.float32)) * -10000.0).reshape(B, 1, S)

    h = emb.reshape(B * S, HIDDEN)
    for li, lp in enumerate(params["layers"]):
        h = bert_layer(
            h, mask_addend, lp, B, S,
            input_ln=(params["emb_ln_g"], params["emb_ln_b"]) if li == 0 else None)
    sequence_output = h.reshape(B, S, HIDDEN)
    # TODO(synk): BertPooler output is computed-but-discarded in the reference; skipped.

    # gather_seq_out_by_pos
    Np = masked_pos.shape[1]
    seq_masked = jnp.take_along_axis(
        sequence_output, masked_pos[:, :, None].astype(jnp.int32), axis=1)  # (B, Np, H)

    # BertOnlyMLMHead + CrossEntropyLoss(reduction='none'), fused
    per_tok = mlm_head_ce(seq_masked.reshape(B * Np, HIDDEN),
                          params["cls_w"], params["cls_b"],
                          params["cls_ln_g"], params["cls_ln_b"],
                          params["word_emb"], params["dec_b"],
                          masked_lm_labels.reshape(-1)).reshape(B, Np)

    # loss_mask_and_normalize
    mw = masked_weights.astype(jnp.float32)
    masked_loss = per_tok * mw
    denominator = jnp.sum(mw) + 1e-5
    return jnp.sum(masked_loss / denominator)


if __name__ == "__main__":
    key = jax.random.PRNGKey(0)
    pkey, dkey = jax.random.split(key)
    params = init_params(pkey)

    B, S, NP = 2, 8, 4
    k1, k2, k3 = jax.random.split(dkey, 3)
    input_ids = jax.random.randint(k1, (B, S), 0, VOCAB)
    token_type_ids = jnp.concatenate(
        [jnp.zeros((B, S // 2), jnp.int32), jnp.ones((B, S // 2), jnp.int32)], axis=1)
    attention_mask = jnp.ones((B, S), jnp.float32).at[1, 6:].set(0.0)
    masked_pos = jax.random.randint(k2, (B, NP), 0, S)
    masked_lm_labels = jax.random.randint(k3, (B, NP), 0, VOCAB)
    masked_weights = jnp.ones((B, NP), jnp.float32).at[1, 3].set(0.0)

    loss = jax.jit(unilm_forward)(params, input_ids, token_type_ids, attention_mask,
                                  masked_lm_labels, masked_pos, masked_weights)
    loss = jax.block_until_ready(loss)
    assert loss.shape == () and jnp.isfinite(loss)
    print("KERNEL_OK")
</pallas_src>

<mosaic_0001>
module attributes {stable_mosaic.version = 11 : i64} {
  func.func @_mlm_head_ce_kernel(%arg0: i32, %arg1: memref<8x32xf32, #tpu.memory_space<vmem>>, %arg2: memref<32x32xf32, #tpu.memory_space<vmem>>, %arg3: memref<1x32xf32, #tpu.memory_space<vmem>>, %arg4: memref<1x32xf32, #tpu.memory_space<vmem>>, %arg5: memref<1x32xf32, #tpu.memory_space<vmem>>, %arg6: memref<128x32xf32, #tpu.memory_space<vmem>>, %arg7: memref<1x128xf32, #tpu.memory_space<vmem>>, %arg8: memref<8x1xi32, #tpu.memory_space<vmem>>, %arg9: memref<8x1xf32, #tpu.memory_space<vmem>>) attributes {dimension_semantics = [#tpu.dimension_semantics<arbitrary>], iteration_bounds = array<i64: 1>, scalar_prefetch = 0 : i64, scratch_operands = 0 : i64, tpu.core_type = #tpu.core_type<tc>, window_params = [{pipeline_mode = #tpu.pipeline_mode<synchronous>, transform_indices = @transform_0, window_bounds = array<i64: 8, 32>}, {pipeline_mode = #tpu.pipeline_mode<synchronous>, transform_indices = @transform_1, window_bounds = array<i64: 32, 32>}, {pipeline_mode = #tpu.pipeline_mode<synchronous>, transform_indices = @transform_2, window_bounds = array<i64: 1, 32>}, {pipeline_mode = #tpu.pipeline_mode<synchronous>, transform_indices = @transform_3, window_bounds = array<i64: 1, 32>}, {pipeline_mode = #tpu.pipeline_mode<synchronous>, transform_indices = @transform_4, window_bounds = array<i64: 1, 32>}, {pipeline_mode = #tpu.pipeline_mode<synchronous>, transform_indices = @transform_5, window_bounds = array<i64: 128, 32>}, {pipeline_mode = #tpu.pipeline_mode<synchronous>, transform_indices = @transform_6, window_bounds = array<i64: 1, 128>}, {pipeline_mode = #tpu.pipeline_mode<synchronous>, transform_indices = @transform_7, window_bounds = array<i64: 8, 1>}, {pipeline_mode = #tpu.pipeline_mode<synchronous>, transform_indices = @transform_8, window_bounds = array<i64: 8, 1>}]} {
    %c0 = arith.constant 0 : index
    %c0_0 = arith.constant 0 : index
    %0 = vector.load %arg1[%c0, %c0_0] : memref<8x32xf32, #tpu.memory_space<vmem>>, vector<8x32xf32>
    %c0_1 = arith.constant 0 : index
    %c0_2 = arith.constant 0 : index
    %1 = vector.load %arg2[%c0_1, %c0_2] : memref<32x32xf32, #tpu.memory_space<vmem>>, vector<32x32xf32>
    %cst = arith.constant dense<0.000000e+00> : vector<8x32xf32>
    %2 = tpu.matmul %0, %1, %cst {dimension_numbers = #tpu.dot_dimension_numbers<[1], [0], [0], [1], [0, 0, 1, 1], [], []>} : vector<8x32xf32>, vector<32x32xf32>, vector<8x32xf32> -> vector<8x32xf32>
    %c0_3 = arith.constant 0 : index
    %c0_4 = arith.constant 0 : index
    %3 = vector.load %arg3[%c0_3, %c0_4] : memref<1x32xf32, #tpu.memory_space<vmem>>, vector<1x32xf32>
    %4 = vector.broadcast %3 : vector<1x32xf32> to vector<8x32xf32>
    %5 = arith.addf %2, %4 : vector<8x32xf32>
    %cst_5 = arith.constant 5.000000e-01 : f32
    %6 = vector.broadcast %cst_5 : f32 to vector<8x32xf32>
    %7 = arith.mulf %5, %6 : vector<8x32xf32>
    %cst_6 = arith.constant 0.707106769 : f32
    %8 = vector.broadcast %cst_6 : f32 to vector<8x32xf32>
    %9 = arith.mulf %5, %8 : vector<8x32xf32>
    %10 = math.erf %9 : vector<8x32xf32>
    %cst_7 = arith.constant 1.000000e+00 : f32
    %11 = vector.broadcast %cst_7 : f32 to vector<8x32xf32>
    %12 = arith.addf %11, %10 : vector<8x32xf32>
    %13 = arith.mulf %7, %12 : vector<8x32xf32>
    %c0_8 = arith.constant 0 : index
    %c0_9 = arith.constant 0 : index
    %14 = vector.load %arg4[%c0_8, %c0_9] : memref<1x32xf32, #tpu.memory_space<vmem>>, vector<1x32xf32>
    %c0_10 = arith.constant 0 : index
    %c0_11 = arith.constant 0 : index
    %15 = vector.load %arg5[%c0_10, %c0_11] : memref<1x32xf32, #tpu.memory_space<vmem>>, vector<1x32xf32>
    %cst_12 = arith.constant dense<0.000000e+00> : vector<8xf32>
    %16 = vector.multi_reduction <add>, %13, %cst_12 [1] : vector<8x32xf32> to vector<8xf32>
    %17 = vector.shape_cast %16 : vector<8xf32> to vector<8x1xf32>
    %cst_13 = arith.constant 3.200000e+01 : f32
    %18 = vector.broadcast %cst_13 : f32 to vector<8x1xf32>
    %19 = arith.divf %17, %18 : vector<8x1xf32>
    %20 = vector.broadcast %19 : vector<8x1xf32> to vector<8x32xf32>
    %21 = arith.subf %13, %20 : vector<8x32xf32>
    %22 = arith.mulf %21, %21 : vector<8x32xf32>
    %cst_14 = arith.constant dense<0.000000e+00> : vector<8xf32>
    %23 = vector.multi_reduction <add>, %22, %cst_14 [1] : vector<8x32xf32> to vector<8xf32>
    %24 = vector.shape_cast %23 : vector<8xf32> to vector<8x1xf32>
    %cst_15 = arith.constant 3.200000e+01 : f32
    %25 = vector.broadcast %cst_15 : f32 to vector<8x1xf32>
    %26 = arith.divf %24, %25 : vector<8x1xf32>
    %27 = vector.broadcast %19 : vector<8x1xf32> to vector<8x32xf32>
    %28 = arith.subf %13, %27 : vector<8x32xf32>
    %cst_16 = arith.constant 9.99999996E-13 : f32
    %29 = vector.broadcast %cst_16 : f32 to vector<8x1xf32>
    %30 = arith.addf %26, %29 : vector<8x1xf32>
    %31 = math.rsqrt %30 : vector<8x1xf32>
    %32 = vector.broadcast %31 : vector<8x1xf32> to vector<8x32xf32>
    %33 = arith.mulf %28, %32 : vector<8x32xf32>
    %34 = vector.broadcast %14 : vector<1x32xf32> to vector<8x32xf32>
    %35 = arith.mulf %33, %34 : vector<8x32xf32>
    %36 = vector.broadcast %15 : vector<1x32xf32> to vector<8x32xf32>
    %37 = arith.addf %35, %36 : vector<8x32xf32>
    %c0_17 = arith.constant 0 : index
    %c0_18 = arith.constant 0 : index
    %38 = vector.load %arg6[%c0_17, %c0_18] : memref<128x32xf32, #tpu.memory_space<vmem>>, vector<128x32xf32>
    %cst_19 = arith.constant dense<0.000000e+00> : vector<8x128xf32>
    %39 = tpu.matmul %37, %38, %cst_19 {dimension_numbers = #tpu.dot_dimension_numbers<[1], [1], [0], [0], [0, 0, 1, 0], [], []>} : vector<8x32xf32>, vector<128x32xf32>, vector<8x128xf32> -> vector<8x128xf32>
    %c0_20 = arith.constant 0 : index
    %c0_21 = arith.constant 0 : index
    %40 = vector.load %arg7[%c0_20, %c0_21] : memref<1x128xf32, #tpu.memory_space<vmem>>, vector<1x128xf32>
    %41 = vector.broadcast %40 : vector<1x128xf32> to vector<8x128xf32>
    %42 = arith.addf %39, %41 : vector<8x128xf32>
    %cst_22 = arith.constant dense<0xFF800000> : vector<8xf32>
    %43 = vector.multi_reduction <maximumf>, %42, %cst_22 [1] : vector<8x128xf32> to vector<8xf32>
    %44 = vector.shape_cast %43 : vector<8xf32> to vector<8x1xf32>
    %45 = vector.broadcast %44 : vector<8x1xf32> to vector<8x128xf32>
    %46 = arith.subf %42, %45 : vector<8x128xf32>
    %47 = math.exp %46 : vector<8x128xf32>
    %cst_23 = arith.constant dense<0.000000e+00> : vector<8xf32>
    %48 = vector.multi_reduction <add>, %47, %cst_23 [1] : vector<8x128xf32> to vector<8xf32>
    %49 = vector.shape_cast %48 : vector<8xf32> to vector<8x1xf32>
    %50 = math.log %49 : vector<8x1xf32>
    %51 = arith.addf %50, %44 : vector<8x1xf32>
    %52 = tpu.iota {dimensions = array<i32: 1>} : vector<8x128xi32>
    %c0_24 = arith.constant 0 : index
    %c0_25 = arith.constant 0 : index
    %53 = vector.load %arg8[%c0_24, %c0_25] : memref<8x1xi32, #tpu.memory_space<vmem>>, vector<8x1xi32>
    %54 = vector.broadcast %53 : vector<8x1xi32> to vector<8x128xi32>
    %55 = arith.cmpi eq, %52, %54 : vector<8x128xi32>
    %cst_26 = arith.constant 0.000000e+00 : f32
    %56 = vector.broadcast %cst_26 : f32 to vector<8x128xf32>
    %57 = arith.select %55, %42, %56 : vector<8x128xi1>, vector<8x128xf32>
    %cst_27 = arith.constant dense<0.000000e+00> : vector<8xf32>
    %58 = vector.multi_reduction <add>, %57, %cst_27 [1] : vector<8x128xf32> to vector<8xf32>
    %59 = vector.shape_cast %58 : vector<8xf32> to vector<8x1xf32>
    %60 = arith.subf %51, %59 : vector<8x1xf32>
    %c0_28 = arith.constant 0 : index
    %c0_29 = arith.constant 0 : index
    %61 = vector.load %arg9[%c0_28, %c0_29] : memref<8x1xf32, #tpu.memory_space<vmem>>, vector<8x1xf32>
    tpu.vector_store %arg9[%c0_28, %c0_29], %60 {strides = array<i32>} : memref<8x1xf32, #tpu.memory_space<vmem>>, vector<8x1xf32>,
    return
  }
  func.func @transform_0(%arg0: i32) -> (i32, i32) {
    %c0_i32 = arith.constant 0 : i32
    %c0_i32_0 = arith.constant 0 : i32
    %c0_i32_1 = arith.constant 0 : i32
    return %c0_i32, %c0_i32_0 : i32, i32
  }
  func.func @transform_1(%arg0: i32) -> (i32, i32) {
    %c0_i32 = arith.constant 0 : i32
    %c0_i32_0 = arith.constant 0 : i32
    %c0_i32_1 = arith.constant 0 : i32
    return %c0_i32, %c0_i32_0 : i32, i32
  }
  func.func @transform_2(%arg0: i32) -> (i32, i32) {
    %c0_i32 = arith.constant 0 : i32
    %c0_i32_0 = arith.constant 0 : i32
    %c0_i32_1 = arith.constant 0 : i32
    return %c0_i32, %c0_i32_0 : i32, i32
  }
  func.func @transform_3(%arg0: i32) -> (i32, i32) {
    %c0_i32 = arith.constant 0 : i32
    %c0_i32_0 = arith.constant 0 : i32
    %c0_i32_1 = arith.constant 0 : i32
    return %c0_i32, %c0_i32_0 : i32, i32
  }
  func.func @transform_4(%arg0: i32) -> (i32, i32) {
    %c0_i32 = arith.constant 0 : i32
    %c0_i32_0 = arith.constant 0 : i32
    %c0_i32_1 = arith.constant 0 : i32
    return %c0_i32, %c0_i32_0 : i32, i32
  }
  func.func @transform_5(%arg0: i32) -> (i32, i32) {
    %c0_i32 = arith.constant 0 : i32
    %c0_i32_0 = arith.constant 0 : i32
    %c0_i32_1 = arith.constant 0 : i32
    return %c0_i32, %c0_i32_0 : i32, i32
  }
  func.func @transform_6(%arg0: i32) -> (i32, i32) {
    %c0_i32 = arith.constant 0 : i32
    %c0_i32_0 = arith.constant 0 : i32
    %c0_i32_1 = arith.constant 0 : i32
    return %c0_i32, %c0_i32_0 : i32, i32
  }
  func.func @transform_7(%arg0: i32) -> (i32, i32) {
    %c0_i32 = arith.constant 0 : i32
    %c0_i32_0 = arith.constant 0 : i32
    %c0_i32_1 = arith.constant 0 : i32
    return %c0_i32, %c0_i32_0 : i32, i32
  }
  func.func @transform_8(%arg0: i32) -> (i32, i32) {
    %c0_i32 = arith.constant 0 : i32
    %c0_i32_0 = arith.constant 0 : i32
    %c0_i32_1 = arith.constant 0 : i32
    return %c0_i32, %c0_i32_0 : i32, i32
  }
}

module attributes {stable_mosaic.version = 11 : i64} {
  func.func @_bert_layer_kernel(%arg0: i32, %arg1: memref<16x32xf32, #tpu.memory_space<vmem>>, %arg2: memref<2x1x8xf32, #tpu.memory_space<vmem>>, %arg3: memref<32x96xf32, #tpu.memory_space<vmem>>, %arg4: memref<1x96xf32, #tpu.memory_space<vmem>>, %arg5: memref<32x32xf32, #tpu.memory_space<vmem>>, %arg6: memref<1x32xf32, #tpu.memory_space<vmem>>, %arg7: memref<1x32xf32, #tpu.memory_space<vmem>>, %arg8: memref<1x32xf32, #tpu.memory_space<vmem>>, %arg9: memref<32x64xf32, #tpu.memory_space<vmem>>, %arg10: memref<1x64xf32, #tpu.memory_space<vmem>>, %arg11: memref<64x32xf32, #tpu.memory_space<vmem>>, %arg12: memref<1x32xf32, #tpu.memory_space<vmem>>, %arg13: memref<1x32xf32, #tpu.memory_space<vmem>>, %arg14: memref<1x32xf32, #tpu.memory_space<vmem>>, %arg15: memref<1x32xf32, #tpu.memory_space<vmem>>, %arg16: memref<1x32xf32, #tpu.memory_space<vmem>>, %arg17: memref<16x32xf32, #tpu.memory_space<vmem>>) attributes {dimension_semantics = [#tpu.dimension_semantics<arbitrary>], iteration_bounds = array<i64: 1>, scalar_prefetch = 0 : i64, scratch_operands = 0 : i64, tpu.core_type = #tpu.core_type<tc>, window_params = [{pipeline_mode = #tpu.pipeline_mode<synchronous>, transform_indices = @transform_0, window_bounds = array<i64: 16, 32>}, {pipeline_mode = #tpu.pipeline_mode<synchronous>, transform_indices = @transform_1, window_bounds = array<i64: 2, 1, 8>}, {pipeline_mode = #tpu.pipeline_mode<synchronous>, transform_indices = @transform_2, window_bounds = array<i64: 32, 96>}, {pipeline_mode = #tpu.pipeline_mode<synchronous>, transform_indices = @transform_3, window_bounds = array<i64: 1, 96>}, {pipeline_mode = #tpu.pipeline_mode<synchronous>, transform_indices = @transform_4, window_bounds = array<i64: 32, 32>}, {pipeline_mode = #tpu.pipeline_mode<synchronous>, transform_indices = @transform_5, window_bounds = array<i64: 1, 32>}, {pipeline_mode = #tpu.pipeline_mode<synchronous>, transform_indices = @transform_6, window_bounds = array<i64: 1, 32>}, {pipeline_mode = #tpu.pipeline_mode<synchronous>, transform_indices = @transform_7, window_bounds = array<i64: 1, 32>}, {pipeline_mode = #tpu.pipeline_mode<synchronous>, transform_indices = @transform_8, window_bounds = array<i64: 32, 64>}, {pipeline_mode = #tpu.pipeline_mode<synchronous>, transform_indices = @transform_9, window_bounds = array<i64: 1, 64>}, {pipeline_mode = #tpu.pipeline_mode<synchronous>, transform_indices = @transform_10, window_bounds = array<i64: 64, 32>}, {pipeline_mode = #tpu.pipeline_mode<synchronous>, transform_indices = @transform_11, window_bounds = array<i64: 1, 32>}, {pipeline_mode = #tpu.pipeline_mode<synchronous>, transform_indices = @transform_12, window_bounds = array<i64: 1, 32>}, {pipeline_mode = #tpu.pipeline_mode<synchronous>, transform_indices = @transform_13, window_bounds = array<i64: 1, 32>}, {pipeline_mode = #tpu.pipeline_mode<synchronous>, transform_indices = @transform_14, window_bounds = array<i64: 1, 32>}, {pipeline_mode = #tpu.pipeline_mode<synchronous>, transform_indices = @transform_15, window_bounds = array<i64: 1, 32>}, {pipeline_mode = #tpu.pipeline_mode<synchronous>, transform_indices = @transform_16, window_bounds = array<i64: 16, 32>}]} {
    %c0 = arith.constant 0 : index
    %c0_0 = arith.constant 0 : index
    %0 = vector.load %arg1[%c0, %c0_0] : memref<16x32xf32, #tpu.memory_space<vmem>>, vector<16x32xf32>
    %c0_1 = arith.constant 0 : index
    %c0_2 = arith.constant 0 : index
    %1 = vector.load %arg15[%c0_1, %c0_2] : memref<1x32xf32, #tpu.memory_space<vmem>>, vector<1x32xf32>
    %c0_3 = arith.constant 0 : index
    %c0_4 = arith.constant 0 : index
    %2 = vector.load %arg16[%c0_3, %c0_4] : memref<1x32xf32, #tpu.memory_space<vmem>>, vector<1x32xf32>
    %cst = arith.constant dense<0.000000e+00> : vector<16xf32>
    %3 = vector.multi_reduction <add>, %0, %cst [1] : vector<16x32xf32> to vector<16xf32>
    %4 = vector.shape_cast %3 : vector<16xf32> to vector<16x1xf32>
    %cst_5 = arith.constant 3.200000e+01 : f32
    %5 = vector.broadcast %cst_5 : f32 to vector<16x1xf32>
    %6 = arith.divf %4, %5 : vector<16x1xf32>
    %7 = vector.broadcast %6 : vector<16x1xf32> to vector<16x32xf32>
    %8 = arith.subf %0, %7 : vector<16x32xf32>
    %9 = arith.mulf %8, %8 : vector<16x32xf32>
    %cst_6 = arith.constant dense<0.000000e+00> : vector<16xf32>
    %10 = vector.multi_reduction <add>, %9, %cst_6 [1] : vector<16x32xf32> to vector<16xf32>
    %11 = vector.shape_cast %10 : vector<16xf32> to vector<16x1xf32>
    %cst_7 = arith.constant 3.200000e+01 : f32
    %12 = vector.broadcast %cst_7 : f32 to vector<16x1xf32>
    %13 = arith.divf %11, %12 : vector<16x1xf32>
    %14 = vector.broadcast %6 : vector<16x1xf32> to vector<16x32xf32>
    %15 = arith.subf %0, %14 : vector<16x32xf32>
    %cst_8 = arith.constant 9.99999996E-13 : f32
    %16 = vector.broadcast %cst_8 : f32 to vector<16x1xf32>
    %17 = arith.addf %13, %16 : vector<16x1xf32>
    %18 = math.rsqrt %17 : vector<16x1xf32>
    %19 = vector.broadcast %18 : vector<16x1xf32> to vector<16x32xf32>
    %20 = arith.mulf %15, %19 : vector<16x32xf32>
    %21 = vector.broadcast %1 : vector<1x32xf32> to vector<16x32xf32>
    %22 = arith.mulf %20, %21 : vector<16x32xf32>
    %23 = vector.broadcast %2 : vector<1x32xf32> to vector<16x32xf32>
    %24 = arith.addf %22, %23 : vector<16x32xf32>
    %c0_9 = arith.constant 0 : index
    %c0_10 = arith.constant 0 : index
    %25 = vector.load %arg3[%c0_9, %c0_10] : memref<32x96xf32, #tpu.memory_space<vmem>>, vector<32x96xf32>
    %cst_11 = arith.constant dense<0.000000e+00> : vector<16x96xf32>
    %26 = tpu.matmul %24, %25, %cst_11 {dimension_numbers = #tpu.dot_dimension_numbers<[1], [0], [0], [1], [0, 0, 1, 1], [], []>} : vector<16x32xf32>, vector<32x96xf32>, vector<16x96xf32> -> vector<16x96xf32>
    %c0_12 = arith.constant 0 : index
    %c0_13 = arith.constant 0 : index
    %27 = vector.load %arg4[%c0_12, %c0_13] : memref<1x96xf32, #tpu.memory_space<vmem>>, vector<1x96xf32>
    %28 = vector.broadcast %27 : vector<1x96xf32> to vector<16x96xf32>
    %29 = arith.addf %26, %28 : vector<16x96xf32>
    %c0_14 = arith.constant 0 : index
    %c0_15 = arith.constant 0 : index
    %c0_16 = arith.constant 0 : index
    %30 = vector.load %arg2[%c0_14, %c0_15, %c0_16] : memref<2x1x8xf32, #tpu.memory_space<vmem>>, vector<2x1x8xf32>
    %31 = vector.shape_cast %30 : vector<2x1x8xf32> to vector<2x1x8xf32>
    %32 = vector.broadcast %31 : vector<2x1x8xf32> to vector<2x8x8xf32>
    %33 = vector.extract_strided_slice %29 {offsets = [0, 0], sizes = [16, 8], strides = [1, 1]} : vector<16x96xf32> to vector<16x8xf32>
    %34 = vector.shape_cast %33 : vector<16x8xf32> to vector<2x8x8xf32>
    %35 = vector.extract_strided_slice %29 {offsets = [0, 32], sizes = [16, 8], strides = [1, 1]} : vector<16x96xf32> to vector<16x8xf32>
    %36 = vector.shape_cast %35 : vector<16x8xf32> to vector<2x8x8xf32>
    %37 = vector.extract_strided_slice %29 {offsets = [0, 64], sizes = [16, 8], strides = [1, 1]} : vector<16x96xf32> to vector<16x8xf32>
    %38 = vector.shape_cast %37 : vector<16x8xf32> to vector<2x8x8xf32>
    %cst_17 = arith.constant 0.353553385 : f32
    %39 = vector.broadcast %cst_17 : f32 to vector<2x8x8xf32>
    %40 = arith.mulf %34, %39 : vector<2x8x8xf32>
    "tpu.trace_start"() <{level = 10 : i32, message = "bqd,bkd->bqk"}> : () -> ()
    %cst_18 = arith.constant dense<0.000000e+00> : vector<2x8x8xf32>
    %41 = tpu.matmul %40, %36, %cst_18 {dimension_numbers = #tpu.dot_dimension_numbers<[2], [2], [1], [1], [0, 0, 0, 1, 1, 1], [0], [0]>} : vector<2x8x8xf32>, vector<2x8x8xf32>, vector<2x8x8xf32> -> vector<2x8x8xf32>
    "tpu.trace_stop"() : () -> ()
    %42 = arith.addf %41, %32 : vector<2x8x8xf32>
    %cst_19 = arith.constant dense<0xFF800000> : vector<2x8xf32>
    %43 = vector.multi_reduction <maximumf>, %42, %cst_19 [2] : vector<2x8x8xf32> to vector<2x8xf32>
    %44 = vector.shape_cast %43 : vector<2x8xf32> to vector<2x8x1xf32>
    %45 = vector.broadcast %44 : vector<2x8x1xf32> to vector<2x8x8xf32>
    %46 = arith.subf %42, %45 : vector<2x8x8xf32>
    %47 = math.exp %46 : vector<2x8x8xf32>
    %cst_20 = arith.constant dense<0.000000e+00> : vector<2x8xf32>
    %48 = vector.multi_reduction <add>, %47, %cst_20 [2] : vector<2x8x8xf32> to vector<2x8xf32>
    %49 = vector.shape_cast %48 : vector<2x8xf32> to vector<2x8x1xf32>
    %50 = tpu.reciprocal %49 {approx = true} : vector<2x8x1xf32> -> vector<2x8x1xf32>
    %51 = vector.broadcast %50 : vector<2x8x1xf32> to vector<2x8x8xf32>
    %52 = arith.mulf %47, %51 : vector<2x8x8xf32>
    "tpu.trace_start"() <{level = 10 : i32, message = "bqk,bkd->bqd"}> : () -> ()
    %cst_21 = arith.constant dense<0.000000e+00> : vector<2x8x8xf32>
    %53 = tpu.matmul %52, %38, %cst_21 {dimension_numbers = #tpu.dot_dimension_numbers<[2], [1], [1], [2], [0, 0, 0, 1, 1, 2], [0], [0]>} : vector<2x8x8xf32>, vector<2x8x8xf32>, vector<2x8x8xf32> -> vector<2x8x8xf32>
    "tpu.trace_stop"() : () -> ()
    %54 = vector.shape_cast %53 : vector<2x8x8xf32> to vector<16x8xf32>
    %55 = vector.extract_strided_slice %29 {offsets = [0, 8], sizes = [16, 8], strides = [1, 1]} : vector<16x96xf32> to vector<16x8xf32>
    %56 = vector.shape_cast %55 : vector<16x8xf32> to vector<2x8x8xf32>
    %57 = vector.extract_strided_slice %29 {offsets = [0, 40], sizes = [16, 8], strides = [1, 1]} : vector<16x96xf32> to vector<16x8xf32>
    %58 = vector.shape_cast %57 : vector<16x8xf32> to vector<2x8x8xf32>
    %59 = vector.extract_strided_slice %29 {offsets = [0, 72], sizes = [16, 8], strides = [1, 1]} : vector<16x96xf32> to vector<16x8xf32>
    %60 = vector.shape_cast %59 : vector<16x8xf32> to vector<2x8x8xf32>
    %cst_22 = arith.constant 0.353553385 : f32
    %61 = vector.broadcast %cst_22 : f32 to vector<2x8x8xf32>
    %62 = arith.mulf %56, %61 : vector<2x8x8xf32>
    "tpu.trace_start"() <{level = 10 : i32, message = "bqd,bkd->bqk"}> : () -> ()
    %cst_23 = arith.constant dense<0.000000e+00> : vector<2x8x8xf32>
    %63 = tpu.matmul %62, %58, %cst_23 {dimension_numbers = #tpu.dot_dimension_numbers<[2], [2], [1], [1], [0, 0, 0, 1, 1, 1], [0], [0]>} : vector<2x8x8xf32>, vector<2x8x8xf32>, vector<2x8x8xf32> -> vector<2x8x8xf32>
    "tpu.trace_stop"() : () -> ()
    %64 = arith.addf %63, %32 : vector<2x8x8xf32>
    %cst_24 = arith.constant dense<0xFF800000> : vector<2x8xf32>
    %65 = vector.multi_reduction <maximumf>, %64, %cst_24 [2] : vector<2x8x8xf32> to vector<2x8xf32>
    %66 = vector.shape_cast %65 : vector<2x8xf32> to vector<2x8x1xf32>
    %67 = vector.broadcast %66 : vector<2x8x1xf32> to vector<2x8x8xf32>
    %68 = arith.subf %64, %67 : vector<2x8x8xf32>
    %69 = math.exp %68 : vector<2x8x8xf32>
    %cst_25 = arith.constant dense<0.000000e+00> : vector<2x8xf32>
    %70 = vector.multi_reduction <add>, %69, %cst_25 [2] : vector<2x8x8xf32> to vector<2x8xf32>
    %71 = vector.shape_cast %70 : vector<2x8xf32> to vector<2x8x1xf32>
    %72 = tpu.reciprocal %71 {approx = true} : vector<2x8x1xf32> -> vector<2x8x1xf32>
    %73 = vector.broadcast %72 : vector<2x8x1xf32> to vector<2x8x8xf32>
    %74 = arith.mulf %69, %73 : vector<2x8x8xf32>
    "tpu.trace_start"() <{level = 10 : i32, message = "bqk,bkd->bqd"}> : () -> ()
    %cst_26 = arith.constant dense<0.000000e+00> : vector<2x8x8xf32>
    %75 = tpu.matmul %74, %60, %cst_26 {dimension_numbers = #tpu.dot_dimension_numbers<[2], [1], [1], [2], [0, 0, 0, 1, 1, 2], [0], [0]>} : vector<2x8x8xf32>, vector<2x8x8xf32>, vector<2x8x8xf32> -> vector<2x8x8xf32>
    "tpu.trace_stop"() : () -> ()
    %76 = vector.shape_cast %75 : vector<2x8x8xf32> to vector<16x8xf32>
    %77 = vector.extract_strided_slice %29 {offsets = [0, 16], sizes = [16, 8], strides = [1, 1]} : vector<16x96xf32> to vector<16x8xf32>
    %78 = vector.shape_cast %77 : vector<16x8xf32> to vector<2x8x8xf32>
    %79 = vector.extract_strided_slice %29 {offsets = [0, 48], sizes = [16, 8], strides = [1, 1]} : vector<16x96xf32> to vector<16x8xf32>
    %80 = vector.shape_cast %79 : vector<16x8xf32> to vector<2x8x8xf32>
    %81 = vector.extract_strided_slice %29 {offsets = [0, 80], sizes = [16, 8], strides = [1, 1]} : vector<16x96xf32> to vector<16x8xf32>
    %82 = vector.shape_cast %81 : vector<16x8xf32> to vector<2x8x8xf32>
    %cst_27 = arith.constant 0.353553385 : f32
    %83 = vector.broadcast %cst_27 : f32 to vector<2x8x8xf32>
    %84 = arith.mulf %78, %83 : vector<2x8x8xf32>
    "tpu.trace_start"() <{level = 10 : i32, message = "bqd,bkd->bqk"}> : () -> ()
    %cst_28 = arith.constant dense<0.000000e+00> : vector<2x8x8xf32>
    %85 = tpu.matmul %84, %80, %cst_28 {dimension_numbers = #tpu.dot_dimension_numbers<[2], [2], [1], [1], [0, 0, 0, 1, 1, 1], [0], [0]>} : vector<2x8x8xf32>, vector<2x8x8xf32>, vector<2x8x8xf32> -> vector<2x8x8xf32>
    "tpu.trace_stop"() : () -> ()
    %86 = arith.addf %85, %32 : vector<2x8x8xf32>
    %cst_29 = arith.constant dense<0xFF800000> : vector<2x8xf32>
    %87 = vector.multi_reduction <maximumf>, %86, %cst_29 [2] : vector<2x8x8xf32> to vector<2x8xf32>
    %88 = vector.shape_cast %87 : vector<2x8xf32> to vector<2x8x1xf32>
    %89 = vector.broadcast %88 : vector<2x8x1xf32> to vector<2x8x8xf32>
    %90 = arith.subf %86, %89 : vector<2x8x8xf32>
    %91 = math.exp %90 : vector<2x8x8xf32>
    %cst_30 = arith.constant dense<0.000000e+00> : vector<2x8xf32>
    %92 = vector.multi_reduction <add>, %91, %cst_30 [2] : vector<2x8x8xf32> to vector<2x8xf32>
    %93 = vector.shape_cast %92 : vector<2x8xf32> to vector<2x8x1xf32>
    %94 = tpu.reciprocal %93 {approx = true} : vector<2x8x1xf32> -> vector<2x8x1xf32>
    %95 = vector.broadcast %94 : vector<2x8x1xf32> to vector<2x8x8xf32>
    %96 = arith.mulf %91, %95 : vector<2x8x8xf32>
    "tpu.trace_start"() <{level = 10 : i32, message = "bqk,bkd->bqd"}> : () -> ()
    %cst_31 = arith.constant dense<0.000000e+00> : vector<2x8x8xf32>
    %97 = tpu.matmul %96, %82, %cst_31 {dimension_numbers = #tpu.dot_dimension_numbers<[2], [1], [1], [2], [0, 0, 0, 1, 1, 2], [0], [0]>} : vector<2x8x8xf32>, vector<2x8x8xf32>, vector<2x8x8xf32> -> vector<2x8x8xf32>
    "tpu.trace_stop"() : () -> ()
    %98 = vector.shape_cast %97 : vector<2x8x8xf32> to vector<16x8xf32>
    %99 = vector.extract_strided_slice %29 {offsets = [0, 24], sizes = [16, 8], strides = [1, 1]} : vector<16x96xf32> to vector<16x8xf32>
    %100 = vector.shape_cast %99 : vector<16x8xf32> to vector<2x8x8xf32>
    %101 = vector.extract_strided_slice %29 {offsets = [0, 56], sizes = [16, 8], strides = [1, 1]} : vector<16x96xf32> to vector<16x8xf32>
    %102 = vector.shape_cast %101 : vector<16x8xf32> to vector<2x8x8xf32>
    %103 = vector.extract_strided_slice %29 {offsets = [0, 88], sizes = [16, 8], strides = [1, 1]} : vector<16x96xf32> to vector<16x8xf32>
    %104 = vector.shape_cast %103 : vector<16x8xf32> to vector<2x8x8xf32>
    %cst_32 = arith.constant 0.353553385 : f32
    %105 = vector.broadcast %cst_32 : f32 to vector<2x8x8xf32>
    %106 = arith.mulf %100, %105 : vector<2x8x8xf32>
    "tpu.trace_start"() <{level = 10 : i32, message = "bqd,bkd->bqk"}> : () -> ()
    %cst_33 = arith.constant dense<0.000000e+00> : vector<2x8x8xf32>
    %107 = tpu.matmul %106, %102, %cst_33 {dimension_numbers = #tpu.dot_dimension_numbers<[2], [2], [1], [1], [0, 0, 0, 1, 1, 1], [0], [0]>} : vector<2x8x8xf32>, vector<2x8x8xf32>, vector<2x8x8xf32> -> vector<2x8x8xf32>
    "tpu.trace_stop"() : () -> ()
    %108 = arith.addf %107, %32 : vector<2x8x8xf32>
    %cst_34 = arith.constant dense<0xFF800000> : vector<2x8xf32>
    %109 = vector.multi_reduction <maximumf>, %108, %cst_34 [2] : vector<2x8x8xf32> to vector<2x8xf32>
    %110 = vector.shape_cast %109 : vector<2x8xf32> to vector<2x8x1xf32>
    %111 = vector.broadcast %110 : vector<2x8x1xf32> to vector<2x8x8xf32>
    %112 = arith.subf %108, %111 : vector<2x8x8xf32>
    %113 = math.exp %112 : vector<2x8x8xf32>
    %cst_35 = arith.constant dense<0.000000e+00> : vector<2x8xf32>
    %114 = vector.multi_reduction <add>, %113, %cst_35 [2] : vector<2x8x8xf32> to vector<2x8xf32>
    %115 = vector.shape_cast %114 : vector<2x8xf32> to vector<2x8x1xf32>
    %116 = tpu.reciprocal %115 {approx = true} : vector<2x8x1xf32> -> vector<2x8x1xf32>
    %117 = vector.broadcast %116 : vector<2x8x1xf32> to vector<2x8x8xf32>
    %118 = arith.mulf %113, %117 : vector<2x8x8xf32>
    "tpu.trace_start"() <{level = 10 : i32, message = "bqk,bkd->bqd"}> : () -> ()
    %cst_36 = arith.constant dense<0.000000e+00> : vector<2x8x8xf32>
    %119 = tpu.matmul %118, %104, %cst_36 {dimension_numbers = #tpu.dot_dimension_numbers<[2], [1], [1], [2], [0, 0, 0, 1, 1, 2], [0], [0]>} : vector<2x8x8xf32>, vector<2x8x8xf32>, vector<2x8x8xf32> -> vector<2x8x8xf32>
    "tpu.trace_stop"() : () -> ()
    %120 = vector.shape_cast %119 : vector<2x8x8xf32> to vector<16x8xf32>
    %121 = tpu.concatenate %54, %76, %98, %120 in 1 : vector<16x8xf32>, vector<16x8xf32>, vector<16x8xf32>, vector<16x8xf32> -> vector<16x32xf32>
    %c0_37 = arith.constant 0 : index
    %c0_38 = arith.constant 0 : index
    %122 = vector.load %arg5[%c0_37, %c0_38] : memref<32x32xf32, #tpu.memory_space<vmem>>, vector<32x32xf32>
    %cst_39 = arith.constant dense<0.000000e+00> : vector<16x32xf32>
    %123 = tpu.matmul %121, %122, %cst_39 {dimension_numbers = #tpu.dot_dimension_numbers<[1], [0], [0], [1], [0, 0, 1, 1], [], []>} : vector<16x32xf32>, vector<32x32xf32>, vector<16x32xf32> -> vector<16x32xf32>
    %c0_40 = arith.constant 0 : index
    %c0_41 = arith.constant 0 : index
    %124 = vector.load %arg6[%c0_40, %c0_41] : memref<1x32xf32, #tpu.memory_space<vmem>>, vector<1x32xf32>
    %125 = vector.broadcast %124 : vector<1x32xf32> to vector<16x32xf32>
    %126 = arith.addf %123, %125 : vector<16x32xf32>
    %127 = arith.addf %126, %24 : vector<16x32xf32>
    %c0_42 = arith.constant 0 : index
    %c0_43 = arith.constant 0 : index
    %128 = vector.load %arg7[%c0_42, %c0_43] : memref<1x32xf32, #tpu.memory_space<vmem>>, vector<1x32xf32>
    %c0_44 = arith.constant 0 : index
    %c0_45 = arith.constant 0 : index
    %129 = vector.load %arg8[%c0_44, %c0_45] : memref<1x32xf32, #tpu.memory_space<vmem>>, vector<1x32xf32>
    %cst_46 = arith.constant dense<0.000000e+00> : vector<16xf32>
    %130 = vector.multi_reduction <add>, %127, %cst_46 [1] : vector<16x32xf32> to vector<16xf32>
    %131 = vector.shape_cast %130 : vector<16xf32> to vector<16x1xf32>
    %cst_47 = arith.constant 3.200000e+01 : f32
    %132 = vector.broadcast %cst_47 : f32 to vector<16x1xf32>
    %133 = arith.divf %131, %132 : vector<16x1xf32>
    %134 = vector.broadcast %133 : vector<16x1xf32> to vector<16x32xf32>
    %135 = arith.subf %127, %134 : vector<16x32xf32>
    %136 = arith.mulf %135, %135 : vector<16x32xf32>
    %cst_48 = arith.constant dense<0.000000e+00> : vector<16xf32>
    %137 = vector.multi_reduction <add>, %136, %cst_48 [1] : vector<16x32xf32> to vector<16xf32>
    %138 = vector.shape_cast %137 : vector<16xf32> to vector<16x1xf32>
    %cst_49 = arith.constant 3.200000e+01 : f32
    %139 = vector.broadcast %cst_49 : f32 to vector<16x1xf32>
    %140 = arith.divf %138, %139 : vector<16x1xf32>
    %141 = vector.broadcast %133 : vector<16x1xf32> to vector<16x32xf32>
    %142 = arith.subf %127, %141 : vector<16x32xf32>
    %cst_50 = arith.constant 9.99999996E-13 : f32
    %143 = vector.broadcast %cst_50 : f32 to vector<16x1xf32>
    %144 = arith.addf %140, %143 : vector<16x1xf32>
    %145 = math.rsqrt %144 : vector<16x1xf32>
    %146 = vector.broadcast %145 : vector<16x1xf32> to vector<16x32xf32>
    %147 = arith.mulf %142, %146 : vector<16x32xf32>
    %148 = vector.broadcast %128 : vector<1x32xf32> to vector<16x32xf32>
    %149 = arith.mulf %147, %148 : vector<16x32xf32>
    %150 = vector.broadcast %129 : vector<1x32xf32> to vector<16x32xf32>
    %151 = arith.addf %149, %150 : vector<16x32xf32>
    %c0_51 = arith.constant 0 : index
    %c0_52 = arith.constant 0 : index
    %152 = vector.load %arg9[%c0_51, %c0_52] : memref<32x64xf32, #tpu.memory_space<vmem>>, vector<32x64xf32>
    %cst_53 = arith.constant dense<0.000000e+00> : vector<16x64xf32>
    %153 = tpu.matmul %151, %152, %cst_53 {dimension_numbers = #tpu.dot_dimension_numbers<[1], [0], [0], [1], [0, 0, 1, 1], [], []>} : vector<16x32xf32>, vector<32x64xf32>, vector<16x64xf32> -> vector<16x64xf32>
    %c0_54 = arith.constant 0 : index
    %c0_55 = arith.constant 0 : index
    %154 = vector.load %arg10[%c0_54, %c0_55] : memref<1x64xf32, #tpu.memory_space<vmem>>, vector<1x64xf32>
    %155 = vector.broadcast %154 : vector<1x64xf32> to vector<16x64xf32>
    %156 = arith.addf %153, %155 : vector<16x64xf32>
    %cst_56 = arith.constant 5.000000e-01 : f32
    %157 = vector.broadcast %cst_56 : f32 to vector<16x64xf32>
    %158 = arith.mulf %156, %157 : vector<16x64xf32>
    %cst_57 = arith.constant 0.707106769 : f32
    %159 = vector.broadcast %cst_57 : f32 to vector<16x64xf32>
    %160 = arith.mulf %156, %159 : vector<16x64xf32>
    %161 = math.erf %160 : vector<16x64xf32>
    %cst_58 = arith.constant 1.000000e+00 : f32
    %162 = vector.broadcast %cst_58 : f32 to vector<16x64xf32>
    %163 = arith.addf %162, %161 : vector<16x64xf32>
    %164 = arith.mulf %158, %163 : vector<16x64xf32>
    %c0_59 = arith.constant 0 : index
    %c0_60 = arith.constant 0 : index
    %165 = vector.load %arg11[%c0_59, %c0_60] : memref<64x32xf32, #tpu.memory_space<vmem>>, vector<64x32xf32>
    %cst_61 = arith.constant dense<0.000000e+00> : vector<16x32xf32>
    %166 = tpu.matmul %164, %165, %cst_61 {dimension_numbers = #tpu.dot_dimension_numbers<[1], [0], [0], [1], [0, 0, 1, 1], [], []>} : vector<16x64xf32>, vector<64x32xf32>, vector<16x32xf32> -> vector<16x32xf32>
    %c0_62 = arith.constant 0 : index
    %c0_63 = arith.constant 0 : index
    %167 = vector.load %arg12[%c0_62, %c0_63] : memref<1x32xf32, #tpu.memory_space<vmem>>, vector<1x32xf32>
    %168 = vector.broadcast %167 : vector<1x32xf32> to vector<16x32xf32>
    %169 = arith.addf %166, %168 : vector<16x32xf32>
    %170 = arith.addf %169, %151 : vector<16x32xf32>
    %c0_64 = arith.constant 0 : index
    %c0_65 = arith.constant 0 : index
    %171 = vector.load %arg13[%c0_64, %c0_65] : memref<1x32xf32, #tpu.memory_space<vmem>>, vector<1x32xf32>
    %c0_66 = arith.constant 0 : index
    %c0_67 = arith.constant 0 : index
    %172 = vector.load %arg14[%c0_66, %c0_67] : memref<1x32xf32, #tpu.memory_space<vmem>>, vector<1x32xf32>
    %cst_68 = arith.constant dense<0.000000e+00> : vector<16xf32>
    %173 = vector.multi_reduction <add>, %170, %cst_68 [1] : vector<16x32xf32> to vector<16xf32>
    %174 = vector.shape_cast %173 : vector<16xf32> to vector<16x1xf32>
    %cst_69 = arith.constant 3.200000e+01 : f32
    %175 = vector.broadcast %cst_69 : f32 to vector<16x1xf32>
    %176 = arith.divf %174, %175 : vector<16x1xf32>
    %177 = vector.broadcast %176 : vector<16x1xf32> to vector<16x32xf32>
    %178 = arith.subf %170, %177 : vector<16x32xf32>
    %179 = arith.mulf %178, %178 : vector<16x32xf32>
    %cst_70 = arith.constant dense<0.000000e+00> : vector<16xf32>
    %180 = vector.multi_reduction <add>, %179, %cst_70 [1] : vector<16x32xf32> to vector<16xf32>
    %181 = vector.shape_cast %180 : vector<16xf32> to vector<16x1xf32>
    %cst_71 = arith.constant 3.200000e+01 : f32
    %182 = vector.broadcast %cst_71 : f32 to vector<16x1xf32>
    %183 = arith.divf %181, %182 : vector<16x1xf32>
    %184 = vector.broadcast %176 : vector<16x1xf32> to vector<16x32xf32>
    %185 = arith.subf %170, %184 : vector<16x32xf32>
    %cst_72 = arith.constant 9.99999996E-13 : f32
    %186 = vector.broadcast %cst_72 : f32 to vector<16x1xf32>
    %187 = arith.addf %183, %186 : vector<16x1xf32>
    %188 = math.rsqrt %187 : vector<16x1xf32>
    %189 = vector.broadcast %188 : vector<16x1xf32> to vector<16x32xf32>
    %190 = arith.mulf %185, %189 : vector<16x32xf32>
    %191 = vector.broadcast %171 : vector<1x32xf32> to vector<16x32xf32>
    %192 = arith.mulf %190, %191 : vector<16x32xf32>
    %193 = vector.broadcast %172 : vector<1x32xf32> to vector<16x32xf32>
    %194 = arith.addf %192, %193 : vector<16x32xf32>
    %c0_73 = arith.constant 0 : index
    %c0_74 = arith.constant 0 : index
    %195 = vector.load %arg17[%c0_73, %c0_74] : memref<16x32xf32, #tpu.memory_space<vmem>>, vector<16x32xf32>
    tpu.vector_store %arg17[%c0_73, %c0_74], %194 {strides = array<i32>} : memref<16x32xf32, #tpu.memory_space<vmem>>, vector<16x32xf32>,
    return
  }
  func.func @transform_0(%arg0: i32) -> (i32, i32) {
    %c0_i32 = arith.constant 0 : i32
    %c0_i32_0 = arith.constant 0 : i32
    %c0_i32_1 = arith.constant 0 : i32
    return %c0_i32, %c0_i32_0 : i32, i32
  }
  func.func @transform_1(%arg0: i32) -> (i32, i32, i32) {
    %c0_i32 = arith.constant 0 : i32
    %c0_i32_0 = arith.constant 0 : i32
    %c0_i32_1 = arith.constant 0 : i32
    %c0_i32_2 = arith.constant 0 : i32
    return %c0_i32, %c0_i32_0, %c0_i32_1 : i32, i32, i32
  }
  func.func @transform_2(%arg0: i32) -> (i32, i32) {
    %c0_i32 = arith.constant 0 : i32
    %c0_i32_0 = arith.constant 0 : i32
    %c0_i32_1 = arith.constant 0 : i32
    return %c0_i32, %c0_i32_0 : i32, i32
  }
  func.func @transform_3(%arg0: i32) -> (i32, i32) {
    %c0_i32 = arith.constant 0 : i32
    %c0_i32_0 = arith.constant 0 : i32
    %c0_i32_1 = arith.constant 0 : i32
    return %c0_i32, %c0_i32_0 : i32, i32
  }
  func.func @transform_4(%arg0: i32) -> (i32, i32) {
    %c0_i32 = arith.constant 0 : i32
    %c0_i32_0 = arith.constant 0 : i32
    %c0_i32_1 = arith.constant 0 : i32
    return %c0_i32, %c0_i32_0 : i32, i32
  }
  func.func @transform_5(%arg0: i32) -> (i32, i32) {
    %c0_i32 = arith.constant 0 : i32
    %c0_i32_0 = arith.constant 0 : i32
    %c0_i32_1 = arith.constant 0 : i32
    return %c0_i32, %c0_i32_0 : i32, i32
  }
  func.func @transform_6(%arg0: i32) -> (i32, i32) {
    %c0_i32 = arith.constant 0 : i32
    %c0_i32_0 = arith.constant 0 : i32
    %c0_i32_1 = arith.constant 0 : i32
    return %c0_i32, %c0_i32_0 : i32, i32
  }
  func.func @transform_7(%arg0: i32) -> (i32, i32) {
    %c0_i32 = arith.constant 0 : i32
    %c0_i32_0 = arith.constant 0 : i32
    %c0_i32_1 = arith.constant 0 : i32
    return %c0_i32, %c0_i32_0 : i32, i32
  }
  func.func @transform_8(%arg0: i32) -> (i32, i32) {
    %c0_i32 = arith.constant 0 : i32
    %c0_i32_0 = arith.constant 0 : i32
    %c0_i32_1 = arith.constant 0 : i32
    return %c0_i32, %c0_i32_0 : i32, i32
  }
  func.func @transform_9(%arg0: i32) -> (i32, i32) {
    %c0_i32 = arith.constant 0 : i32
    %c0_i32_0 = arith.constant 0 : i32
    %c0_i32_1 = arith.constant 0 : i32
    return %c0_i32, %c0_i32_0 : i32, i32
  }
  func.func @transform_10(%arg0: i32) -> (i32, i32) {
    %c0_i32 = arith.constant 0 : i32
    %c0_i32_0 = arith.constant 0 : i32
    %c0_i32_1 = arith.constant 0 : i32
    return %c0_i32, %c0_i32_0 : i32, i32
  }
  func.func @transform_11(%arg0: i32) -> (i32, i32) {
    %c0_i32 = arith.constant 0 : i32
    %c0_i32_0 = arith.constant 0 : i32
    %c0_i32_1 = arith.constant 0 : i32
    return %c0_i32, %c0_i32_0 : i32, i32
  }
  func.func @transform_12(%arg0: i32) -> (i32, i32) {
    %c0_i32 = arith.constant 0 : i32
    %c0_i32_0 = arith.constant 0 : i32
    %c0_i32_1 = arith.constant 0 : i32
    return %c0_i32, %c0_i32_0 : i32, i32
  }
  func.func @transform_13(%arg0: i32) -> (i32, i32) {
    %c0_i32 = arith.constant 0 : i32
    %c0_i32_0 = arith.constant 0 : i32
    %c0_i32_1 = arith.constant 0 : i32
    return %c0_i32, %c0_i32_0 : i32, i32
  }
  func.func @transform_14(%arg0: i32) -> (i32, i32) {
    %c0_i32 = arith.constant 0 : i32
    %c0_i32_0 = arith.constant 0 : i32
    %c0_i32_1 = arith.constant 0 : i32
    return %c0_i32, %c0_i32_0 : i32, i32
  }
  func.func @transform_15(%arg0: i32) -> (i32, i32) {
    %c0_i32 = arith.constant 0 : i32
    %c0_i32_0 = arith.constant 0 : i32
    %c0_i32_1 = arith.constant 0 : i32
    return %c0_i32, %c0_i32_0 : i32, i32
  }
  func.func @transform_16(%arg0: i32) -> (i32, i32) {
    %c0_i32 = arith.constant 0 : i32
    %c0_i32_0 = arith.constant 0 : i32
    %c0_i32_1 = arith.constant 0 : i32
    return %c0_i32, %c0_i32_0 : i32, i32
  }
}

module attributes {stable_mosaic.version = 11 : i64} {
  func.func @_bert_layer_kernel(%arg0: i32, %arg1: memref<16x32xf32, #tpu.memory_space<vmem>>, %arg2: memref<2x1x8xf32, #tpu.memory_space<vmem>>, %arg3: memref<32x96xf32, #tpu.memory_space<vmem>>, %arg4: memref<1x96xf32, #tpu.memory_space<vmem>>, %arg5: memref<32x32xf32, #tpu.memory_space<vmem>>, %arg6: memref<1x32xf32, #tpu.memory_space<vmem>>, %arg7: memref<1x32xf32, #tpu.memory_space<vmem>>, %arg8: memref<1x32xf32, #tpu.memory_space<vmem>>, %arg9: memref<32x64xf32, #tpu.memory_space<vmem>>, %arg10: memref<1x64xf32, #tpu.memory_space<vmem>>, %arg11: memref<64x32xf32, #tpu.memory_space<vmem>>, %arg12: memref<1x32xf32, #tpu.memory_space<vmem>>, %arg13: memref<1x32xf32, #tpu.memory_space<vmem>>, %arg14: memref<1x32xf32, #tpu.memory_space<vmem>>, %arg15: memref<1x32xf32, #tpu.memory_space<vmem>>, %arg16: memref<1x32xf32, #tpu.memory_space<vmem>>, %arg17: memref<16x32xf32, #tpu.memory_space<vmem>>) attributes {dimension_semantics = [#tpu.dimension_semantics<arbitrary>], iteration_bounds = array<i64: 1>, scalar_prefetch = 0 : i64, scratch_operands = 0 : i64, tpu.core_type = #tpu.core_type<tc>, window_params = [{pipeline_mode = #tpu.pipeline_mode<synchronous>, transform_indices = @transform_0, window_bounds = array<i64: 16, 32>}, {pipeline_mode = #tpu.pipeline_mode<synchronous>, transform_indices = @transform_1, window_bounds = array<i64: 2, 1, 8>}, {pipeline_mode = #tpu.pipeline_mode<synchronous>, transform_indices = @transform_2, window_bounds = array<i64: 32, 96>}, {pipeline_mode = #tpu.pipeline_mode<synchronous>, transform_indices = @transform_3, window_bounds = array<i64: 1, 96>}, {pipeline_mode = #tpu.pipeline_mode<synchronous>, transform_indices = @transform_4, window_bounds = array<i64: 32, 32>}, {pipeline_mode = #tpu.pipeline_mode<synchronous>, transform_indices = @transform_5, window_bounds = array<i64: 1, 32>}, {pipeline_mode = #tpu.pipeline_mode<synchronous>, transform_indices = @transform_6, window_bounds = array<i64: 1, 32>}, {pipeline_mode = #tpu.pipeline_mode<synchronous>, transform_indices = @transform_7, window_bounds = array<i64: 1, 32>}, {pipeline_mode = #tpu.pipeline_mode<synchronous>, transform_indices = @transform_8, window_bounds = array<i64: 32, 64>}, {pipeline_mode = #tpu.pipeline_mode<synchronous>, transform_indices = @transform_9, window_bounds = array<i64: 1, 64>}, {pipeline_mode = #tpu.pipeline_mode<synchronous>, transform_indices = @transform_10, window_bounds = array<i64: 64, 32>}, {pipeline_mode = #tpu.pipeline_mode<synchronous>, transform_indices = @transform_11, window_bounds = array<i64: 1, 32>}, {pipeline_mode = #tpu.pipeline_mode<synchronous>, transform_indices = @transform_12, window_bounds = array<i64: 1, 32>}, {pipeline_mode = #tpu.pipeline_mode<synchronous>, transform_indices = @transform_13, window_bounds = array<i64: 1, 32>}, {pipeline_mode = #tpu.pipeline_mode<synchronous>, transform_indices = @transform_14, window_bounds = array<i64: 1, 32>}, {pipeline_mode = #tpu.pipeline_mode<synchronous>, transform_indices = @transform_15, window_bounds = array<i64: 1, 32>}, {pipeline_mode = #tpu.pipeline_mode<synchronous>, transform_indices = @transform_16, window_bounds = array<i64: 16, 32>}]} {
    %c0 = arith.constant 0 : index
    %c0_0 = arith.constant 0 : index
    %0 = vector.load %arg1[%c0, %c0_0] : memref<16x32xf32, #tpu.memory_space<vmem>>, vector<16x32xf32>
    %c0_1 = arith.constant 0 : index
    %c0_2 = arith.constant 0 : index
    %1 = vector.load %arg3[%c0_1, %c0_2] : memref<32x96xf32, #tpu.memory_space<vmem>>, vector<32x96xf32>
    %cst = arith.constant dense<0.000000e+00> : vector<16x96xf32>
    %2 = tpu.matmul %0, %1, %cst {dimension_numbers = #tpu.dot_dimension_numbers<[1], [0], [0], [1], [0, 0, 1, 1], [], []>} : vector<16x32xf32>, vector<32x96xf32>, vector<16x96xf32> -> vector<16x96xf32>
    %c0_3 = arith.constant 0 : index
    %c0_4 = arith.constant 0 : index
    %3 = vector.load %arg4[%c0_3, %c0_4] : memref<1x96xf32, #tpu.memory_space<vmem>>, vector<1x96xf32>
    %4 = vector.broadcast %3 : vector<1x96xf32> to vector<16x96xf32>
    %5 = arith.addf %2, %4 : vector<16x96xf32>
    %c0_5 = arith.constant 0 : index
    %c0_6 = arith.constant 0 : index
    %c0_7 = arith.constant 0 : index
    %6 = vector.load %arg2[%c0_5, %c0_6, %c0_7] : memref<2x1x8xf32, #tpu.memory_space<vmem>>, vector<2x1x8xf32>
    %7 = vector.shape_cast %6 : vector<2x1x8xf32> to vector<2x1x8xf32>
    %8 = vector.broadcast %7 : vector<2x1x8xf32> to vector<2x8x8xf32>
    %9 = vector.extract_strided_slice %5 {offsets = [0, 0], sizes = [16, 8], strides = [1, 1]} : vector<16x96xf32> to vector<16x8xf32>
    %10 = vector.shape_cast %9 : vector<16x8xf32> to vector<2x8x8xf32>
    %11 = vector.extract_strided_slice %5 {offsets = [0, 32], sizes = [16, 8], strides = [1, 1]} : vector<16x96xf32> to vector<16x8xf32>
    %12 = vector.shape_cast %11 : vector<16x8xf32> to vector<2x8x8xf32>
    %13 = vector.extract_strided_slice %5 {offsets = [0, 64], sizes = [16, 8], strides = [1, 1]} : vector<16x96xf32> to vector<16x8xf32>
    %14 = vector.shape_cast %13 : vector<16x8xf32> to vector<2x8x8xf32>
    %cst_8 = arith.constant 0.353553385 : f32
    %15 = vector.broadcast %cst_8 : f32 to vector<2x8x8xf32>
    %16 = arith.mulf %10, %15 : vector<2x8x8xf32>
    "tpu.trace_start"() <{level = 10 : i32, message = "bqd,bkd->bqk"}> : () -> ()
    %cst_9 = arith.constant dense<0.000000e+00> : vector<2x8x8xf32>
    %17 = tpu.matmul %16, %12, %cst_9 {dimension_numbers = #tpu.dot_dimension_numbers<[2], [2], [1], [1], [0, 0, 0, 1, 1, 1], [0], [0]>} : vector<2x8x8xf32>, vector<2x8x8xf32>, vector<2x8x8xf32> -> vector<2x8x8xf32>
    "tpu.trace_stop"() : () -> ()
    %18 = arith.addf %17, %8 : vector<2x8x8xf32>
    %cst_10 = arith.constant dense<0xFF800000> : vector<2x8xf32>
    %19 = vector.multi_reduction <maximumf>, %18, %cst_10 [2] : vector<2x8x8xf32> to vector<2x8xf32>
    %20 = vector.shape_cast %19 : vector<2x8xf32> to vector<2x8x1xf32>
    %21 = vector.broadcast %20 : vector<2x8x1xf32> to vector<2x8x8xf32>
    %22 = arith.subf %18, %21 : vector<2x8x8xf32>
    %23 = math.exp %22 : vector<2x8x8xf32>
    %cst_11 = arith.constant dense<0.000000e+00> : vector<2x8xf32>
    %24 = vector.multi_reduction <add>, %23, %cst_11 [2] : vector<2x8x8xf32> to vector<2x8xf32>
    %25 = vector.shape_cast %24 : vector<2x8xf32> to vector<2x8x1xf32>
    %26 = tpu.reciprocal %25 {approx = true} : vector<2x8x1xf32> -> vector<2x8x1xf32>
    %27 = vector.broadcast %26 : vector<2x8x1xf32> to vector<2x8x8xf32>
    %28 = arith.mulf %23, %27 : vector<2x8x8xf32>
    "tpu.trace_start"() <{level = 10 : i32, message = "bqk,bkd->bqd"}> : () -> ()
    %cst_12 = arith.constant dense<0.000000e+00> : vector<2x8x8xf32>
    %29 = tpu.matmul %28, %14, %cst_12 {dimension_numbers = #tpu.dot_dimension_numbers<[2], [1], [1], [2], [0, 0, 0, 1, 1, 2], [0], [0]>} : vector<2x8x8xf32>, vector<2x8x8xf32>, vector<2x8x8xf32> -> vector<2x8x8xf32>
    "tpu.trace_stop"() : () -> ()
    %30 = vector.shape_cast %29 : vector<2x8x8xf32> to vector<16x8xf32>
    %31 = vector.extract_strided_slice %5 {offsets = [0, 8], sizes = [16, 8], strides = [1, 1]} : vector<16x96xf32> to vector<16x8xf32>
    %32 = vector.shape_cast %31 : vector<16x8xf32> to vector<2x8x8xf32>
    %33 = vector.extract_strided_slice %5 {offsets = [0, 40], sizes = [16, 8], strides = [1, 1]} : vector<16x96xf32> to vector<16x8xf32>
    %34 = vector.shape_cast %33 : vector<16x8xf32> to vector<2x8x8xf32>
    %35 = vector.extract_strided_slice %5 {offsets = [0, 72], sizes = [16, 8], strides = [1, 1]} : vector<16x96xf32> to vector<16x8xf32>
    %36 = vector.shape_cast %35 : vector<16x8xf32> to vector<2x8x8xf32>
    %cst_13 = arith.constant 0.353553385 : f32
    %37 = vector.broadcast %cst_13 : f32 to vector<2x8x8xf32>
    %38 = arith.mulf %32, %37 : vector<2x8x8xf32>
    "tpu.trace_start"() <{level = 10 : i32, message = "bqd,bkd->bqk"}> : () -> ()
    %cst_14 = arith.constant dense<0.000000e+00> : vector<2x8x8xf32>
    %39 = tpu.matmul %38, %34, %cst_14 {dimension_numbers = #tpu.dot_dimension_numbers<[2], [2], [1], [1], [0, 0, 0, 1, 1, 1], [0], [0]>} : vector<2x8x8xf32>, vector<2x8x8xf32>, vector<2x8x8xf32> -> vector<2x8x8xf32>
    "tpu.trace_stop"() : () -> ()
    %40 = arith.addf %39, %8 : vector<2x8x8xf32>
    %cst_15 = arith.constant dense<0xFF800000> : vector<2x8xf32>
    %41 = vector.multi_reduction <maximumf>, %40, %cst_15 [2] : vector<2x8x8xf32> to vector<2x8xf32>
    %42 = vector.shape_cast %41 : vector<2x8xf32> to vector<2x8x1xf32>
    %43 = vector.broadcast %42 : vector<2x8x1xf32> to vector<2x8x8xf32>
    %44 = arith.subf %40, %43 : vector<2x8x8xf32>
    %45 = math.exp %44 : vector<2x8x8xf32>
    %cst_16 = arith.constant dense<0.000000e+00> : vector<2x8xf32>
    %46 = vector.multi_reduction <add>, %45, %cst_16 [2] : vector<2x8x8xf32> to vector<2x8xf32>
    %47 = vector.shape_cast %46 : vector<2x8xf32> to vector<2x8x1xf32>
    %48 = tpu.reciprocal %47 {approx = true} : vector<2x8x1xf32> -> vector<2x8x1xf32>
    %49 = vector.broadcast %48 : vector<2x8x1xf32> to vector<2x8x8xf32>
    %50 = arith.mulf %45, %49 : vector<2x8x8xf32>
    "tpu.trace_start"() <{level = 10 : i32, message = "bqk,bkd->bqd"}> : () -> ()
    %cst_17 = arith.constant dense<0.000000e+00> : vector<2x8x8xf32>
    %51 = tpu.matmul %50, %36, %cst_17 {dimension_numbers = #tpu.dot_dimension_numbers<[2], [1], [1], [2], [0, 0, 0, 1, 1, 2], [0], [0]>} : vector<2x8x8xf32>, vector<2x8x8xf32>, vector<2x8x8xf32> -> vector<2x8x8xf32>
    "tpu.trace_stop"() : () -> ()
    %52 = vector.shape_cast %51 : vector<2x8x8xf32> to vector<16x8xf32>
    %53 = vector.extract_strided_slice %5 {offsets = [0, 16], sizes = [16, 8], strides = [1, 1]} : vector<16x96xf32> to vector<16x8xf32>
    %54 = vector.shape_cast %53 : vector<16x8xf32> to vector<2x8x8xf32>
    %55 = vector.extract_strided_slice %5 {offsets = [0, 48], sizes = [16, 8], strides = [1, 1]} : vector<16x96xf32> to vector<16x8xf32>
    %56 = vector.shape_cast %55 : vector<16x8xf32> to vector<2x8x8xf32>
    %57 = vector.extract_strided_slice %5 {offsets = [0, 80], sizes = [16, 8], strides = [1, 1]} : vector<16x96xf32> to vector<16x8xf32>
    %58 = vector.shape_cast %57 : vector<16x8xf32> to vector<2x8x8xf32>
    %cst_18 = arith.constant 0.353553385 : f32
    %59 = vector.broadcast %cst_18 : f32 to vector<2x8x8xf32>
    %60 = arith.mulf %54, %59 : vector<2x8x8xf32>
    "tpu.trace_start"() <{level = 10 : i32, message = "bqd,bkd->bqk"}> : () -> ()
    %cst_19 = arith.constant dense<0.000000e+00> : vector<2x8x8xf32>
    %61 = tpu.matmul %60, %56, %cst_19 {dimension_numbers = #tpu.dot_dimension_numbers<[2], [2], [1], [1], [0, 0, 0, 1, 1, 1], [0], [0]>} : vector<2x8x8xf32>, vector<2x8x8xf32>, vector<2x8x8xf32> -> vector<2x8x8xf32>
    "tpu.trace_stop"() : () -> ()
    %62 = arith.addf %61, %8 : vector<2x8x8xf32>
    %cst_20 = arith.constant dense<0xFF800000> : vector<2x8xf32>
    %63 = vector.multi_reduction <maximumf>, %62, %cst_20 [2] : vector<2x8x8xf32> to vector<2x8xf32>
    %64 = vector.shape_cast %63 : vector<2x8xf32> to vector<2x8x1xf32>
    %65 = vector.broadcast %64 : vector<2x8x1xf32> to vector<2x8x8xf32>
    %66 = arith.subf %62, %65 : vector<2x8x8xf32>
    %67 = math.exp %66 : vector<2x8x8xf32>
    %cst_21 = arith.constant dense<0.000000e+00> : vector<2x8xf32>
    %68 = vector.multi_reduction <add>, %67, %cst_21 [2] : vector<2x8x8xf32> to vector<2x8xf32>
    %69 = vector.shape_cast %68 : vector<2x8xf32> to vector<2x8x1xf32>
    %70 = tpu.reciprocal %69 {approx = true} : vector<2x8x1xf32> -> vector<2x8x1xf32>
    %71 = vector.broadcast %70 : vector<2x8x1xf32> to vector<2x8x8xf32>
    %72 = arith.mulf %67, %71 : vector<2x8x8xf32>
    "tpu.trace_start"() <{level = 10 : i32, message = "bqk,bkd->bqd"}> : () -> ()
    %cst_22 = arith.constant dense<0.000000e+00> : vector<2x8x8xf32>
    %73 = tpu.matmul %72, %58, %cst_22 {dimension_numbers = #tpu.dot_dimension_numbers<[2], [1], [1], [2], [0, 0, 0, 1, 1, 2], [0], [0]>} : vector<2x8x8xf32>, vector<2x8x8xf32>, vector<2x8x8xf32> -> vector<2x8x8xf32>
    "tpu.trace_stop"() : () -> ()
    %74 = vector.shape_cast %73 : vector<2x8x8xf32> to vector<16x8xf32>
    %75 = vector.extract_strided_slice %5 {offsets = [0, 24], sizes = [16, 8], strides = [1, 1]} : vector<16x96xf32> to vector<16x8xf32>
    %76 = vector.shape_cast %75 : vector<16x8xf32> to vector<2x8x8xf32>
    %77 = vector.extract_strided_slice %5 {offsets = [0, 56], sizes = [16, 8], strides = [1, 1]} : vector<16x96xf32> to vector<16x8xf32>
    %78 = vector.shape_cast %77 : vector<16x8xf32> to vector<2x8x8xf32>
    %79 = vector.extract_strided_slice %5 {offsets = [0, 88], sizes = [16, 8], strides = [1, 1]} : vector<16x96xf32> to vector<16x8xf32>
    %80 = vector.shape_cast %79 : vector<16x8xf32> to vector<2x8x8xf32>
    %cst_23 = arith.constant 0.353553385 : f32
    %81 = vector.broadcast %cst_23 : f32 to vector<2x8x8xf32>
    %82 = arith.mulf %76, %81 : vector<2x8x8xf32>
    "tpu.trace_start"() <{level = 10 : i32, message = "bqd,bkd->bqk"}> : () -> ()
    %cst_24 = arith.constant dense<0.000000e+00> : vector<2x8x8xf32>
    %83 = tpu.matmul %82, %78, %cst_24 {dimension_numbers = #tpu.dot_dimension_numbers<[2], [2], [1], [1], [0, 0, 0, 1, 1, 1], [0], [0]>} : vector<2x8x8xf32>, vector<2x8x8xf32>, vector<2x8x8xf32> -> vector<2x8x8xf32>
    "tpu.trace_stop"() : () -> ()
    %84 = arith.addf %83, %8 : vector<2x8x8xf32>
    %cst_25 = arith.constant dense<0xFF800000> : vector<2x8xf32>
    %85 = vector.multi_reduction <maximumf>, %84, %cst_25 [2] : vector<2x8x8xf32> to vector<2x8xf32>
    %86 = vector.shape_cast %85 : vector<2x8xf32> to vector<2x8x1xf32>
    %87 = vector.broadcast %86 : vector<2x8x1xf32> to vector<2x8x8xf32>
    %88 = arith.subf %84, %87 : vector<2x8x8xf32>
    %89 = math.exp %88 : vector<2x8x8xf32>
    %cst_26 = arith.constant dense<0.000000e+00> : vector<2x8xf32>
    %90 = vector.multi_reduction <add>, %89, %cst_26 [2] : vector<2x8x8xf32> to vector<2x8xf32>
    %91 = vector.shape_cast %90 : vector<2x8xf32> to vector<2x8x1xf32>
    %92 = tpu.reciprocal %91 {approx = true} : vector<2x8x1xf32> -> vector<2x8x1xf32>
    %93 = vector.broadcast %92 : vector<2x8x1xf32> to vector<2x8x8xf32>
    %94 = arith.mulf %89, %93 : vector<2x8x8xf32>
    "tpu.trace_start"() <{level = 10 : i32, message = "bqk,bkd->bqd"}> : () -> ()
    %cst_27 = arith.constant dense<0.000000e+00> : vector<2x8x8xf32>
    %95 = tpu.matmul %94, %80, %cst_27 {dimension_numbers = #tpu.dot_dimension_numbers<[2], [1], [1], [2], [0, 0, 0, 1, 1, 2], [0], [0]>} : vector<2x8x8xf32>, vector<2x8x8xf32>, vector<2x8x8xf32> -> vector<2x8x8xf32>
    "tpu.trace_stop"() : () -> ()
    %96 = vector.shape_cast %95 : vector<2x8x8xf32> to vector<16x8xf32>
    %97 = tpu.concatenate %30, %52, %74, %96 in 1 : vector<16x8xf32>, vector<16x8xf32>, vector<16x8xf32>, vector<16x8xf32> -> vector<16x32xf32>
    %c0_28 = arith.constant 0 : index
    %c0_29 = arith.constant 0 : index
    %98 = vector.load %arg5[%c0_28, %c0_29] : memref<32x32xf32, #tpu.memory_space<vmem>>, vector<32x32xf32>
    %cst_30 = arith.constant dense<0.000000e+00> : vector<16x32xf32>
    %99 = tpu.matmul %97, %98, %cst_30 {dimension_numbers = #tpu.dot_dimension_numbers<[1], [0], [0], [1], [0, 0, 1, 1], [], []>} : vector<16x32xf32>, vector<32x32xf32>, vector<16x32xf32> -> vector<16x32xf32>
    %c0_31 = arith.constant 0 : index
    %c0_32 = arith.constant 0 : index
    %100 = vector.load %arg6[%c0_31, %c0_32] : memref<1x32xf32, #tpu.memory_space<vmem>>, vector<1x32xf32>
    %101 = vector.broadcast %100 : vector<1x32xf32> to vector<16x32xf32>
    %102 = arith.addf %99, %101 : vector<16x32xf32>
    %103 = arith.addf %102, %0 : vector<16x32xf32>
    %c0_33 = arith.constant 0 : index
    %c0_34 = arith.constant 0 : index
    %104 = vector.load %arg7[%c0_33, %c0_34] : memref<1x32xf32, #tpu.memory_space<vmem>>, vector<1x32xf32>
    %c0_35 = arith.constant 0 : index
    %c0_36 = arith.constant 0 : index
    %105 = vector.load %arg8[%c0_35, %c0_36] : memref<1x32xf32, #tpu.memory_space<vmem>>, vector<1x32xf32>
    %cst_37 = arith.constant dense<0.000000e+00> : vector<16xf32>
    %106 = vector.multi_reduction <add>, %103, %cst_37 [1] : vector<16x32xf32> to vector<16xf32>
    %107 = vector.shape_cast %106 : vector<16xf32> to vector<16x1xf32>
    %cst_38 = arith.constant 3.200000e+01 : f32
    %108 = vector.broadcast %cst_38 : f32 to vector<16x1xf32>
    %109 = arith.divf %107, %108 : vector<16x1xf32>
    %110 = vector.broadcast %109 : vector<16x1xf32> to vector<16x32xf32>
    %111 = arith.subf %103, %110 : vector<16x32xf32>
    %112 = arith.mulf %111, %111 : vector<16x32xf32>
    %cst_39 = arith.constant dense<0.000000e+00> : vector<16xf32>
    %113 = vector.multi_reduction <add>, %112, %cst_39 [1] : vector<16x32xf32> to vector<16xf32>
    %114 = vector.shape_cast %113 : vector<16xf32> to vector<16x1xf32>
    %cst_40 = arith.constant 3.200000e+01 : f32
    %115 = vector.broadcast %cst_40 : f32 to vector<16x1xf32>
    %116 = arith.divf %114, %115 : vector<16x1xf32>
    %117 = vector.broadcast %109 : vector<16x1xf32> to vector<16x32xf32>
    %118 = arith.subf %103, %117 : vector<16x32xf32>
    %cst_41 = arith.constant 9.99999996E-13 : f32
    %119 = vector.broadcast %cst_41 : f32 to vector<16x1xf32>
    %120 = arith.addf %116, %119 : vector<16x1xf32>
    %121 = math.rsqrt %120 : vector<16x1xf32>
    %122 = vector.broadcast %121 : vector<16x1xf32> to vector<16x32xf32>
    %123 = arith.mulf %118, %122 : vector<16x32xf32>
    %124 = vector.broadcast %104 : vector<1x32xf32> to vector<16x32xf32>
    %125 = arith.mulf %123, %124 : vector<16x32xf32>
    %126 = vector.broadcast %105 : vector<1x32xf32> to vector<16x32xf32>
    %127 = arith.addf %125, %126 : vector<16x32xf32>
    %c0_42 = arith.constant 0 : index
    %c0_43 = arith.constant 0 : index
    %128 = vector.load %arg9[%c0_42, %c0_43] : memref<32x64xf32, #tpu.memory_space<vmem>>, vector<32x64xf32>
    %cst_44 = arith.constant dense<0.000000e+00> : vector<16x64xf32>
    %129 = tpu.matmul %127, %128, %cst_44 {dimension_numbers = #tpu.dot_dimension_numbers<[1], [0], [0], [1], [0, 0, 1, 1], [], []>} : vector<16x32xf32>, vector<32x64xf32>, vector<16x64xf32> -> vector<16x64xf32>
    %c0_45 = arith.constant 0 : index
    %c0_46 = arith.constant 0 : index
    %130 = vector.load %arg10[%c0_45, %c0_46] : memref<1x64xf32, #tpu.memory_space<vmem>>, vector<1x64xf32>
    %131 = vector.broadcast %130 : vector<1x64xf32> to vector<16x64xf32>
    %132 = arith.addf %129, %131 : vector<16x64xf32>
    %cst_47 = arith.constant 5.000000e-01 : f32
    %133 = vector.broadcast %cst_47 : f32 to vector<16x64xf32>
    %134 = arith.mulf %132, %133 : vector<16x64xf32>
    %cst_48 = arith.constant 0.707106769 : f32
    %135 = vector.broadcast %cst_48 : f32 to vector<16x64xf32>
    %136 = arith.mulf %132, %135 : vector<16x64xf32>
    %137 = math.erf %136 : vector<16x64xf32>
    %cst_49 = arith.constant 1.000000e+00 : f32
    %138 = vector.broadcast %cst_49 : f32 to vector<16x64xf32>
    %139 = arith.addf %138, %137 : vector<16x64xf32>
    %140 = arith.mulf %134, %139 : vector<16x64xf32>
    %c0_50 = arith.constant 0 : index
    %c0_51 = arith.constant 0 : index
    %141 = vector.load %arg11[%c0_50, %c0_51] : memref<64x32xf32, #tpu.memory_space<vmem>>, vector<64x32xf32>
    %cst_52 = arith.constant dense<0.000000e+00> : vector<16x32xf32>
    %142 = tpu.matmul %140, %141, %cst_52 {dimension_numbers = #tpu.dot_dimension_numbers<[1], [0], [0], [1], [0, 0, 1, 1], [], []>} : vector<16x64xf32>, vector<64x32xf32>, vector<16x32xf32> -> vector<16x32xf32>
    %c0_53 = arith.constant 0 : index
    %c0_54 = arith.constant 0 : index
    %143 = vector.load %arg12[%c0_53, %c0_54] : memref<1x32xf32, #tpu.memory_space<vmem>>, vector<1x32xf32>
    %144 = vector.broadcast %143 : vector<1x32xf32> to vector<16x32xf32>
    %145 = arith.addf %142, %144 : vector<16x32xf32>
    %146 = arith.addf %145, %127 : vector<16x32xf32>
    %c0_55 = arith.constant 0 : index
    %c0_56 = arith.constant 0 : index
    %147 = vector.load %arg13[%c0_55, %c0_56] : memref<1x32xf32, #tpu.memory_space<vmem>>, vector<1x32xf32>
    %c0_57 = arith.constant 0 : index
    %c0_58 = arith.constant 0 : index
    %148 = vector.load %arg14[%c0_57, %c0_58] : memref<1x32xf32, #tpu.memory_space<vmem>>, vector<1x32xf32>
    %cst_59 = arith.constant dense<0.000000e+00> : vector<16xf32>
    %149 = vector.multi_reduction <add>, %146, %cst_59 [1] : vector<16x32xf32> to vector<16xf32>
    %150 = vector.shape_cast %149 : vector<16xf32> to vector<16x1xf32>
    %cst_60 = arith.constant 3.200000e+01 : f32
    %151 = vector.broadcast %cst_60 : f32 to vector<16x1xf32>
    %152 = arith.divf %150, %151 : vector<16x1xf32>
    %153 = vector.broadcast %152 : vector<16x1xf32> to vector<16x32xf32>
    %154 = arith.subf %146, %153 : vector<16x32xf32>
    %155 = arith.mulf %154, %154 : vector<16x32xf32>
    %cst_61 = arith.constant dense<0.000000e+00> : vector<16xf32>
    %156 = vector.multi_reduction <add>, %155, %cst_61 [1] : vector<16x32xf32> to vector<16xf32>
    %157 = vector.shape_cast %156 : vector<16xf32> to vector<16x1xf32>
    %cst_62 = arith.constant 3.200000e+01 : f32
    %158 = vector.broadcast %cst_62 : f32 to vector<16x1xf32>
    %159 = arith.divf %157, %158 : vector<16x1xf32>
    %160 = vector.broadcast %152 : vector<16x1xf32> to vector<16x32xf32>
    %161 = arith.subf %146, %160 : vector<16x32xf32>
    %cst_63 = arith.constant 9.99999996E-13 : f32
    %162 = vector.broadcast %cst_63 : f32 to vector<16x1xf32>
    %163 = arith.addf %159, %162 : vector<16x1xf32>
    %164 = math.rsqrt %163 : vector<16x1xf32>
    %165 = vector.broadcast %164 : vector<16x1xf32> to vector<16x32xf32>
    %166 = arith.mulf %161, %165 : vector<16x32xf32>
    %167 = vector.broadcast %147 : vector<1x32xf32> to vector<16x32xf32>
    %168 = arith.mulf %166, %167 : vector<16x32xf32>
    %169 = vector.broadcast %148 : vector<1x32xf32> to vector<16x32xf32>
    %170 = arith.addf %168, %169 : vector<16x32xf32>
    %c0_64 = arith.constant 0 : index
    %c0_65 = arith.constant 0 : index
    %171 = vector.load %arg17[%c0_64, %c0_65] : memref<16x32xf32, #tpu.memory_space<vmem>>, vector<16x32xf32>
    tpu.vector_store %arg17[%c0_64, %c0_65], %170 {strides = array<i32>} : memref<16x32xf32, #tpu.memory_space<vmem>>, vector<16x32xf32>,
    return
  }
  func.func @transform_0(%arg0: i32) -> (i32, i32) {
    %c0_i32 = arith.constant 0 : i32
    %c0_i32_0 = arith.constant 0 : i32
    %c0_i32_1 = arith.constant 0 : i32
    return %c0_i32, %c0_i32_0 : i32, i32
  }
  func.func @transform_1(%arg0: i32) -> (i32, i32, i32) {
    %c0_i32 = arith.constant 0 : i32
    %c0_i32_0 = arith.constant 0 : i32
    %c0_i32_1 = arith.constant 0 : i32
    %c0_i32_2 = arith.constant 0 : i32
    return %c0_i32, %c0_i32_0, %c0_i32_1 : i32, i32, i32
  }
  func.func @transform_2(%arg0: i32) -> (i32, i32) {
    %c0_i32 = arith.constant 0 : i32
    %c0_i32_0 = arith.constant 0 : i32
    %c0_i32_1 = arith.constant 0 : i32
    return %c0_i32, %c0_i32_0 : i32, i32
  }
  func.func @transform_3(%arg0: i32) -> (i32, i32) {
    %c0_i32 = arith.constant 0 : i32
    %c0_i32_0 = arith.constant 0 : i32
    %c0_i32_1 = arith.constant 0 : i32
    return %c0_i32, %c0_i32_0 : i32, i32
  }
  func.func @transform_4(%arg0: i32) -> (i32, i32) {
    %c0_i32 = arith.constant 0 : i32
    %c0_i32_0 = arith.constant 0 : i32
    %c0_i32_1 = arith.constant 0 : i32
    return %c0_i32, %c0_i32_0 : i32, i32
  }
  func.func @transform_5(%arg0: i32) -> (i32, i32) {
    %c0_i32 = arith.constant 0 : i32
    %c0_i32_0 = arith.constant 0 : i32
    %c0_i32_1 = arith.constant 0 : i32
    return %c0_i32, %c0_i32_0 : i32, i32
  }
  func.func @transform_6(%arg0: i32) -> (i32, i32) {
    %c0_i32 = arith.constant 0 : i32
    %c0_i32_0 = arith.constant 0 : i32
    %c0_i32_1 = arith.constant 0 : i32
    return %c0_i32, %c0_i32_0 : i32, i32
  }
  func.func @transform_7(%arg0: i32) -> (i32, i32) {
    %c0_i32 = arith.constant 0 : i32
    %c0_i32_0 = arith.constant 0 : i32
    %c0_i32_1 = arith.constant 0 : i32
    return %c0_i32, %c0_i32_0 : i32, i32
  }
  func.func @transform_8(%arg0: i32) -> (i32, i32) {
    %c0_i32 = arith.constant 0 : i32
    %c0_i32_0 = arith.constant 0 : i32
    %c0_i32_1 = arith.constant 0 : i32
    return %c0_i32, %c0_i32_0 : i32, i32
  }
  func.func @transform_9(%arg0: i32) -> (i32, i32) {
    %c0_i32 = arith.constant 0 : i32
    %c0_i32_0 = arith.constant 0 : i32
    %c0_i32_1 = arith.constant 0 : i32
    return %c0_i32, %c0_i32_0 : i32, i32
  }
  func.func @transform_10(%arg0: i32) -> (i32, i32) {
    %c0_i32 = arith.constant 0 : i32
    %c0_i32_0 = arith.constant 0 : i32
    %c0_i32_1 = arith.constant 0 : i32
    return %c0_i32, %c0_i32_0 : i32, i32
  }
  func.func @transform_11(%arg0: i32) -> (i32, i32) {
    %c0_i32 = arith.constant 0 : i32
    %c0_i32_0 = arith.constant 0 : i32
    %c0_i32_1 = arith.constant 0 : i32
    return %c0_i32, %c0_i32_0 : i32, i32
  }
  func.func @transform_12(%arg0: i32) -> (i32, i32) {
    %c0_i32 = arith.constant 0 : i32
    %c0_i32_0 = arith.constant 0 : i32
    %c0_i32_1 = arith.constant 0 : i32
    return %c0_i32, %c0_i32_0 : i32, i32
  }
  func.func @transform_13(%arg0: i32) -> (i32, i32) {
    %c0_i32 = arith.constant 0 : i32
    %c0_i32_0 = arith.constant 0 : i32
    %c0_i32_1 = arith.constant 0 : i32
    return %c0_i32, %c0_i32_0 : i32, i32
  }
  func.func @transform_14(%arg0: i32) -> (i32, i32) {
    %c0_i32 = arith.constant 0 : i32
    %c0_i32_0 = arith.constant 0 : i32
    %c0_i32_1 = arith.constant 0 : i32
    return %c0_i32, %c0_i32_0 : i32, i32
  }
  func.func @transform_15(%arg0: i32) -> (i32, i32) {
    %c0_i32 = arith.constant 0 : i32
    %c0_i32_0 = arith.constant 0 : i32
    %c0_i32_1 = arith.constant 0 : i32
    return %c0_i32, %c0_i32_0 : i32, i32
  }
  func.func @transform_16(%arg0: i32) -> (i32, i32) {
    %c0_i32 = arith.constant 0 : i32
    %c0_i32_0 = arith.constant 0 : i32
    %c0_i32_1 = arith.constant 0 : i32
    return %c0_i32, %c0_i32_0 : i32, i32
  }
}

</mosaic_0001>

<llo_original>
// kernel: squeeze.1
$region0: #{squeeze.1}
  %s0 = inlined_call_operand.vmem [shape: f32[8], index: 0, kind: input, shape index: {}]
  %s1 = inlined_call_operand.vmem [shape: f32[2,4], index: 1, kind: output, shape index: {}]
  $region1: #{squeeze.1} parent=0
    #allocation0 [shape = 'u8[4096]{0}', space=vmem, size = 0x1000, scoped, tag = 'scoped mem for output reshape']
    #allocation1 [shape = 'u8[4096]{0}', space=vmem, size = 0x1000, scoped, tag = 'scoped mem for input reshape']
    %s3 = ssub.s32 2, 1
    %v4 = vld [vmem:[%s0] sm:%s3]
    %5 = vst [vmem:[#allocation1] sm:%s3] %v4
    %v6 = vld [vmem:[#allocation1] sm:$0x1]
    %vm7 = vcmask 31744
    %8 = vst.msk [vmem:[#allocation0] sm:$0x1] %vm7, %v6
    %v9 = vld [vmem:[#allocation1] sm:$0x1]
    %10 = vrot.lane.b32.xlu0 %v9, 124
    %v11 = vpop.permute.xlu0 %10
    %vm12 = vcmask 31744
    %s13 = scalar_lea.vmem [#allocation0], 1
    %14 = vst.msk [vmem:[%s13] sm:$0x1] %vm12, %v11
    %s16 = ssub.s32 4, 1
    %v17 = vld [vmem:[#allocation0] sm:%s16]
    %s19 = ssub.s32 4, 1
    %20 = vst [vmem:[%s1] sm:%s19] %v17

// kernel: unilm_forward.5
$region0: #{unilm_forward.5}
  #allocation0 [shape = 'u32[]', space=smem, size = 0x4, offset = 0x4, fixed_abs, tag = 'smem constant byte address 0x4 - core index']
  #allocation1 [shape = 'u32[72,128]{1,0:T(1,128)}', space=vmem, size = 0x9000, scoped, tag = 'internal scratch']
  %s0 = inlined_call_operand.vmem [shape: f32[8,32], index: 0, kind: input, shape index: {}]
  %s1 = inlined_call_operand.vmem [shape: f32[32,32], index: 1, kind: input, shape index: {}]
  %s2 = inlined_call_operand.vmem [shape: f32[1,32], index: 2, kind: input, shape index: {}]
  %s3 = inlined_call_operand.vmem [shape: f32[1,32], index: 3, kind: input, shape index: {}]
  %s4 = inlined_call_operand.vmem [shape: f32[1,32], index: 4, kind: input, shape index: {}]
  %s5 = inlined_call_operand.vmem [shape: f32[128,32], index: 5, kind: input, shape index: {}]
  %s6 = inlined_call_operand.vmem [shape: f32[1,128], index: 6, kind: input, shape index: {}]
  %s7 = inlined_call_operand.vmem [shape: s32[8,1], index: 7, kind: input, shape index: {}]
  %s8 = inlined_call_operand.vmem [shape: f32[8,1], index: 8, kind: output, shape index: {}]
  %s9 = sld [smem:[#allocation0]]
  $region42: #{unilm_forward.5} parent=0
    _
  %s11 = ssub.s32 1, %s9
  %s12 = scalar_select 0, %s11, %s9
  // Predicated region
  $region2: #{unilm_forward.5} parent=0 // pred_check
    _
  $region3: #{unilm_forward.5} parent=0 // pred_check_branch
    %14 = sbr.rel (0) target = $region5
  $region4: #{unilm_forward.5} parent=0 // pred_region
    _
  $region5: #{unilm_forward.5} parent=0 // pred_fallthru
    _
  // Predicated region
  $region6: #{unilm_forward.5} parent=0 // pred_check
    _
  $region7: #{unilm_forward.5} parent=0 // pred_check_branch
    %16 = sbr.rel (0) target = $region9
  $region8: #{unilm_forward.5} parent=0 // pred_region
    _
  $region9: #{unilm_forward.5} parent=0 // pred_fallthru
    _
  // Predicated region
  $region10: #{unilm_forward.5} parent=0 // pred_check
    _
  $region11: #{unilm_forward.5} parent=0 // pred_check_branch
    %18 = sbr.rel (0) target = $region13
  $region12: #{unilm_forward.5} parent=0 // pred_region
    _
  $region13: #{unilm_forward.5} parent=0 // pred_fallthru
    _
  // Predicated region
  $region14: #{unilm_forward.5} parent=0 // pred_check
    _
  $region15: #{unilm_forward.5} parent=0 // pred_check_branch
    %20 = sbr.rel (0) target = $region17
  $region16: #{unilm_forward.5} parent=0 // pred_region
    _
  $region17: #{unilm_forward.5} parent=0 // pred_fallthru
    _
  // Predicated region
  $region18: #{unilm_forward.5} parent=0 // pred_check
    _
  $region19: #{unilm_forward.5} parent=0 // pred_check_branch
    %22 = sbr.rel (0) target = $region21
  $region20: #{unilm_forward.5} parent=0 // pred_region
    _
  $region21: #{unilm_forward.5} parent=0 // pred_fallthru
    _
  // Predicated region
  $region22: #{unilm_forward.5} parent=0 // pred_check
    _
  $region23: #{unilm_forward.5} parent=0 // pred_check_branch
    %24 = sbr.rel (0) target = $region25
  $region24: #{unilm_forward.5} parent=0 // pred_region
    _
  $region25: #{unilm_forward.5} parent=0 // pred_fallthru
    _
  // Predicated region
  $region26: #{unilm_forward.5} parent=0 // pred_check
    _
  $region27: #{unilm_forward.5} parent=0 // pred_check_branch
    %26 = sbr.rel (0) target = $region29
  $region28: #{unilm_forward.5} parent=0 // pred_region
    _
  $region29: #{unilm_forward.5} parent=0 // pred_fallthru
    _
  // Predicated region
  $region30: #{unilm_forward.5} parent=0 // pred_check
    _
  $region31: #{unilm_forward.5} parent=0 // pred_check_branch
    %28 = sbr.rel (0) target = $region33
  $region32: #{unilm_forward.5} parent=0 // pred_region
    _
  $region33: #{unilm_forward.5} parent=0 // pred_fallthru
    _
  %v29 = vld [vmem:[%s0] sm:$0xff]
  %v30 = vld [vmem:[%s1] sm:$0xff]
  %v31 = vld [vmem:[%s1 + $0x8] sm:$0xff]
  %v32 = vld [vmem:[%s1 + $0x10] sm:$0xff]
  %v33 = vld [vmem:[%s1 + $0x18] sm:$0xff]
  %v34 = vld [vmem:[%s2] sm:$0x1]
  %v36 = vperm.slane %v34, 0
  %vm38 = vcmask 261120
  %v40 = vsel %vm38, %v29, 0
  %42 = vmatpush.msra.mxu0 0.0
  %43 = vmatpush.msra.mxu0 0.0
  %44 = vmatpush.msra.mxu0 0.0
  %45 = vmatpush.msra.mxu0 0.0
  %46 = vmatpush.msra.mxu0 0.0
  %47 = vmatpush.msra.mxu0 0.0
  %48 = vmatpush.msra.mxu0 0.0
  %49 = vmatpush.msra.mxu0 0.0
  %50 = vmatpush.msra.mxu0 0.0
  %51 = vmatpush.msra.mxu0 0.0
  %52 = vmatpush.msra.mxu0 0.0
  %53 = vmatpush.msra.mxu0 0.0
  %54 = vmatpush.msra.mxu0 %v33
  %55 = vmatpush.msra.mxu0 %v32
  %56 = vmatpush.msra.mxu0 %v31
  %57 = vmatpush.msra.mxu0 %v30
  %58 = vmatmul.f32.gmra.mxu0 %v40
  %v59 = vpop.f32.mrf.mxu0
  %v60 = vadd.f32 %v36, %v59
  %61 = vdwg.mxu0
  %v62 = vmul.f32 %v60, 0.5
  %v63 = vmul.f32 %v60, 0.70710677
  %v64 = vmul.f32 %v63, %v63
  %v65 = vmin.f32 16.0, %v64
  %v66 = vmul.f32 %v65, 2.1237322e-06
  %v67 = vadd.f32 %v66, 0.00028619796
  %v68 = vmul.f32 %v65, %v67
  %v69 = vadd.f32 %v68, 0.0036580483
  %v70 = vmul.f32 %v65, %v69
  %v71 = vadd.f32 %v70, 0.05243302
  %v72 = vmul.f32 %v65, %v71
  %v73 = vadd.f32 %v72, 0.18741608
  %v74 = vmul.f32 %v65, %v73
  %v75 = vadd.f32 %v74, 1.1283791
  %v76 = vmul.f32 %v63, %v75
  %v77 = vmul.f32 %v65, 3.8918573e-05
  %v78 = vadd.f32 %v77, 0.001143296
  %v79 = vmul.f32 %v65, %v78
  %v80 = vadd.f32 %v79, 0.014752088
  %v81 = vmul.f32 %v65, %v80
  %v82 = vadd.f32 %v81, 0.112945676
  %v83 = vmul.f32 %v65, %v82
  %v84 = vadd.f32 %v83, 0.4994258
  %v85 = vmul.f32 %v65, %v84
  %v86 = vadd.f32 %v85, 1.0
  %v87 = vrcp.pop %v86
  %v88 = vmul.f32 %v86, %v87
  %v89 = vsub.f32 1.0, %v88
  %v90 = vmul.f32 %v87, %v89
  %v91 = vadd.f32 %v87, %v90
  %vm92 = vweird.f32 %v86
  %vm93 = vweird.f32 %v87
  %vm94 = vmor %vm92, %vm93
  %v95 = vsel %vm94, %v87, %v91
  %v96 = vand.u32 2147483647, %v86
  %vm97 = vcmp.eq.f32.partialorder %v96, 8.507059e+37
  %v98 = vand.u32 %v86, 2147483648
  %v99 = vor.u32 1.1754944e-38, %v98
  %v100 = vsel %vm97, %v99, %v95
  %v101 = vmul.f32 %v76, %v100
  %v102 = vmin.f32 %v101, 1.0
  %v103 = vmax.f32 %v102, -1.0
  %v104 = vadd.f32 %v103, 1.0
  %v105 = vmul.f32 %v62, %v104
  %v106 = vld [vmem:[%s3] sm:$0x1]
  %v107 = vld [vmem:[%s4] sm:$0x1]
  %v108 = vsel %vm38, %v105, 0.0
  %109 = vadd.xlane.f32.xlu0 %v108
  %v110 = vpop.xlane.xlu0 %109
  %v111 = vrcp.pop 32.0
  %v112 = vmul.f32 32.0, %v111
  %v113 = vsub.f32 1.0, %v112
  %v114 = vmul.f32 %v111, %v113
  %v115 = vadd.f32 %v111, %v114
  %vm116 = vweird.f32 %v111
  %v117 = vsel %vm116, %v111, %v115
  %v118 = vmul.f32 %v110, %v117
  %v119 = vsub.f32 %v105, %v118
  %v120 = vmul.f32 %v119, %v119
  %v121 = vsel %vm38, %v120, 0.0
  %122 = vadd.xlane.f32.xlu0 %v121
  %v123 = vpop.xlane.xlu0 %122
  %v124 = vmul.f32 %v123, %v117
  %v125 = vadd.f32 %v124, 1e-12
  %v126 = vrsqrt.pop %v125
  %v127 = vmul.f32 %v126, %v125
  %v128 = vmul.f32 %v127, %v126
  %v129 = vmul.f32 0.5, %v128
  %v130 = vsub.f32 1.5, %v129
  %v131 = vmul.f32 %v126, %v130
  %vm132 = vweird.f32 %v125
  %vm133 = vweird.f32 %v126
  %vm134 = vmor %vm132, %vm133
  %v135 = vsel %vm134, %v126, %v131
  %v136 = vmul.f32 %v119, %v135
  %v138 = vperm.slane %v106, 0
  %v140 = vmul.f32 %v136, %v138
  %v142 = vperm.slane %v107, 0
  %v144 = vadd.f32 %v140, %v142
  %v145 = vld [vmem:[%s5] sm:$0xff]
  %v146 = vld [vmem:[%s5 + $0x8] sm:$0xff]
  %v147 = vld [vmem:[%s5 + $0x10] sm:$0xff]
  %v148 = vld [vmem:[%s5 + $0x18] sm:$0xff]
  %v149 = vld [vmem:[%s5 + $0x20] sm:$0xff]
  %v150 = vld [vmem:[%s5 + $0x28] sm:$0xff]
  %v151 = vld [vmem:[%s5 + $0x30] sm:$0xff]
  %v152 = vld [vmem:[%s5 + $0x38] sm:$0xff]
  %v153 = vld [vmem:[%s5 + $0x40] sm:$0xff]
  %v154 = vld [vmem:[%s5 + $0x48] sm:$0xff]
  %v155 = vld [vmem:[%s5 + $0x50] sm:$0xff]
  %v156 = vld [vmem:[%s5 + $0x58] sm:$0xff]
  %v157 = vld [vmem:[%s5 + $0x60] sm:$0xff]
  %v158 = vld [vmem:[%s5 + $0x68] sm:$0xff]
  %v159 = vld [vmem:[%s5 + $0x70] sm:$0xff]
  %v160 = vld [vmem:[%s5 + $0x78] sm:$0xff]
  %v161 = vld [vmem:[%s6] sm:$0x1]
  %v163 = vperm.slane %v161, 0
  %v166 = vsel %vm38, %v144, 0
  %v169 = vsel %vm38, %v145, 0
  %v172 = vsel %vm38, %v146, 0
  %v175 = vsel %vm38, %v147, 0
  %v178 = vsel %vm38, %v148, 0
  %v181 = vsel %vm38, %v149, 0
  %v184 = vsel %vm38, %v150, 0
  %v187 = vsel %vm38, %v151, 0
  %v190 = vsel %vm38, %v152, 0
  %v193 = vsel %vm38, %v153, 0
  %v196 = vsel %vm38, %v154, 0
  %v199 = vsel %vm38, %v155, 0
  %v202 = vsel %vm38, %v156, 0
  %v205 = vsel %vm38, %v157, 0
  %v208 = vsel %vm38, %v158, 0
  %v211 = vsel %vm38, %v159, 0
  %v214 = vsel %vm38, %v160, 0
  %216 = vmatpush.xpose.msra.mxu0 %v214
  %217 = vmatpush.xpose.msra.mxu0 %v211
  %218 = vmatpush.xpose.msra.mxu0 %v208
  %219 = vmatpush.xpose.msra.mxu0 %v205
  %220 = vmatpush.xpose.msra.mxu0 %v202
  %221 = vmatpush.xpose.msra.mxu0 %v199
  %222 = vmatpush.xpose.msra.mxu0 %v196
  %223 = vmatpush.xpose.msra.mxu0 %v193
  %224 = vmatpush.xpose.msra.mxu0 %v190
  %225 = vmatpush.xpose.msra.mxu0 %v187
  %226 = vmatpush.xpose.msra.mxu0 %v184
  %227 = vmatpush.xpose.msra.mxu0 %v181
  %228 = vmatpush.xpose.msra.mxu0 %v178
  %229 = vmatpush.xpose.msra.mxu0 %v175
  %230 = vmatpush.xpose.msra.mxu0 %v172
  %231 = vmatpush.xpose.msra.mxu0 %v169
  %232 = vmatmul.f32.gmra.mxu0 %v166
  %v233 = vpop.f32.mrf.mxu0
  %v234 = vadd.f32 %v163, %v233
  %235 = vdwg.mxu0
  %236 = vmax.xlane.f32.xlu0 %v234
  %v237 = vpop.xlane.xlu0 %236
  %v238 = vsub.f32 %v234, %v237
  %v239 = vmul.f32 %v238, 1.442695
  %v240 = vpow.pop %v239
  %241 = vadd.xlane.f32.xlu0 %v240
  %v242 = vpop.xlane.xlu0 %241
  %v243 = vlog2.pop %v242
  %v244 = vmul.f32 %v243, 0.6931472
  %v245 = vadd.f32 %v244, %v237
  %v246 = vlaneseq
  %v247 = vand.u32 %v246, 127
  %v248 = vld [vmem:[%s7] sm:$0xff]
  %249 = vset.pattern.permute.xlu0 0
  %250 = vperm.xlu0 %249, %v248
  %v251 = vpop.permute.xlu0 %250
  %vm252 = vcmp.eq.s32.totalorder %v247, %v251
  %v253 = vsel %vm252, %v234, 0.0
  %254 = vadd.xlane.f32.xlu0 %v253
  %v255 = vpop.xlane.xlu0 %254
  %v256 = vsub.f32 %v245, %v255
  %vm257 = vcmask 7168
  %258 = vst.msk [vmem:[%s8] sm:$0xff] %vm257, %v256
  // Predicated region
  $region34: #{unilm_forward.5} parent=0 // pred_check
    _
  $region35: #{unilm_forward.5} parent=0 // pred_check_branch
    %260 = sbr.rel (0) target = $region37
  $region36: #{unilm_forward.5} parent=0 // pred_region
    _
  $region37: #{unilm_forward.5} parent=0 // pred_fallthru
    _
  // Predicated region
  $region38: #{unilm_forward.5} parent=0 // pred_check
    _
  $region39: #{unilm_forward.5} parent=0 // pred_check_branch
    %262 = sbr.rel (0) target = $region41
  $region40: #{unilm_forward.5} parent=0 // pred_region
    _
  $region41: #{unilm_forward.5} parent=0 // pred_fallthru
    _

// kernel: unilm_forward.4
$region0: #{unilm_forward.4}
  #allocation0 [shape = 'u32[]', space=smem, size = 0x4, offset = 0x4, fixed_abs, tag = 'smem constant byte address 0x4 - core index']
  #allocation1 [shape = 'u32[72,128]{1,0:T(1,128)}', space=vmem, size = 0x9000, scoped, tag = 'internal scratch']
  %s0 = inlined_call_operand.vmem [shape: f32[16,32], index: 0, kind: input, shape index: {}, may-alias: {0,16}]
  %s1 = inlined_call_operand.vmem [shape: f32[2,1,8], index: 1, kind: input, shape index: {}]
  %s2 = inlined_call_operand.vmem [shape: f32[32,96], index: 2, kind: input, shape index: {}]
  %s3 = inlined_call_operand.vmem [shape: f32[1,96], index: 3, kind: input, shape index: {}]
  %s4 = inlined_call_operand.vmem [shape: f32[32,32], index: 4, kind: input, shape index: {}]
  %s5 = inlined_call_operand.vmem [shape: f32[1,32], index: 5, kind: input, shape index: {}]
  %s6 = inlined_call_operand.vmem [shape: f32[1,32], index: 6, kind: input, shape index: {}]
  %s7 = inlined_call_operand.vmem [shape: f32[1,32], index: 7, kind: input, shape index: {}]
  %s8 = inlined_call_operand.vmem [shape: f32[32,64], index: 8, kind: input, shape index: {}]
  %s9 = inlined_call_operand.vmem [shape: f32[1,64], index: 9, kind: input, shape index: {}]
  %s10 = inlined_call_operand.vmem [shape: f32[64,32], index: 10, kind: input, shape index: {}]
  %s11 = inlined_call_operand.vmem [shape: f32[1,32], index: 11, kind: input, shape index: {}]
  %s12 = inlined_call_operand.vmem [shape: f32[1,32], index: 12, kind: input, shape index: {}]
  %s13 = inlined_call_operand.vmem [shape: f32[1,32], index: 13, kind: input, shape index: {}]
  %s14 = inlined_call_operand.vmem [shape: f32[1,32], index: 14, kind: input, shape index: {}]
  %s15 = inlined_call_operand.vmem [shape: f32[1,32], index: 15, kind: input, shape index: {}]
  %s16 = inlined_call_operand.vmem [shape: f32[16,32], index: 16, kind: output, shape index: {}, may-alias: {0,16}]
  %s17 = sld [smem:[#allocation0]]
  $region74: #{unilm_forward.4} parent=0
    _
  %s19 = ssub.s32 1, %s17
  %s20 = scalar_select 0, %s19, %s17
  // Predicated region
  $region2: #{unilm_forward.4} parent=0 // pred_check
    _
  $region3: #{unilm_forward.4} parent=0 // pred_check_branch
    %22 = sbr.rel (0) target = $region5
  $region4: #{unilm_forward.4} parent=0 // pred_region
    _
  $region5: #{unilm_forward.4} parent=0 // pred_fallthru
    _
  // Predicated region
  $region6: #{unilm_forward.4} parent=0 // pred_check
    _
  $region7: #{unilm_forward.4} parent=0 // pred_check_branch
    %24 = sbr.rel (0) target = $region9
  $region8: #{unilm_forward.4} parent=0 // pred_region
    _
  $region9: #{unilm_forward.4} parent=0 // pred_fallthru
    _
  // Predicated region
  $region10: #{unilm_forward.4} parent=0 // pred_check
    _
  $region11: #{unilm_forward.4} parent=0 // pred_check_branch
    %26 = sbr.rel (0) target = $region13
  $region12: #{unilm_forward.4} parent=0 // pred_region
    _
  $region13: #{unilm_forward.4} parent=0 // pred_fallthru
    _
  // Predicated region
  $region14: #{unilm_forward.4} parent=0 // pred_check
    _
  $region15: #{unilm_forward.4} parent=0 // pred_check_branch
    %28 = sbr.rel (0) target = $region17
  $region16: #{unilm_forward.4} parent=0 // pred_region
    _
  $region17: #{unilm_forward.4} parent=0 // pred_fallthru
    _
  // Predicated region
  $region18: #{unilm_forward.4} parent=0 // pred_check
    _
  $region19: #{unilm_forward.4} parent=0 // pred_check_branch
    %30 = sbr.rel (0) target = $region21
  $region20: #{unilm_forward.4} parent=0 // pred_region
    _
  $region21: #{unilm_forward.4} parent=0 // pred_fallthru
    _
  // Predicated region
  $region22: #{unilm_forward.4} parent=0 // pred_check
    _
  $region23: #{unilm_forward.4} parent=0 // pred_check_branch
    %32 = sbr.rel (0) target = $region25
  $region24: #{unilm_forward.4} parent=0 // pred_region
    _
  $region25: #{unilm_forward.4} parent=0 // pred_fallthru
    _
  // Predicated region
  $region26: #{unilm_forward.4} parent=0 // pred_check
    _
  $region27: #{unilm_forward.4} parent=0 // pred_check_branch
    %34 = sbr.rel (0) target = $region29
  $region28: #{unilm_forward.4} parent=0 // pred_region
    _
  $region29: #{unilm_forward.4} parent=0 // pred_fallthru
    _
  // Predicated region
  $region30: #{unilm_forward.4} parent=0 // pred_check
    _
  $region31: #{unilm_forward.4} parent=0 // pred_check_branch
    %36 = sbr.rel (0) target = $region33
  $region32: #{unilm_forward.4} parent=0 // pred_region
    _
  $region33: #{unilm_forward.4} parent=0 // pred_fallthru
    _
  // Predicated region
  $region34: #{unilm_forward.4} parent=0 // pred_check
    _
  $region35: #{unilm_forward.4} parent=0 // pred_check_branch
    %38 = sbr.rel (0) target = $region37
  $region36: #{unilm_forward.4} parent=0 // pred_region
    _
  $region37: #{unilm_forward.4} parent=0 // pred_fallthru
    _
  // Predicated region
  $region38: #{unilm_forward.4} parent=0 // pred_check
    _
  $region39: #{unilm_forward.4} parent=0 // pred_check_branch
    %40 = sbr.rel (0) target = $region41
  $region40: #{unilm_forward.4} parent=0 // pred_region
    _
  $region41: #{unilm_forward.4} parent=0 // pred_fallthru
    _
  // Predicated region
  $region42: #{unilm_forward.4} parent=0 // pred_check
    _
  $region43: #{unilm_forward.4} parent=0 // pred_check_branch
    %42 = sbr.rel (0) target = $region45
  $region44: #{unilm_forward.4} parent=0 // pred_region
    _
  $region45: #{unilm_forward.4} parent=0 // pred_fallthru
    _
  // Predicated region
  $region46: #{unilm_forward.4} parent=0 // pred_check
    _
  $region47: #{unilm_forward.4} parent=0 // pred_check_branch
    %44 = sbr.rel (0) target = $region49
  $region48: #{unilm_forward.4} parent=0 // pred_region
    _
  $region49: #{unilm_forward.4} parent=0 // pred_fallthru
    _
  // Predicated region
  $region50: #{unilm_forward.4} parent=0 // pred_check
    _
  $region51: #{unilm_forward.4} parent=0 // pred_check_branch
    %46 = sbr.rel (0) target = $region53
  $region52: #{unilm_forward.4} parent=0 // pred_region
    _
  $region53: #{unilm_forward.4} parent=0 // pred_fallthru
    _
  // Predicated region
  $region54: #{unilm_forward.4} parent=0 // pred_check
    _
  $region55: #{unilm_forward.4} parent=0 // pred_check_branch
    %48 = sbr.rel (0) target = $region57
  $region56: #{unilm_forward.4} parent=0 // pred_region
    _
  $region57: #{unilm_forward.4} parent=0 // pred_fallthru
    _
  // Predicated region
  $region58: #{unilm_forward.4} parent=0 // pred_check
    _
  $region59: #{unilm_forward.4} parent=0 // pred_check_branch
    %50 = sbr.rel (0) target = $region61
  $region60: #{unilm_forward.4} parent=0 // pred_region
    _
  $region61: #{unilm_forward.4} parent=0 // pred_fallthru
    _
  // Predicated region
  $region62: #{unilm_forward.4} parent=0 // pred_check
    _
  $region63: #{unilm_forward.4} parent=0 // pred_check_branch
    %52 = sbr.rel (0) target = $region65
  $region64: #{unilm_forward.4} parent=0 // pred_region
    _
  $region65: #{unilm_forward.4} parent=0 // pred_fallthru
    _
  %v53 = vld [vmem:[%s0] sm:$0xff]
  %v54 = vld [vmem:[%s0 + $0x8] sm:$0xff]
  %v55 = vld [vmem:[%s2] sm:$0xff]
  %v56 = vld [vmem:[%s2 + $0x8] sm:$0xff]
  %v57 = vld [vmem:[%s2 + $0x10] sm:$0xff]
  %v58 = vld [vmem:[%s2 + $0x18] sm:$0xff]
  %v59 = vld [vmem:[%s3] sm:$0x1]
  %v61 = vperm.slane %v59, 0
  %vm63 = vcmask 261120
  %v65 = vsel %vm63, %v53, 0
  %v68 = vsel %vm63, %v54, 0
  %70 = vmatpush.msra.mxu0 0.0
  %71 = vmatpush.msra.mxu0 0.0
  %72 = vmatpush.msra.mxu0 0.0
  %73 = vmatpush.msra.mxu0 0.0
  %74 = vmatpush.msra.mxu0 0.0
  %75 = vmatpush.msra.mxu0 0.0
  %76 = vmatpush.msra.mxu0 0.0
  %77 = vmatpush.msra.mxu0 0.0
  %78 = vmatpush.msra.mxu0 0.0
  %79 = vmatpush.msra.mxu0 0.0
  %80 = vmatpush.msra.mxu0 0.0
  %81 = vmatpush.msra.mxu0 0.0
  %82 = vmatpush.msra.mxu0 %v58
  %83 = vmatpush.msra.mxu0 %v57
  %84 = vmatpush.msra.mxu0 %v56
  %85 = vmatpush.msra.mxu0 %v55
  %86 = vmatmul.f32.gmra.mxu0 %v65
  %v87 = vpop.f32.mrf.mxu0
  %v88 = vadd.f32 %v61, %v87
  %89 = vmatmul.f32.gmra.mxu0 %v68
  %v90 = vpop.f32.mrf.mxu0
  %v91 = vadd.f32 %v61, %v90
  %92 = vdwg.mxu0
  %v93 = vld [vmem:[%s1] sm:$0x1]
  %v94 = vld [vmem:[%s1 + $0x1] sm:$0x1]
  %v97 = vperm.slane %v93, 0
  %v98 = vperm.slane %v94, 0
  %v101 = vmul.f32 %v88, 0.35355338
  %v102 = vmul.f32 %v91, 0.35355338
  %104 = vrot.lane.b32.xlu0 %v88, 96
  %v105 = vpop.permute.xlu0 %104
  %vm106 = vcmask 64512
  %v108 = vsel %vm106, %v101, 0
  %v110 = vsel %vm106, %v105, 0
  %112 = vmatpush.xpose.msra.mxu0 0.0
  %113 = vmatpush.xpose.msra.mxu0 0.0
  %114 = vmatpush.xpose.msra.mxu0 0.0
  %115 = vmatpush.xpose.msra.mxu0 0.0
  %116 = vmatpush.xpose.msra.mxu0 0.0
  %117 = vmatpush.xpose.msra.mxu0 0.0
  %118 = vmatpush.xpose.msra.mxu0 0.0
  %119 = vmatpush.xpose.msra.mxu0 0.0
  %120 = vmatpush.xpose.msra.mxu0 0.0
  %121 = vmatpush.xpose.msra.mxu0 0.0
  %122 = vmatpush.xpose.msra.mxu0 0.0
  %123 = vmatpush.xpose.msra.mxu0 0.0
  %124 = vmatpush.xpose.msra.mxu0 0.0
  %125 = vmatpush.xpose.msra.mxu0 0.0
  %126 = vmatpush.xpose.msra.mxu0 0.0
  %127 = vmatpush.xpose.msra.mxu0 %v110
  %128 = vmatmul.f32.gmra.mxu0 %v108
  %v129 = vpop.f32.mrf.mxu0
  %v130 = vadd.f32 %v97, %v129
  %131 = vdwg.mxu0
  %133 = vrot.lane.b32.xlu0 %v91, 96
  %v134 = vpop.permute.xlu0 %133
  %v136 = vsel %vm106, %v102, 0
  %v138 = vsel %vm106, %v134, 0
  %140 = vmatpush.xpose.msra.mxu0 0.0
  %141 = vmatpush.xpose.msra.mxu0 0.0
  %142 = vmatpush.xpose.msra.mxu0 0.0
  %143 = vmatpush.xpose.msra.mxu0 0.0
  %144 = vmatpush.xpose.msra.mxu0 0.0
  %145 = vmatpush.xpose.msra.mxu0 0.0
  %146 = vmatpush.xpose.msra.mxu0 0.0
  %147 = vmatpush.xpose.msra.mxu0 0.0
  %148 = vmatpush.xpose.msra.mxu0 0.0
  %149 = vmatpush.xpose.msra.mxu0 0.0
  %150 = vmatpush.xpose.msra.mxu0 0.0
  %151 = vmatpush.xpose.msra.mxu0 0.0
  %152 = vmatpush.xpose.msra.mxu0 0.0
  %153 = vmatpush.xpose.msra.mxu0 0.0
  %154 = vmatpush.xpose.msra.mxu0 0.0
  %155 = vmatpush.xpose.msra.mxu0 %v138
  %156 = vmatmul.f32.gmra.mxu0 %v136
  %v157 = vpop.f32.mrf.mxu0
  %v158 = vadd.f32 %v98, %v157
  %159 = vdwg.mxu0
  %v160 = vsel %vm106, %v130, -inf
  %161 = vmax.xlane.f32.xlu0 %v160
  %v162 = vpop.xlane.xlu0 %161
  %v163 = vsel %vm106, %v158, -inf
  %164 = vmax.xlane.f32.xlu0 %v163
  %v165 = vpop.xlane.xlu0 %164
  %v166 = vsub.f32 %v130, %v162
  %v167 = vsub.f32 %v158, %v165
  %v168 = vmul.f32 %v166, 1.442695
  %v169 = vpow.pop %v168
  %v170 = vmul.f32 %v167, 1.442695
  %v171 = vpow.pop %v170
  %v172 = vsel %vm106, %v169, 0.0
  %173 = vadd.xlane.f32.xlu0 %v172
  %v174 = vpop.xlane.xlu0 %173
  %v175 = vsel %vm106, %v171, 0.0
  %176 = vadd.xlane.f32.xlu0 %v175
  %v177 = vpop.xlane.xlu0 %176
  %v178 = vrcp.pop %v174
  %v179 = vrcp.pop %v177
  %v180 = vmul.f32 %v169, %v178
  %v181 = vmul.f32 %v171, %v179
  %182 = vrot.lane.b32.xlu0 %v88, 64
  %v183 = vpop.permute.xlu0 %182
  %v186 = vsel %vm106, %v180, 0
  %188 = vmatpush.msra.mxu0 0.0
  %189 = vmatpush.msra.mxu0 0.0
  %190 = vmatpush.msra.mxu0 0.0
  %191 = vmatpush.msra.mxu0 0.0
  %192 = vmatpush.msra.mxu0 0.0
  %193 = vmatpush.msra.mxu0 0.0
  %194 = vmatpush.msra.mxu0 0.0
  %195 = vmatpush.msra.mxu0 0.0
  %196 = vmatpush.msra.mxu0 0.0
  %197 = vmatpush.msra.mxu0 0.0
  %198 = vmatpush.msra.mxu0 0.0
  %199 = vmatpush.msra.mxu0 0.0
  %200 = vmatpush.msra.mxu0 0.0
  %201 = vmatpush.msra.mxu0 0.0
  %202 = vmatpush.msra.mxu0 0.0
  %203 = vmatpush.msra.mxu0 %v183
  %204 = vmatmul.f32.gmra.mxu0 %v186
  %v205 = vpop.f32.mrf.mxu0
  %v206 = vadd.f32 0.0, %v205
  %207 = vdwg.mxu0
  %208 = vrot.lane.b32.xlu0 %v91, 64
  %v209 = vpop.permute.xlu0 %208
  %v212 = vsel %vm106, %v181, 0
  %214 = vmatpush.msra.mxu0 0.0
  %215 = vmatpush.msra.mxu0 0.0
  %216 = vmatpush.msra.mxu0 0.0
  %217 = vmatpush.msra.mxu0 0.0
  %218 = vmatpush.msra.mxu0 0.0
  %219 = vmatpush.msra.mxu0 0.0
  %220 = vmatpush.msra.mxu0 0.0
  %221 = vmatpush.msra.mxu0 0.0
  %222 = vmatpush.msra.mxu0 0.0
  %223 = vmatpush.msra.mxu0 0.0
  %224 = vmatpush.msra.mxu0 0.0
  %225 = vmatpush.msra.mxu0 0.0
  %226 = vmatpush.msra.mxu0 0.0
  %227 = vmatpush.msra.mxu0 0.0
  %228 = vmatpush.msra.mxu0 0.0
  %229 = vmatpush.msra.mxu0 %v209
  %230 = vmatmul.f32.gmra.mxu0 %v212
  %v231 = vpop.f32.mrf.mxu0
  %v232 = vadd.f32 0.0, %v231
  %233 = vdwg.mxu0
  %234 = vrot.lane.b32.xlu0 %v101, 120
  %v235 = vpop.permute.xlu0 %234
  %236 = vrot.lane.b32.xlu0 %v88, 88
  %v237 = vpop.permute.xlu0 %236
  %v238 = vsel %vm106, %v235, 0
  %v240 = vsel %vm106, %v237, 0
  %242 = vmatpush.xpose.msra.mxu0 0.0
  %243 = vmatpush.xpose.msra.mxu0 0.0
  %244 = vmatpush.xpose.msra.mxu0 0.0
  %245 = vmatpush.xpose.msra.mxu0 0.0
  %246 = vmatpush.xpose.msra.mxu0 0.0
  %247 = vmatpush.xpose.msra.mxu0 0.0
  %248 = vmatpush.xpose.msra.mxu0 0.0
  %249 = vmatpush.xpose.msra.mxu0 0.0
  %250 = vmatpush.xpose.msra.mxu0 0.0
  %251 = vmatpush.xpose.msra.mxu0 0.0
  %252 = vmatpush.xpose.msra.mxu0 0.0
  %253 = vmatpush.xpose.msra.mxu0 0.0
  %254 = vmatpush.xpose.msra.mxu0 0.0
  %255 = vmatpush.xpose.msra.mxu0 0.0
  %256 = vmatpush.xpose.msra.mxu0 0.0
  %257 = vmatpush.xpose.msra.mxu0 %v240
  %258 = vmatmul.f32.gmra.mxu0 %v238
  %v259 = vpop.f32.mrf.mxu0
  %v260 = vadd.f32 %v97, %v259
  %261 = vdwg.mxu0
  %262 = vrot.lane.b32.xlu0 %v102, 120
  %v263 = vpop.permute.xlu0 %262
  %264 = vrot.lane.b32.xlu0 %v91, 88
  %v265 = vpop.permute.xlu0 %264
  %v266 = vsel %vm106, %v263, 0
  %v268 = vsel %vm106, %v265, 0
  %270 = vmatpush.xpose.msra.mxu0 0.0
  %271 = vmatpush.xpose.msra.mxu0 0.0
  %272 = vmatpush.xpose.msra.mxu0 0.0
  %273 = vmatpush.xpose.msra.mxu0 0.0
  %274 = vmatpush.xpose.msra.mxu0 0.0
  %275 = vmatpush.xpose.msra.mxu0 0.0
  %276 = vmatpush.xpose.msra.mxu0 0.0
  %277 = vmatpush.xpose.msra.mxu0 0.0
  %278 = vmatpush.xpose.msra.mxu0 0.0
  %279 = vmatpush.xpose.msra.mxu0 0.0
  %280 = vmatpush.xpose.msra.mxu0 0.0
  %281 = vmatpush.xpose.msra.mxu0 0.0
  %282 = vmatpush.xpose.msra.mxu0 0.0
  %283 = vmatpush.xpose.msra.mxu0 0.0
  %284 = vmatpush.xpose.msra.mxu0 0.0
  %285 = vmatpush.xpose.msra.mxu0 %v268
  %286 = vmatmul.f32.gmra.mxu0 %v266
  %v287 = vpop.f32.mrf.mxu0
  %v288 = vadd.f32 %v98, %v287
  %289 = vdwg.mxu0
  %v290 = vsel %vm106, %v260, -inf
  %291 = vmax.xlane.f32.xlu0 %v290
  %v292 = vpop.xlane.xlu0 %291
  %v293 = vsel %vm106, %v288, -inf
  %294 = vmax.xlane.f32.xlu0 %v293
  %v295 = vpop.xlane.xlu0 %294
  %v296 = vsub.f32 %v260, %v292
  %v297 = vsub.f32 %v288, %v295
  %v298 = vmul.f32 %v296, 1.442695
  %v299 = vpow.pop %v298
  %v300 = vmul.f32 %v297, 1.442695
  %v301 = vpow.pop %v300
  %v302 = vsel %vm106, %v299, 0.0
  %303 = vadd.xlane.f32.xlu0 %v302
  %v304 = vpop.xlane.xlu0 %303
  %v305 = vsel %vm106, %v301, 0.0
  %306 = vadd.xlane.f32.xlu0 %v305
  %v307 = vpop.xlane.xlu0 %306
  %v308 = vrcp.pop %v304
  %v309 = vrcp.pop %v307
  %v310 = vmul.f32 %v299, %v308
  %v311 = vmul.f32 %v301, %v309
  %312 = vrot.lane.b32.xlu0 %v88, 56
  %v313 = vpop.permute.xlu0 %312
  %v316 = vsel %vm106, %v310, 0
  %318 = vmatpush.msra.mxu0 0.0
  %319 = vmatpush.msra.mxu0 0.0
  %320 = vmatpush.msra.mxu0 0.0
  %321 = vmatpush.msra.mxu0 0.0
  %322 = vmatpush.msra.mxu0 0.0
  %323 = vmatpush.msra.mxu0 0.0
  %324 = vmatpush.msra.mxu0 0.0
  %325 = vmatpush.msra.mxu0 0.0
  %326 = vmatpush.msra.mxu0 0.0
  %327 = vmatpush.msra.mxu0 0.0
  %328 = vmatpush.msra.mxu0 0.0
  %329 = vmatpush.msra.mxu0 0.0
  %330 = vmatpush.msra.mxu0 0.0
  %331 = vmatpush.msra.mxu0 0.0
  %332 = vmatpush.msra.mxu0 0.0
  %333 = vmatpush.msra.mxu0 %v313
  %334 = vmatmul.f32.gmra.mxu0 %v316
  %v335 = vpop.f32.mrf.mxu0
  %v336 = vadd.f32 0.0, %v335
  %337 = vdwg.mxu0
  %338 = vrot.lane.b32.xlu0 %v91, 56
  %v339 = vpop.permute.xlu0 %338
  %v342 = vsel %vm106, %v311, 0
  %344 = vmatpush.msra.mxu0 0.0
  %345 = vmatpush.msra.mxu0 0.0
  %346 = vmatpush.msra.mxu0 0.0
  %347 = vmatpush.msra.mxu0 0.0
  %348 = vmatpush.msra.mxu0 0.0
  %349 = vmatpush.msra.mxu0 0.0
  %350 = vmatpush.msra.mxu0 0.0
  %351 = vmatpush.msra.mxu0 0.0
  %352 = vmatpush.msra.mxu0 0.0
  %353 = vmatpush.msra.mxu0 0.0
  %354 = vmatpush.msra.mxu0 0.0
  %355 = vmatpush.msra.mxu0 0.0
  %356 = vmatpush.msra.mxu0 0.0
  %357 = vmatpush.msra.mxu0 0.0
  %358 = vmatpush.msra.mxu0 0.0
  %359 = vmatpush.msra.mxu0 %v339
  %360 = vmatmul.f32.gmra.mxu0 %v342
  %v361 = vpop.f32.mrf.mxu0
  %v362 = vadd.f32 0.0, %v361
  %363 = vdwg.mxu0
  %364 = vrot.lane.b32.xlu0 %v101, 112
  %v365 = vpop.permute.xlu0 %364
  %366 = vrot.lane.b32.xlu0 %v88, 80
  %v367 = vpop.permute.xlu0 %366
  %v368 = vsel %vm106, %v365, 0
  %v370 = vsel %vm106, %v367, 0
  %372 = vmatpush.xpose.msra.mxu0 0.0
  %373 = vmatpush.xpose.msra.mxu0 0.0
  %374 = vmatpush.xpose.msra.mxu0 0.0
  %375 = vmatpush.xpose.msra.mxu0 0.0
  %376 = vmatpush.xpose.msra.mxu0 0.0
  %377 = vmatpush.xpose.msra.mxu0 0.0
  %378 = vmatpush.xpose.msra.mxu0 0.0
  %379 = vmatpush.xpose.msra.mxu0 0.0
  %380 = vmatpush.xpose.msra.mxu0 0.0
  %381 = vmatpush.xpose.msra.mxu0 0.0
  %382 = vmatpush.xpose.msra.mxu0 0.0
  %383 = vmatpush.xpose.msra.mxu0 0.0
  %384 = vmatpush.xpose.msra.mxu0 0.0
  %385 = vmatpush.xpose.msra.mxu0 0.0
  %386 = vmatpush.xpose.msra.mxu0 0.0
  %387 = vmatpush.xpose.msra.mxu0 %v370
  %388 = vmatmul.f32.gmra.mxu0 %v368
  %v389 = vpop.f32.mrf.mxu0
  %v390 = vadd.f32 %v97, %v389
  %391 = vdwg.mxu0
  %392 = vrot.lane.b32.xlu0 %v102, 112
  %v393 = vpop.permute.xlu0 %392
  %394 = vrot.lane.b32.xlu0 %v91, 80
  %v395 = vpop.permute.xlu0 %394
  %v396 = vsel %vm106, %v393, 0
  %v398 = vsel %vm106, %v395, 0
  %400 = vmatpush.xpose.msra.mxu0 0.0
  %401 = vmatpush.xpose.msra.mxu0 0.0
  %402 = vmatpush.xpose.msra.mxu0 0.0
  %403 = vmatpush.xpose.msra.mxu0 0.0
  %404 = vmatpush.xpose.msra.mxu0 0.0
  %405 = vmatpush.xpose.msra.mxu0 0.0
  %406 = vmatpush.xpose.msra.mxu0 0.0
  %407 = vmatpush.xpose.msra.mxu0 0.0
  %408 = vmatpush.xpose.msra.mxu0 0.0
  %409 = vmatpush.xpose.msra.mxu0 0.0
  %410 = vmatpush.xpose.msra.mxu0 0.0
  %411 = vmatpush.xpose.msra.mxu0 0.0
  %412 = vmatpush.xpose.msra.mxu0 0.0
  %413 = vmatpush.xpose.msra.mxu0 0.0
  %414 = vmatpush.xpose.msra.mxu0 0.0
  %415 = vmatpush.xpose.msra.mxu0 %v398
  %416 = vmatmul.f32.gmra.mxu0 %v396
  %v417 = vpop.f32.mrf.mxu0
  %v418 = vadd.f32 %v98, %v417
  %419 = vdwg.mxu0
  %v420 = vsel %vm106, %v390, -inf
  %421 = vmax.xlane.f32.xlu0 %v420
  %v422 = vpop.xlane.xlu0 %421
  %v423 = vsel %vm106, %v418, -inf
  %424 = vmax.xlane.f32.xlu0 %v423
  %v425 = vpop.xlane.xlu0 %424
  %v426 = vsub.f32 %v390, %v422
  %v427 = vsub.f32 %v418, %v425
  %v428 = vmul.f32 %v426, 1.442695
  %v429 = vpow.pop %v428
  %v430 = vmul.f32 %v427, 1.442695
  %v431 = vpow.pop %v430
  %v432 = vsel %vm106, %v429, 0.0
  %433 = vadd.xlane.f32.xlu0 %v432
  %v434 = vpop.xlane.xlu0 %433
  %v435 = vsel %vm106, %v431, 0.0
  %436 = vadd.xlane.f32.xlu0 %v435
  %v437 = vpop.xlane.xlu0 %436
  %v438 = vrcp.pop %v434
  %v439 = vrcp.pop %v437
  %v440 = vmul.f32 %v429, %v438
  %v441 = vmul.f32 %v431, %v439
  %442 = vrot.lane.b32.xlu0 %v88, 48
  %v443 = vpop.permute.xlu0 %442
  %v446 = vsel %vm106, %v440, 0
  %448 = vmatpush.msra.mxu0 0.0
  %449 = vmatpush.msra.mxu0 0.0
  %450 = vmatpush.msra.mxu0 0.0
  %451 = vmatpush.msra.mxu0 0.0
  %452 = vmatpush.msra.mxu0 0.0
  %453 = vmatpush.msra.mxu0 0.0
  %454 = vmatpush.msra.mxu0 0.0
  %455 = vmatpush.msra.mxu0 0.0
  %456 = vmatpush.msra.mxu0 0.0
  %457 = vmatpush.msra.mxu0 0.0
  %458 = vmatpush.msra.mxu0 0.0
  %459 = vmatpush.msra.mxu0 0.0
  %460 = vmatpush.msra.mxu0 0.0
  %461 = vmatpush.msra.mxu0 0.0
  %462 = vmatpush.msra.mxu0 0.0
  %463 = vmatpush.msra.mxu0 %v443
  %464 = vmatmul.f32.gmra.mxu0 %v446
  %v465 = vpop.f32.mrf.mxu0
  %v466 = vadd.f32 0.0, %v465
  %467 = vdwg.mxu0
  %468 = vrot.lane.b32.xlu0 %v91, 48
  %v469 = vpop.permute.xlu0 %468
  %v472 = vsel %vm106, %v441, 0
  %474 = vmatpush.msra.mxu0 0.0
  %475 = vmatpush.msra.mxu0 0.0
  %476 = vmatpush.msra.mxu0 0.0
  %477 = vmatpush.msra.mxu0 0.0
  %478 = vmatpush.msra.mxu0 0.0
  %479 = vmatpush.msra.mxu0 0.0
  %480 = vmatpush.msra.mxu0 0.0
  %481 = vmatpush.msra.mxu0 0.0
  %482 = vmatpush.msra.mxu0 0.0
  %483 = vmatpush.msra.mxu0 0.0
  %484 = vmatpush.msra.mxu0 0.0
  %485 = vmatpush.msra.mxu0 0.0
  %486 = vmatpush.msra.mxu0 0.0
  %487 = vmatpush.msra.mxu0 0.0
  %488 = vmatpush.msra.mxu0 0.0
  %489 = vmatpush.msra.mxu0 %v469
  %490 = vmatmul.f32.gmra.mxu0 %v472
  %v491 = vpop.f32.mrf.mxu0
  %v492 = vadd.f32 0.0, %v491
  %493 = vdwg.mxu0
  %494 = vrot.lane.b32.xlu0 %v101, 104
  %v495 = vpop.permute.xlu0 %494
  %496 = vrot.lane.b32.xlu0 %v88, 72
  %v497 = vpop.permute.xlu0 %496
  %v498 = vsel %vm106, %v495, 0
  %v500 = vsel %vm106, %v497, 0
  %502 = vmatpush.xpose.msra.mxu0 0.0
  %503 = vmatpush.xpose.msra.mxu0 0.0
  %504 = vmatpush.xpose.msra.mxu0 0.0
  %505 = vmatpush.xpose.msra.mxu0 0.0
  %506 = vmatpush.xpose.msra.mxu0 0.0
  %507 = vmatpush.xpose.msra.mxu0 0.0
  %508 = vmatpush.xpose.msra.mxu0 0.0
  %509 = vmatpush.xpose.msra.mxu0 0.0
  %510 = vmatpush.xpose.msra.mxu0 0.0
  %511 = vmatpush.xpose.msra.mxu0 0.0
  %512 = vmatpush.xpose.msra.mxu0 0.0
  %513 = vmatpush.xpose.msra.mxu0 0.0
  %514 = vmatpush.xpose.msra.mxu0 0.0
  %515 = vmatpush.xpose.msra.mxu0 0.0
  %516 = vmatpush.xpose.msra.mxu0 0.0
  %517 = vmatpush.xpose.msra.mxu0 %v500
  %518 = vmatmul.f32.gmra.mxu0 %v498
  %v519 = vpop.f32.mrf.mxu0
  %v520 = vadd.f32 %v97, %v519
  %521 = vdwg.mxu0
  %522 = vrot.lane.b32.xlu0 %v102, 104
  %v523 = vpop.permute.xlu0 %522
  %524 = vrot.lane.b32.xlu0 %v91, 72
  %v525 = vpop.permute.xlu0 %524
  %v526 = vsel %vm106, %v523, 0
  %v528 = vsel %vm106, %v525, 0
  %530 = vmatpush.xpose.msra.mxu0 0.0
  %531 = vmatpush.xpose.msra.mxu0 0.0
  %532 = vmatpush.xpose.msra.mxu0 0.0
  %533 = vmatpush.xpose.msra.mxu0 0.0
  %534 = vmatpush.xpose.msra.mxu0 0.0
  %535 = vmatpush.xpose.msra.mxu0 0.0
  %536 = vmatpush.xpose.msra.mxu0 0.0
  %537 = vmatpush.xpose.msra.mxu0 0.0
  %538 = vmatpush.xpose.msra.mxu0 0.0
  %539 = vmatpush.xpose.msra.mxu0 0.0
  %540 = vmatpush.xpose.msra.mxu0 0.0
  %541 = vmatpush.xpose.msra.mxu0 0.0
  %542 = vmatpush.xpose.msra.mxu0 0.0
  %543 = vmatpush.xpose.msra.mxu0 0.0
  %544 = vmatpush.xpose.msra.mxu0 0.0
  %545 = vmatpush.xpose.msra.mxu0 %v528
  %546 = vmatmul.f32.gmra.mxu0 %v526
  %v547 = vpop.f32.mrf.mxu0
  %v548 = vadd.f32 %v98, %v547
  %549 = vdwg.mxu0
  %v550 = vsel %vm106, %v520, -inf
  %551 = vmax.xlane.f32.xlu0 %v550
  %v552 = vpop.xlane.xlu0 %551
  %v553 = vsel %vm106, %v548, -inf
  %554 = vmax.xlane.f32.xlu0 %v553
  %v555 = vpop.xlane.xlu0 %554
  %v556 = vsub.f32 %v520, %v552
  %v557 = vsub.f32 %v548, %v555
  %v558 = vmul.f32 %v556, 1.442695
  %v559 = vpow.pop %v558
  %v560 = vmul.f32 %v557, 1.442695
  %v561 = vpow.pop %v560
  %v562 = vsel %vm106, %v559, 0.0
  %563 = vadd.xlane.f32.xlu0 %v562
  %v564 = vpop.xlane.xlu0 %563
  %v565 = vsel %vm106, %v561, 0.0
  %566 = vadd.xlane.f32.xlu0 %v565
  %v567 = vpop.xlane.xlu0 %566
  %v568 = vrcp.pop %v564
  %v569 = vrcp.pop %v567
  %v570 = vmul.f32 %v559, %v568
  %v571 = vmul.f32 %v561, %v569
  %572 = vrot.lane.b32.xlu0 %v88, 40
  %v573 = vpop.permute.xlu0 %572
  %v576 = vsel %vm106, %v570, 0
  %578 = vmatpush.msra.mxu0 0.0
  %579 = vmatpush.msra.mxu0 0.0
  %580 = vmatpush.msra.mxu0 0.0
  %581 = vmatpush.msra.mxu0 0.0
  %582 = vmatpush.msra.mxu0 0.0
  %583 = vmatpush.msra.mxu0 0.0
  %584 = vmatpush.msra.mxu0 0.0
  %585 = vmatpush.msra.mxu0 0.0
  %586 = vmatpush.msra.mxu0 0.0
  %587 = vmatpush.msra.mxu0 0.0
  %588 = vmatpush.msra.mxu0 0.0
  %589 = vmatpush.msra.mxu0 0.0
  %590 = vmatpush.msra.mxu0 0.0
  %591 = vmatpush.msra.mxu0 0.0
  %592 = vmatpush.msra.mxu0 0.0
  %593 = vmatpush.msra.mxu0 %v573
  %594 = vmatmul.f32.gmra.mxu0 %v576
  %v595 = vpop.f32.mrf.mxu0
  %v596 = vadd.f32 0.0, %v595
  %597 = vdwg.mxu0
  %598 = vrot.lane.b32.xlu0 %v91, 40
  %v599 = vpop.permute.xlu0 %598
  %v602 = vsel %vm106, %v571, 0
  %604 = vmatpush.msra.mxu0 0.0
  %605 = vmatpush.msra.mxu0 0.0
  %606 = vmatpush.msra.mxu0 0.0
  %607 = vmatpush.msra.mxu0 0.0
  %608 = vmatpush.msra.mxu0 0.0
  %609 = vmatpush.msra.mxu0 0.0
  %610 = vmatpush.msra.mxu0 0.0
  %611 = vmatpush.msra.mxu0 0.0
  %612 = vmatpush.msra.mxu0 0.0
  %613 = vmatpush.msra.mxu0 0.0
  %614 = vmatpush.msra.mxu0 0.0
  %615 = vmatpush.msra.mxu0 0.0
  %616 = vmatpush.msra.mxu0 0.0
  %617 = vmatpush.msra.mxu0 0.0
  %618 = vmatpush.msra.mxu0 0.0
  %619 = vmatpush.msra.mxu0 %v599
  %620 = vmatmul.f32.gmra.mxu0 %v602
  %v621 = vpop.f32.mrf.mxu0
  %v622 = vadd.f32 0.0, %v621
  %623 = vdwg.mxu0
  %626 = vrot.lane.b32.xlu0 %v336, 8
  %v627 = vpop.permute.xlu0 %626
  %628 = vrot.lane.b32.xlu0 %v362, 8
  %v629 = vpop.permute.xlu0 %628
  %634 = vrot.lane.b32.xlu0 %v466, 16
  %v635 = vpop.permute.xlu0 %634
  %636 = vrot.lane.b32.xlu0 %v492, 16
  %v637 = vpop.permute.xlu0 %636
  %642 = vrot.lane.b32.xlu0 %v596, 24
  %v643 = vpop.permute.xlu0 %642
  %644 = vrot.lane.b32.xlu0 %v622, 24
  %v645 = vpop.permute.xlu0 %644
  %v648 = vsel %vm106, %v206, %v627
  %v649 = vsel %vm106, %v232, %v629
  %vm650 = vcmask 130048
  %v651 = vsel %vm650, %v648, %v635
  %v652 = vsel %vm650, %v649, %v637
  %vm653 = vcmask 195584
  %v654 = vsel %vm653, %v651, %v643
  %v655 = vsel %vm653, %v652, %v645
  %v656 = vld [vmem:[%s4] sm:$0xff]
  %v657 = vld [vmem:[%s4 + $0x8] sm:$0xff]
  %v658 = vld [vmem:[%s4 + $0x10] sm:$0xff]
  %v659 = vld [vmem:[%s4 + $0x18] sm:$0xff]
  %v660 = vld [vmem:[%s5] sm:$0x1]
  %v662 = vperm.slane %v660, 0
  %v665 = vsel %vm63, %v654, 0
  %v668 = vsel %vm63, %v655, 0
  %670 = vmatpush.msra.mxu0 0.0
  %671 = vmatpush.msra.mxu0 0.0
  %672 = vmatpush.msra.mxu0 0.0
  %673 = vmatpush.msra.mxu0 0.0
  %674 = vmatpush.msra.mxu0 0.0
  %675 = vmatpush.msra.mxu0 0.0
  %676 = vmatpush.msra.mxu0 0.0
  %677 = vmatpush.msra.mxu0 0.0
  %678 = vmatpush.msra.mxu0 0.0
  %679 = vmatpush.msra.mxu0 0.0
  %680 = vmatpush.msra.mxu0 0.0
  %681 = vmatpush.msra.mxu0 0.0
  %682 = vmatpush.msra.mxu0 %v659
  %683 = vmatpush.msra.mxu0 %v658
  %684 = vmatpush.msra.mxu0 %v657
  %685 = vmatpush.msra.mxu0 %v656
  %686 = vmatmul.f32.gmra.mxu0 %v665
  %v687 = vpop.f32.mrf.mxu0
  %v688 = vadd.f32 %v662, %v687
  %689 = vmatmul.f32.gmra.mxu0 %v668
  %v690 = vpop.f32.mrf.mxu0
  %v691 = vadd.f32 %v662, %v690
  %692 = vdwg.mxu0
  %v693 = vadd.f32 %v688, %v53
  %v694 = vadd.f32 %v691, %v54
  %v695 = vld [vmem:[%s6] sm:$0x1]
  %v696 = vld [vmem:[%s7] sm:$0x1]
  %v697 = vsel %vm63, %v693, 0.0
  %698 = vadd.xlane.f32.xlu0 %v697
  %v699 = vpop.xlane.xlu0 %698
  %v700 = vsel %vm63, %v694, 0.0
  %701 = vadd.xlane.f32.xlu0 %v700
  %v702 = vpop.xlane.xlu0 %701
  %v703 = vrcp.pop 32.0
  %v704 = vmul.f32 32.0, %v703
  %v705 = vsub.f32 1.0, %v704
  %v706 = vmul.f32 %v703, %v705
  %v707 = vadd.f32 %v703, %v706
  %vm708 = vweird.f32 %v703
  %v709 = vsel %vm708, %v703, %v707
  %v710 = vmul.f32 %v699, %v709
  %v711 = vmul.f32 %v702, %v709
  %v712 = vsub.f32 %v693, %v710
  %v713 = vsub.f32 %v694, %v711
  %v714 = vmul.f32 %v712, %v712
  %v715 = vmul.f32 %v713, %v713
  %v716 = vsel %vm63, %v714, 0.0
  %717 = vadd.xlane.f32.xlu0 %v716
  %v718 = vpop.xlane.xlu0 %717
  %v719 = vsel %vm63, %v715, 0.0
  %720 = vadd.xlane.f32.xlu0 %v719
  %v721 = vpop.xlane.xlu0 %720
  %v722 = vmul.f32 %v718, %v709
  %v723 = vmul.f32 %v721, %v709
  %v724 = vadd.f32 %v722, 1e-12
  %v725 = vadd.f32 %v723, 1e-12
  %v726 = vrsqrt.pop %v724
  %v727 = vmul.f32 %v726, %v724
  %v728 = vmul.f32 %v727, %v726
  %v729 = vmul.f32 0.5, %v728
  %v730 = vsub.f32 1.5, %v729
  %v731 = vmul.f32 %v726, %v730
  %vm732 = vweird.f32 %v724
  %vm733 = vweird.f32 %v726
  %vm734 = vmor %vm732, %vm733
  %v735 = vsel %vm734, %v726, %v731
  %v736 = vrsqrt.pop %v725
  %v737 = vmul.f32 %v736, %v725
  %v738 = vmul.f32 %v737, %v736
  %v739 = vmul.f32 0.5, %v738
  %v740 = vsub.f32 1.5, %v739
  %v741 = vmul.f32 %v736, %v740
  %vm742 = vweird.f32 %v725
  %vm743 = vweird.f32 %v736
  %vm744 = vmor %vm742, %vm743
  %v745 = vsel %vm744, %v736, %v741
  %v746 = vmul.f32 %v712, %v735
  %v747 = vmul.f32 %v713, %v745
  %v749 = vperm.slane %v695, 0
  %v751 = vmul.f32 %v746, %v749
  %v752 = vmul.f32 %v747, %v749
  %v754 = vperm.slane %v696, 0
  %v756 = vadd.f32 %v751, %v754
  %v757 = vadd.f32 %v752, %v754
  %v758 = vld [vmem:[%s8] sm:$0xff]
  %v759 = vld [vmem:[%s8 + $0x8] sm:$0xff]
  %v760 = vld [vmem:[%s8 + $0x10] sm:$0xff]
  %v761 = vld [vmem:[%s8 + $0x18] sm:$0xff]
  %v762 = vld [vmem:[%s9] sm:$0x1]
  %v764 = vperm.slane %v762, 0
  %v767 = vsel %vm63, %v756, 0
  %v770 = vsel %vm63, %v757, 0
  %772 = vmatpush.msra.mxu0 0.0
  %773 = vmatpush.msra.mxu0 0.0
  %774 = vmatpush.msra.mxu0 0.0
  %775 = vmatpush.msra.mxu0 0.0
  %776 = vmatpush.msra.mxu0 0.0
  %777 = vmatpush.msra.mxu0 0.0
  %778 = vmatpush.msra.mxu0 0.0
  %779 = vmatpush.msra.mxu0 0.0
  %780 = vmatpush.msra.mxu0 0.0
  %781 = vmatpush.msra.mxu0 0.0
  %782 = vmatpush.msra.mxu0 0.0
  %783 = vmatpush.msra.mxu0 0.0
  %784 = vmatpush.msra.mxu0 %v761
  %785 = vmatpush.msra.mxu0 %v760
  %786 = vmatpush.msra.mxu0 %v759
  %787 = vmatpush.msra.mxu0 %v758
  %788 = vmatmul.f32.gmra.mxu0 %v767
  %v789 = vpop.f32.mrf.mxu0
  %v790 = vadd.f32 %v764, %v789
  %791 = vmatmul.f32.gmra.mxu0 %v770
  %v792 = vpop.f32.mrf.mxu0
  %v793 = vadd.f32 %v764, %v792
  %794 = vdwg.mxu0
  %v795 = vmul.f32 %v790, 0.5
  %v796 = vmul.f32 %v793, 0.5
  %v797 = vmul.f32 %v790, 0.70710677
  %v798 = vmul.f32 %v793, 0.70710677
  %v799 = vmul.f32 %v797, %v797
  %v800 = vmin.f32 16.0, %v799
  %v801 = vmul.f32 %v800, 2.1237322e-06
  %v802 = vadd.f32 %v801, 0.00028619796
  %v803 = vmul.f32 %v800, %v802
  %v804 = vadd.f32 %v803, 0.0036580483
  %v805 = vmul.f32 %v800, %v804
  %v806 = vadd.f32 %v805, 0.05243302
  %v807 = vmul.f32 %v800, %v806
  %v808 = vadd.f32 %v807, 0.18741608
  %v809 = vmul.f32 %v800, %v808
  %v810 = vadd.f32 %v809, 1.1283791
  %v811 = vmul.f32 %v797, %v810
  %v812 = vmul.f32 %v800, 3.8918573e-05
  %v813 = vadd.f32 %v812, 0.001143296
  %v814 = vmul.f32 %v800, %v813
  %v815 = vadd.f32 %v814, 0.014752088
  %v816 = vmul.f32 %v800, %v815
  %v817 = vadd.f32 %v816, 0.112945676
  %v818 = vmul.f32 %v800, %v817
  %v819 = vadd.f32 %v818, 0.4994258
  %v820 = vmul.f32 %v800, %v819
  %v821 = vadd.f32 %v820, 1.0
  %v822 = vrcp.pop %v821
  %v823 = vmul.f32 %v821, %v822
  %v824 = vsub.f32 1.0, %v823
  %v825 = vmul.f32 %v822, %v824
  %v826 = vadd.f32 %v822, %v825
  %vm827 = vweird.f32 %v821
  %vm828 = vweird.f32 %v822
  %vm829 = vmor %vm827, %vm828
  %v830 = vsel %vm829, %v822, %v826
  %v831 = vand.u32 2147483647, %v821
  %vm832 = vcmp.eq.f32.partialorder %v831, 8.507059e+37
  %v833 = vand.u32 %v821, 2147483648
  %v834 = vor.u32 1.1754944e-38, %v833
  %v835 = vsel %vm832, %v834, %v830
  %v836 = vmul.f32 %v811, %v835
  %v837 = vmin.f32 %v836, 1.0
  %v838 = vmax.f32 %v837, -1.0
  %v839 = vmul.f32 %v798, %v798
  %v840 = vmin.f32 16.0, %v839
  %v841 = vmul.f32 %v840, 2.1237322e-06
  %v842 = vadd.f32 %v841, 0.00028619796
  %v843 = vmul.f32 %v840, %v842
  %v844 = vadd.f32 %v843, 0.0036580483
  %v845 = vmul.f32 %v840, %v844
  %v846 = vadd.f32 %v845, 0.05243302
  %v847 = vmul.f32 %v840, %v846
  %v848 = vadd.f32 %v847, 0.18741608
  %v849 = vmul.f32 %v840, %v848
  %v850 = vadd.f32 %v849, 1.1283791
  %v851 = vmul.f32 %v798, %v850
  %v852 = vmul.f32 %v840, 3.8918573e-05
  %v853 = vadd.f32 %v852, 0.001143296
  %v854 = vmul.f32 %v840, %v853
  %v855 = vadd.f32 %v854, 0.014752088
  %v856 = vmul.f32 %v840, %v855
  %v857 = vadd.f32 %v856, 0.112945676
  %v858 = vmul.f32 %v840, %v857
  %v859 = vadd.f32 %v858, 0.4994258
  %v860 = vmul.f32 %v840, %v859
  %v861 = vadd.f32 %v860, 1.0
  %v862 = vrcp.pop %v861
  %v863 = vmul.f32 %v861, %v862
  %v864 = vsub.f32 1.0, %v863
  %v865 = vmul.f32 %v862, %v864
  %v866 = vadd.f32 %v862, %v865
  %vm867 = vweird.f32 %v861
  %vm868 = vweird.f32 %v862
  %vm869 = vmor %vm867, %vm868
  %v870 = vsel %vm869, %v862, %v866
  %v871 = vand.u32 2147483647, %v861
  %vm872 = vcmp.eq.f32.partialorder %v871, 8.507059e+37
  %v873 = vand.u32 %v861, 2147483648
  %v874 = vor.u32 1.1754944e-38, %v873
  %v875 = vsel %vm872, %v874, %v870
  %v876 = vmul.f32 %v851, %v875
  %v877 = vmin.f32 %v876, 1.0
  %v878 = vmax.f32 %v877, -1.0
  %v879 = vadd.f32 %v838, 1.0
  %v880 = vadd.f32 %v878, 1.0
  %v881 = vmul.f32 %v795, %v879
  %v882 = vmul.f32 %v796, %v880
  %v883 = vld [vmem:[%s10] sm:$0xff]
  %v884 = vld [vmem:[%s10 + $0x8] sm:$0xff]
  %v885 = vld [vmem:[%s10 + $0x10] sm:$0xff]
  %v886 = vld [vmem:[%s10 + $0x18] sm:$0xff]
  %v887 = vld [vmem:[%s10 + $0x20] sm:$0xff]
  %v888 = vld [vmem:[%s10 + $0x28] sm:$0xff]
  %v889 = vld [vmem:[%s10 + $0x30] sm:$0xff]
  %v890 = vld [vmem:[%s10 + $0x38] sm:$0xff]
  %v891 = vld [vmem:[%s11] sm:$0x1]
  %v893 = vperm.slane %v891, 0
  %vm895 = vcmask 523264
  %v897 = vsel %vm895, %v881, 0
  %v900 = vsel %vm895, %v882, 0
  %902 = vmatpush.msra.mxu0 0.0
  %903 = vmatpush.msra.mxu0 0.0
  %904 = vmatpush.msra.mxu0 0.0
  %905 = vmatpush.msra.mxu0 0.0
  %906 = vmatpush.msra.mxu0 0.0
  %907 = vmatpush.msra.mxu0 0.0
  %908 = vmatpush.msra.mxu0 0.0
  %909 = vmatpush.msra.mxu0 0.0
  %910 = vmatpush.msra.mxu0 %v890
  %911 = vmatpush.msra.mxu0 %v889
  %912 = vmatpush.msra.mxu0 %v888
  %913 = vmatpush.msra.mxu0 %v887
  %914 = vmatpush.msra.mxu0 %v886
  %915 = vmatpush.msra.mxu0 %v885
  %916 = vmatpush.msra.mxu0 %v884
  %917 = vmatpush.msra.mxu0 %v883
  %918 = vmatmul.f32.gmra.mxu0 %v897
  %v919 = vpop.f32.mrf.mxu0
  %v920 = vadd.f32 %v893, %v919
  %921 = vmatmul.f32.gmra.mxu0 %v900
  %v922 = vpop.f32.mrf.mxu0
  %v923 = vadd.f32 %v893, %v922
  %924 = vdwg.mxu0
  %v925 = vadd.f32 %v920, %v756
  %v926 = vadd.f32 %v923, %v757
  %v927 = vld [vmem:[%s12] sm:$0x1]
  %v928 = vld [vmem:[%s13] sm:$0x1]
  %v929 = vsel %vm63, %v925, 0.0
  %930 = vadd.xlane.f32.xlu0 %v929
  %v931 = vpop.xlane.xlu0 %930
  %v932 = vsel %vm63, %v926, 0.0
  %933 = vadd.xlane.f32.xlu0 %v932
  %v934 = vpop.xlane.xlu0 %933
  %v935 = vmul.f32 %v931, %v709
  %v936 = vmul.f32 %v934, %v709
  %v937 = vsub.f32 %v925, %v935
  %v938 = vsub.f32 %v926, %v936
  %v939 = vmul.f32 %v937, %v937
  %v940 = vmul.f32 %v938, %v938
  %v941 = vsel %vm63, %v939, 0.0
  %942 = vadd.xlane.f32.xlu0 %v941
  %v943 = vpop.xlane.xlu0 %942
  %v944 = vsel %vm63, %v940, 0.0
  %945 = vadd.xlane.f32.xlu0 %v944
  %v946 = vpop.xlane.xlu0 %945
  %v947 = vmul.f32 %v943, %v709
  %v948 = vmul.f32 %v946, %v709
  %v949 = vadd.f32 %v947, 1e-12
  %v950 = vadd.f32 %v948, 1e-12
  %v951 = vrsqrt.pop %v949
  %v952 = vmul.f32 %v951, %v949
  %v953 = vmul.f32 %v952, %v951
  %v954 = vmul.f32 0.5, %v953
  %v955 = vsub.f32 1.5, %v954
  %v956 = vmul.f32 %v951, %v955
  %vm957 = vweird.f32 %v949
  %vm958 = vweird.f32 %v951
  %vm959 = vmor %vm957, %vm958
  %v960 = vsel %vm959, %v951, %v956
  %v961 = vrsqrt.pop %v950
  %v962 = vmul.f32 %v961, %v950
  %v963 = vmul.f32 %v962, %v961
  %v964 = vmul.f32 0.5, %v963
  %v965 = vsub.f32 1.5, %v964
  %v966 = vmul.f32 %v961, %v965
  %vm967 = vweird.f32 %v950
  %vm968 = vweird.f32 %v961
  %vm969 = vmor %vm967, %vm968
  %v970 = vsel %vm969, %v961, %v966
  %v971 = vmul.f32 %v937, %v960
  %v972 = vmul.f32 %v938, %v970
  %v974 = vperm.slane %v927, 0
  %v976 = vmul.f32 %v971, %v974
  %v977 = vmul.f32 %v972, %v974
  %v979 = vperm.slane %v928, 0
  %v981 = vadd.f32 %v976, %v979
  %v982 = vadd.f32 %v977, %v979
  %983 = vst.msk [vmem:[%s16] sm:$0xff] %vm63, %v981
  %984 = vst.msk [vmem:[%s16 + $0x8] sm:$0xff] %vm63, %v982
  // Predicated region
  $region66: #{unilm_forward.4} parent=0 // pred_check
    _
  $region67: #{unilm_forward.4} parent=0 // pred_check_branch
    %986 = sbr.rel (0) target = $region69
  $region68: #{unilm_forward.4} parent=0 // pred_region
    _
  $region69: #{unilm_forward.4} parent=0 // pred_fallthru
    _
  // Predicated region
  $region70: #{unilm_forward.4} parent=0 // pred_check
    _
  $region71: #{unilm_forward.4} parent=0 // pred_check_branch
    %988 = sbr.rel (0) target = $region73
  $region72: #{unilm_forward.4} parent=0 // pred_region
    _
  $region73: #{unilm_forward.4} parent=0 // pred_fallthru
    _

// kernel: unilm_forward.3
$region0: #{unilm_forward.3}
  #allocation0 [shape = 'u32[]', space=smem, size = 0x4, offset = 0x4, fixed_abs, tag = 'smem constant byte address 0x4 - core index']
  #allocation1 [shape = 'u32[72,128]{1,0:T(1,128)}', space=vmem, size = 0x9000, scoped, tag = 'internal scratch']
  %s0 = inlined_call_operand.vmem [shape: f32[16,32], index: 0, kind: input, shape index: {}, may-alias: {0,16}]
  %s1 = inlined_call_operand.vmem [shape: f32[2,1,8], index: 1, kind: input, shape index: {}]
  %s2 = inlined_call_operand.vmem [shape: f32[32,96], index: 2, kind: input, shape index: {}]
  %s3 = inlined_call_operand.vmem [shape: f32[1,96], index: 3, kind: input, shape index: {}]
  %s4 = inlined_call_operand.vmem [shape: f32[32,32], index: 4, kind: input, shape index: {}]
  %s5 = inlined_call_operand.vmem [shape: f32[1,32], index: 5, kind: input, shape index: {}]
  %s6 = inlined_call_operand.vmem [shape: f32[1,32], index: 6, kind: input, shape index: {}]
  %s7 = inlined_call_operand.vmem [shape: f32[1,32], index: 7, kind: input, shape index: {}]
  %s8 = inlined_call_operand.vmem [shape: f32[32,64], index: 8, kind: input, shape index: {}]
  %s9 = inlined_call_operand.vmem [shape: f32[1,64], index: 9, kind: input, shape index: {}]
  %s10 = inlined_call_operand.vmem [shape: f32[64,32], index: 10, kind: input, shape index: {}]
  %s11 = inlined_call_operand.vmem [shape: f32[1,32], index: 11, kind: input, shape index: {}]
  %s12 = inlined_call_operand.vmem [shape: f32[1,32], index: 12, kind: input, shape index: {}]
  %s13 = inlined_call_operand.vmem [shape: f32[1,32], index: 13, kind: input, shape index: {}]
  %s14 = inlined_call_operand.vmem [shape: f32[1,32], index: 14, kind: input, shape index: {}]
  %s15 = inlined_call_operand.vmem [shape: f32[1,32], index: 15, kind: input, shape index: {}]
  %s16 = inlined_call_operand.vmem [shape: f32[16,32], index: 16, kind: output, shape index: {}, may-alias: {0,16}]
  %s17 = sld [smem:[#allocation0]]
  $region74: #{unilm_forward.3} parent=0
    _
  %s19 = ssub.s32 1, %s17
  %s20 = scalar_select 0, %s19, %s17
  // Predicated region
  $region2: #{unilm_forward.3} parent=0 // pred_check
    _
  $region3: #{unilm_forward.3} parent=0 // pred_check_branch
    %22 = sbr.rel (0) target = $region5
  $region4: #{unilm_forward.3} parent=0 // pred_region
    _
  $region5: #{unilm_forward.3} parent=0 // pred_fallthru
    _
  // Predicated region
  $region6: #{unilm_forward.3} parent=0 // pred_check
    _
  $region7: #{unilm_forward.3} parent=0 // pred_check_branch
    %24 = sbr.rel (0) target = $region9
  $region8: #{unilm_forward.3} parent=0 // pred_region
    _
  $region9: #{unilm_forward.3} parent=0 // pred_fallthru
    _
  // Predicated region
  $region10: #{unilm_forward.3} parent=0 // pred_check
    _
  $region11: #{unilm_forward.3} parent=0 // pred_check_branch
    %26 = sbr.rel (0) target = $region13
  $region12: #{unilm_forward.3} parent=0 // pred_region
    _
  $region13: #{unilm_forward.3} parent=0 // pred_fallthru
    _
  // Predicated region
  $region14: #{unilm_forward.3} parent=0 // pred_check
    _
  $region15: #{unilm_forward.3} parent=0 // pred_check_branch
    %28 = sbr.rel (0) target = $region17
  $region16: #{unilm_forward.3} parent=0 // pred_region
    _
  $region17: #{unilm_forward.3} parent=0 // pred_fallthru
    _
  // Predicated region
  $region18: #{unilm_forward.3} parent=0 // pred_check
    _
  $region19: #{unilm_forward.3} parent=0 // pred_check_branch
    %30 = sbr.rel (0) target = $region21
  $region20: #{unilm_forward.3} parent=0 // pred_region
    _
  $region21: #{unilm_forward.3} parent=0 // pred_fallthru
    _
  // Predicated region
  $region22: #{unilm_forward.3} parent=0 // pred_check
    _
  $region23: #{unilm_forward.3} parent=0 // pred_check_branch
    %32 = sbr.rel (0) target = $region25
  $region24: #{unilm_forward.3} parent=0 // pred_region
    _
  $region25: #{unilm_forward.3} parent=0 // pred_fallthru
    _
  // Predicated region
  $region26: #{unilm_forward.3} parent=0 // pred_check
    _
  $region27: #{unilm_forward.3} parent=0 // pred_check_branch
    %34 = sbr.rel (0) target = $region29
  $region28: #{unilm_forward.3} parent=0 // pred_region
    _
  $region29: #{unilm_forward.3} parent=0 // pred_fallthru
    _
  // Predicated region
  $region30: #{unilm_forward.3} parent=0 // pred_check
    _
  $region31: #{unilm_forward.3} parent=0 // pred_check_branch
    %36 = sbr.rel (0) target = $region33
  $region32: #{unilm_forward.3} parent=0 // pred_region
    _
  $region33: #{unilm_forward.3} parent=0 // pred_fallthru
    _
  // Predicated region
  $region34: #{unilm_forward.3} parent=0 // pred_check
    _
  $region35: #{unilm_forward.3} parent=0 // pred_check_branch
    %38 = sbr.rel (0) target = $region37
  $region36: #{unilm_forward.3} parent=0 // pred_region
    _
  $region37: #{unilm_forward.3} parent=0 // pred_fallthru
    _
  // Predicated region
  $region38: #{unilm_forward.3} parent=0 // pred_check
    _
  $region39: #{unilm_forward.3} parent=0 // pred_check_branch
    %40 = sbr.rel (0) target = $region41
  $region40: #{unilm_forward.3} parent=0 // pred_region
    _
  $region41: #{unilm_forward.3} parent=0 // pred_fallthru
    _
  // Predicated region
  $region42: #{unilm_forward.3} parent=0 // pred_check
    _
  $region43: #{unilm_forward.3} parent=0 // pred_check_branch
    %42 = sbr.rel (0) target = $region45
  $region44: #{unilm_forward.3} parent=0 // pred_region
    _
  $region45: #{unilm_forward.3} parent=0 // pred_fallthru
    _
  // Predicated region
  $region46: #{unilm_forward.3} parent=0 // pred_check
    _
  $region47: #{unilm_forward.3} parent=0 // pred_check_branch
    %44 = sbr.rel (0) target = $region49
  $region48: #{unilm_forward.3} parent=0 // pred_region
    _
  $region49: #{unilm_forward.3} parent=0 // pred_fallthru
    _
  // Predicated region
  $region50: #{unilm_forward.3} parent=0 // pred_check
    _
  $region51: #{unilm_forward.3} parent=0 // pred_check_branch
    %46 = sbr.rel (0) target = $region53
  $region52: #{unilm_forward.3} parent=0 // pred_region
    _
  $region53: #{unilm_forward.3} parent=0 // pred_fallthru
    _
  // Predicated region
  $region54: #{unilm_forward.3} parent=0 // pred_check
    _
  $region55: #{unilm_forward.3} parent=0 // pred_check_branch
    %48 = sbr.rel (0) target = $region57
  $region56: #{unilm_forward.3} parent=0 // pred_region
    _
  $region57: #{unilm_forward.3} parent=0 // pred_fallthru
    _
  // Predicated region
  $region58: #{unilm_forward.3} parent=0 // pred_check
    _
  $region59: #{unilm_forward.3} parent=0 // pred_check_branch
    %50 = sbr.rel (0) target = $region61
  $region60: #{unilm_forward.3} parent=0 // pred_region
    _
  $region61: #{unilm_forward.3} parent=0 // pred_fallthru
    _
  // Predicated region
  $region62: #{unilm_forward.3} parent=0 // pred_check
    _
  $region63: #{unilm_forward.3} parent=0 // pred_check_branch
    %52 = sbr.rel (0) target = $region65
  $region64: #{unilm_forward.3} parent=0 // pred_region
    _
  $region65: #{unilm_forward.3} parent=0 // pred_fallthru
    _
  %v53 = vld [vmem:[%s0] sm:$0xff]
  %v54 = vld [vmem:[%s0 + $0x8] sm:$0xff]
  %v55 = vld [vmem:[%s14] sm:$0x1]
  %v56 = vld [vmem:[%s15] sm:$0x1]
  %vm57 = vcmask 261120
  %v58 = vsel %vm57, %v53, 0.0
  %59 = vadd.xlane.f32.xlu0 %v58
  %v60 = vpop.xlane.xlu0 %59
  %v61 = vsel %vm57, %v54, 0.0
  %62 = vadd.xlane.f32.xlu0 %v61
  %v63 = vpop.xlane.xlu0 %62
  %v64 = vrcp.pop 32.0
  %v65 = vmul.f32 32.0, %v64
  %v66 = vsub.f32 1.0, %v65
  %v67 = vmul.f32 %v64, %v66
  %v68 = vadd.f32 %v64, %v67
  %vm69 = vweird.f32 %v64
  %v70 = vsel %vm69, %v64, %v68
  %v71 = vmul.f32 %v60, %v70
  %v72 = vmul.f32 %v63, %v70
  %v73 = vsub.f32 %v53, %v71
  %v74 = vsub.f32 %v54, %v72
  %v75 = vmul.f32 %v73, %v73
  %v76 = vmul.f32 %v74, %v74
  %v77 = vsel %vm57, %v75, 0.0
  %78 = vadd.xlane.f32.xlu0 %v77
  %v79 = vpop.xlane.xlu0 %78
  %v80 = vsel %vm57, %v76, 0.0
  %81 = vadd.xlane.f32.xlu0 %v80
  %v82 = vpop.xlane.xlu0 %81
  %v83 = vmul.f32 %v79, %v70
  %v84 = vmul.f32 %v82, %v70
  %v85 = vadd.f32 %v83, 1e-12
  %v86 = vadd.f32 %v84, 1e-12
  %v87 = vrsqrt.pop %v85
  %v88 = vmul.f32 %v87, %v85
  %v89 = vmul.f32 %v88, %v87
  %v90 = vmul.f32 0.5, %v89
  %v91 = vsub.f32 1.5, %v90
  %v92 = vmul.f32 %v87, %v91
  %vm93 = vweird.f32 %v85
  %vm94 = vweird.f32 %v87
  %vm95 = vmor %vm93, %vm94
  %v96 = vsel %vm95, %v87, %v92
  %v97 = vrsqrt.pop %v86
  %v98 = vmul.f32 %v97, %v86
  %v99 = vmul.f32 %v98, %v97
  %v100 = vmul.f32 0.5, %v99
  %v101 = vsub.f32 1.5, %v100
  %v102 = vmul.f32 %v97, %v101
  %vm103 = vweird.f32 %v86
  %vm104 = vweird.f32 %v97
  %vm105 = vmor %vm103, %vm104
  %v106 = vsel %vm105, %v97, %v102
  %v107 = vmul.f32 %v73, %v96
  %v108 = vmul.f32 %v74, %v106
  %v110 = vperm.slane %v55, 0
  %v112 = vmul.f32 %v107, %v110
  %v113 = vmul.f32 %v108, %v110
  %v115 = vperm.slane %v56, 0
  %v117 = vadd.f32 %v112, %v115
  %v118 = vadd.f32 %v113, %v115
  %v119 = vld [vmem:[%s2] sm:$0xff]
  %v120 = vld [vmem:[%s2 + $0x8] sm:$0xff]
  %v121 = vld [vmem:[%s2 + $0x10] sm:$0xff]
  %v122 = vld [vmem:[%s2 + $0x18] sm:$0xff]
  %v123 = vld [vmem:[%s3] sm:$0x1]
  %v125 = vperm.slane %v123, 0
  %v128 = vsel %vm57, %v117, 0
  %v131 = vsel %vm57, %v118, 0
  %133 = vmatpush.msra.mxu0 0.0
  %134 = vmatpush.msra.mxu0 0.0
  %135 = vmatpush.msra.mxu0 0.0
  %136 = vmatpush.msra.mxu0 0.0
  %137 = vmatpush.msra.mxu0 0.0
  %138 = vmatpush.msra.mxu0 0.0
  %139 = vmatpush.msra.mxu0 0.0
  %140 = vmatpush.msra.mxu0 0.0
  %141 = vmatpush.msra.mxu0 0.0
  %142 = vmatpush.msra.mxu0 0.0
  %143 = vmatpush.msra.mxu0 0.0
  %144 = vmatpush.msra.mxu0 0.0
  %145 = vmatpush.msra.mxu0 %v122
  %146 = vmatpush.msra.mxu0 %v121
  %147 = vmatpush.msra.mxu0 %v120
  %148 = vmatpush.msra.mxu0 %v119
  %149 = vmatmul.f32.gmra.mxu0 %v128
  %v150 = vpop.f32.mrf.mxu0
  %v151 = vadd.f32 %v125, %v150
  %152 = vmatmul.f32.gmra.mxu0 %v131
  %v153 = vpop.f32.mrf.mxu0
  %v154 = vadd.f32 %v125, %v153
  %155 = vdwg.mxu0
  %v156 = vld [vmem:[%s1] sm:$0x1]
  %v157 = vld [vmem:[%s1 + $0x1] sm:$0x1]
  %v160 = vperm.slane %v156, 0
  %v161 = vperm.slane %v157, 0
  %v164 = vmul.f32 %v151, 0.35355338
  %v165 = vmul.f32 %v154, 0.35355338
  %167 = vrot.lane.b32.xlu0 %v151, 96
  %v168 = vpop.permute.xlu0 %167
  %vm169 = vcmask 64512
  %v171 = vsel %vm169, %v164, 0
  %v173 = vsel %vm169, %v168, 0
  %175 = vmatpush.xpose.msra.mxu0 0.0
  %176 = vmatpush.xpose.msra.mxu0 0.0
  %177 = vmatpush.xpose.msra.mxu0 0.0
  %178 = vmatpush.xpose.msra.mxu0 0.0
  %179 = vmatpush.xpose.msra.mxu0 0.0
  %180 = vmatpush.xpose.msra.mxu0 0.0
  %181 = vmatpush.xpose.msra.mxu0 0.0
  %182 = vmatpush.xpose.msra.mxu0 0.0
  %183 = vmatpush.xpose.msra.mxu0 0.0
  %184 = vmatpush.xpose.msra.mxu0 0.0
  %185 = vmatpush.xpose.msra.mxu0 0.0
  %186 = vmatpush.xpose.msra.mxu0 0.0
  %187 = vmatpush.xpose.msra.mxu0 0.0
  %188 = vmatpush.xpose.msra.mxu0 0.0
  %189 = vmatpush.xpose.msra.mxu0 0.0
  %190 = vmatpush.xpose.msra.mxu0 %v173
  %191 = vmatmul.f32.gmra.mxu0 %v171
  %v192 = vpop.f32.mrf.mxu0
  %v193 = vadd.f32 %v160, %v192
  %194 = vdwg.mxu0
  %196 = vrot.lane.b32.xlu0 %v154, 96
  %v197 = vpop.permute.xlu0 %196
  %v199 = vsel %vm169, %v165, 0
  %v201 = vsel %vm169, %v197, 0
  %203 = vmatpush.xpose.msra.mxu0 0.0
  %204 = vmatpush.xpose.msra.mxu0 0.0
  %205 = vmatpush.xpose.msra.mxu0 0.0
  %206 = vmatpush.xpose.msra.mxu0 0.0
  %207 = vmatpush.xpose.msra.mxu0 0.0
  %208 = vmatpush.xpose.msra.mxu0 0.0
  %209 = vmatpush.xpose.msra.mxu0 0.0
  %210 = vmatpush.xpose.msra.mxu0 0.0
  %211 = vmatpush.xpose.msra.mxu0 0.0
  %212 = vmatpush.xpose.msra.mxu0 0.0
  %213 = vmatpush.xpose.msra.mxu0 0.0
  %214 = vmatpush.xpose.msra.mxu0 0.0
  %215 = vmatpush.xpose.msra.mxu0 0.0
  %216 = vmatpush.xpose.msra.mxu0 0.0
  %217 = vmatpush.xpose.msra.mxu0 0.0
  %218 = vmatpush.xpose.msra.mxu0 %v201
  %219 = vmatmul.f32.gmra.mxu0 %v199
  %v220 = vpop.f32.mrf.mxu0
  %v221 = vadd.f32 %v161, %v220
  %222 = vdwg.mxu0
  %v223 = vsel %vm169, %v193, -inf
  %224 = vmax.xlane.f32.xlu0 %v223
  %v225 = vpop.xlane.xlu0 %224
  %v226 = vsel %vm169, %v221, -inf
  %227 = vmax.xlane.f32.xlu0 %v226
  %v228 = vpop.xlane.xlu0 %227
  %v229 = vsub.f32 %v193, %v225
  %v230 = vsub.f32 %v221, %v228
  %v231 = vmul.f32 %v229, 1.442695
  %v232 = vpow.pop %v231
  %v233 = vmul.f32 %v230, 1.442695
  %v234 = vpow.pop %v233
  %v235 = vsel %vm169, %v232, 0.0
  %236 = vadd.xlane.f32.xlu0 %v235
  %v237 = vpop.xlane.xlu0 %236
  %v238 = vsel %vm169, %v234, 0.0
  %239 = vadd.xlane.f32.xlu0 %v238
  %v240 = vpop.xlane.xlu0 %239
  %v241 = vrcp.pop %v237
  %v242 = vrcp.pop %v240
  %v243 = vmul.f32 %v232, %v241
  %v244 = vmul.f32 %v234, %v242
  %245 = vrot.lane.b32.xlu0 %v151, 64
  %v246 = vpop.permute.xlu0 %245
  %v249 = vsel %vm169, %v243, 0
  %251 = vmatpush.msra.mxu0 0.0
  %252 = vmatpush.msra.mxu0 0.0
  %253 = vmatpush.msra.mxu0 0.0
  %254 = vmatpush.msra.mxu0 0.0
  %255 = vmatpush.msra.mxu0 0.0
  %256 = vmatpush.msra.mxu0 0.0
  %257 = vmatpush.msra.mxu0 0.0
  %258 = vmatpush.msra.mxu0 0.0
  %259 = vmatpush.msra.mxu0 0.0
  %260 = vmatpush.msra.mxu0 0.0
  %261 = vmatpush.msra.mxu0 0.0
  %262 = vmatpush.msra.mxu0 0.0
  %263 = vmatpush.msra.mxu0 0.0
  %264 = vmatpush.msra.mxu0 0.0
  %265 = vmatpush.msra.mxu0 0.0
  %266 = vmatpush.msra.mxu0 %v246
  %267 = vmatmul.f32.gmra.mxu0 %v249
  %v268 = vpop.f32.mrf.mxu0
  %v269 = vadd.f32 0.0, %v268
  %270 = vdwg.mxu0
  %271 = vrot.lane.b32.xlu0 %v154, 64
  %v272 = vpop.permute.xlu0 %271
  %v275 = vsel %vm169, %v244, 0
  %277 = vmatpush.msra.mxu0 0.0
  %278 = vmatpush.msra.mxu0 0.0
  %279 = vmatpush.msra.mxu0 0.0
  %280 = vmatpush.msra.mxu0 0.0
  %281 = vmatpush.msra.mxu0 0.0
  %282 = vmatpush.msra.mxu0 0.0
  %283 = vmatpush.msra.mxu0 0.0
  %284 = vmatpush.msra.mxu0 0.0
  %285 = vmatpush.msra.mxu0 0.0
  %286 = vmatpush.msra.mxu0 0.0
  %287 = vmatpush.msra.mxu0 0.0
  %288 = vmatpush.msra.mxu0 0.0
  %289 = vmatpush.msra.mxu0 0.0
  %290 = vmatpush.msra.mxu0 0.0
  %291 = vmatpush.msra.mxu0 0.0
  %292 = vmatpush.msra.mxu0 %v272
  %293 = vmatmul.f32.gmra.mxu0 %v275
  %v294 = vpop.f32.mrf.mxu0
  %v295 = vadd.f32 0.0, %v294
  %296 = vdwg.mxu0
  %297 = vrot.lane.b32.xlu0 %v164, 120
  %v298 = vpop.permute.xlu0 %297
  %299 = vrot.lane.b32.xlu0 %v151, 88
  %v300 = vpop.permute.xlu0 %299
  %v301 = vsel %vm169, %v298, 0
  %v303 = vsel %vm169, %v300, 0
  %305 = vmatpush.xpose.msra.mxu0 0.0
  %306 = vmatpush.xpose.msra.mxu0 0.0
  %307 = vmatpush.xpose.msra.mxu0 0.0
  %308 = vmatpush.xpose.msra.mxu0 0.0
  %309 = vmatpush.xpose.msra.mxu0 0.0
  %310 = vmatpush.xpose.msra.mxu0 0.0
  %311 = vmatpush.xpose.msra.mxu0 0.0
  %312 = vmatpush.xpose.msra.mxu0 0.0
  %313 = vmatpush.xpose.msra.mxu0 0.0
  %314 = vmatpush.xpose.msra.mxu0 0.0
  %315 = vmatpush.xpose.msra.mxu0 0.0
  %316 = vmatpush.xpose.msra.mxu0 0.0
  %317 = vmatpush.xpose.msra.mxu0 0.0
  %318 = vmatpush.xpose.msra.mxu0 0.0
  %319 = vmatpush.xpose.msra.mxu0 0.0
  %320 = vmatpush.xpose.msra.mxu0 %v303
  %321 = vmatmul.f32.gmra.mxu0 %v301
  %v322 = vpop.f32.mrf.mxu0
  %v323 = vadd.f32 %v160, %v322
  %324 = vdwg.mxu0
  %325 = vrot.lane.b32.xlu0 %v165, 120
  %v326 = vpop.permute.xlu0 %325
  %327 = vrot.lane.b32.xlu0 %v154, 88
  %v328 = vpop.permute.xlu0 %327
  %v329 = vsel %vm169, %v326, 0
  %v331 = vsel %vm169, %v328, 0
  %333 = vmatpush.xpose.msra.mxu0 0.0
  %334 = vmatpush.xpose.msra.mxu0 0.0
  %335 = vmatpush.xpose.msra.mxu0 0.0
  %336 = vmatpush.xpose.msra.mxu0 0.0
  %337 = vmatpush.xpose.msra.mxu0 0.0
  %338 = vmatpush.xpose.msra.mxu0 0.0
  %339 = vmatpush.xpose.msra.mxu0 0.0
  %340 = vmatpush.xpose.msra.mxu0 0.0
  %341 = vmatpush.xpose.msra.mxu0 0.0
  %342 = vmatpush.xpose.msra.mxu0 0.0
  %343 = vmatpush.xpose.msra.mxu0 0.0
  %344 = vmatpush.xpose.msra.mxu0 0.0
  %345 = vmatpush.xpose.msra.mxu0 0.0
  %346 = vmatpush.xpose.msra.mxu0 0.0
  %347 = vmatpush.xpose.msra.mxu0 0.0
  %348 = vmatpush.xpose.msra.mxu0 %v331
  %349 = vmatmul.f32.gmra.mxu0 %v329
  %v350 = vpop.f32.mrf.mxu0
  %v351 = vadd.f32 %v161, %v350
  %352 = vdwg.mxu0
  %v353 = vsel %vm169, %v323, -inf
  %354 = vmax.xlane.f32.xlu0 %v353
  %v355 = vpop.xlane.xlu0 %354
  %v356 = vsel %vm169, %v351, -inf
  %357 = vmax.xlane.f32.xlu0 %v356
  %v358 = vpop.xlane.xlu0 %357
  %v359 = vsub.f32 %v323, %v355
  %v360 = vsub.f32 %v351, %v358
  %v361 = vmul.f32 %v359, 1.442695
  %v362 = vpow.pop %v361
  %v363 = vmul.f32 %v360, 1.442695
  %v364 = vpow.pop %v363
  %v365 = vsel %vm169, %v362, 0.0
  %366 = vadd.xlane.f32.xlu0 %v365
  %v367 = vpop.xlane.xlu0 %366
  %v368 = vsel %vm169, %v364, 0.0
  %369 = vadd.xlane.f32.xlu0 %v368
  %v370 = vpop.xlane.xlu0 %369
  %v371 = vrcp.pop %v367
  %v372 = vrcp.pop %v370
  %v373 = vmul.f32 %v362, %v371
  %v374 = vmul.f32 %v364, %v372
  %375 = vrot.lane.b32.xlu0 %v151, 56
  %v376 = vpop.permute.xlu0 %375
  %v379 = vsel %vm169, %v373, 0
  %381 = vmatpush.msra.mxu0 0.0
  %382 = vmatpush.msra.mxu0 0.0
  %383 = vmatpush.msra.mxu0 0.0
  %384 = vmatpush.msra.mxu0 0.0
  %385 = vmatpush.msra.mxu0 0.0
  %386 = vmatpush.msra.mxu0 0.0
  %387 = vmatpush.msra.mxu0 0.0
  %388 = vmatpush.msra.mxu0 0.0
  %389 = vmatpush.msra.mxu0 0.0
  %390 = vmatpush.msra.mxu0 0.0
  %391 = vmatpush.msra.mxu0 0.0
  %392 = vmatpush.msra.mxu0 0.0
  %393 = vmatpush.msra.mxu0 0.0
  %394 = vmatpush.msra.mxu0 0.0
  %395 = vmatpush.msra.mxu0 0.0
  %396 = vmatpush.msra.mxu0 %v376
  %397 = vmatmul.f32.gmra.mxu0 %v379
  %v398 = vpop.f32.mrf.mxu0
  %v399 = vadd.f32 0.0, %v398
  %400 = vdwg.mxu0
  %401 = vrot.lane.b32.xlu0 %v154, 56
  %v402 = vpop.permute.xlu0 %401
  %v405 = vsel %vm169, %v374, 0
  %407 = vmatpush.msra.mxu0 0.0
  %408 = vmatpush.msra.mxu0 0.0
  %409 = vmatpush.msra.mxu0 0.0
  %410 = vmatpush.msra.mxu0 0.0
  %411 = vmatpush.msra.mxu0 0.0
  %412 = vmatpush.msra.mxu0 0.0
  %413 = vmatpush.msra.mxu0 0.0
  %414 = vmatpush.msra.mxu0 0.0
  %415 = vmatpush.msra.mxu0 0.0
  %416 = vmatpush.msra.mxu0 0.0
  %417 = vmatpush.msra.mxu0 0.0
  %418 = vmatpush.msra.mxu0 0.0
  %419 = vmatpush.msra.mxu0 0.0
  %420 = vmatpush.msra.mxu0 0.0
  %421 = vmatpush.msra.mxu0 0.0
  %422 = vmatpush.msra.mxu0 %v402
  %423 = vmatmul.f32.gmra.mxu0 %v405
  %v424 = vpop.f32.mrf.mxu0
  %v425 = vadd.f32 0.0, %v424
  %426 = vdwg.mxu0
  %427 = vrot.lane.b32.xlu0 %v164, 112
  %v428 = vpop.permute.xlu0 %427
  %429 = vrot.lane.b32.xlu0 %v151, 80
  %v430 = vpop.permute.xlu0 %429
  %v431 = vsel %vm169, %v428, 0
  %v433 = vsel %vm169, %v430, 0
  %435 = vmatpush.xpose.msra.mxu0 0.0
  %436 = vmatpush.xpose.msra.mxu0 0.0
  %437 = vmatpush.xpose.msra.mxu0 0.0
  %438 = vmatpush.xpose.msra.mxu0 0.0
  %439 = vmatpush.xpose.msra.mxu0 0.0
  %440 = vmatpush.xpose.msra.mxu0 0.0
  %441 = vmatpush.xpose.msra.mxu0 0.0
  %442 = vmatpush.xpose.msra.mxu0 0.0
  %443 = vmatpush.xpose.msra.mxu0 0.0
  %444 = vmatpush.xpose.msra.mxu0 0.0
  %445 = vmatpush.xpose.msra.mxu0 0.0
  %446 = vmatpush.xpose.msra.mxu0 0.0
  %447 = vmatpush.xpose.msra.mxu0 0.0
  %448 = vmatpush.xpose.msra.mxu0 0.0
  %449 = vmatpush.xpose.msra.mxu0 0.0
  %450 = vmatpush.xpose.msra.mxu0 %v433
  %451 = vmatmul.f32.gmra.mxu0 %v431
  %v452 = vpop.f32.mrf.mxu0
  %v453 = vadd.f32 %v160, %v452
  %454 = vdwg.mxu0
  %455 = vrot.lane.b32.xlu0 %v165, 112
  %v456 = vpop.permute.xlu0 %455
  %457 = vrot.lane.b32.xlu0 %v154, 80
  %v458 = vpop.permute.xlu0 %457
  %v459 = vsel %vm169, %v456, 0
  %v461 = vsel %vm169, %v458, 0
  %463 = vmatpush.xpose.msra.mxu0 0.0
  %464 = vmatpush.xpose.msra.mxu0 0.0
  %465 = vmatpush.xpose.msra.mxu0 0.0
  %466 = vmatpush.xpose.msra.mxu0 0.0
  %467 = vmatpush.xpose.msra.mxu0 0.0
  %468 = vmatpush.xpose.msra.mxu0 0.0
  %469 = vmatpush.xpose.msra.mxu0 0.0
  %470 = vmatpush.xpose.msra.mxu0 0.0
  %471 = vmatpush.xpose.msra.mxu0 0.0
  %472 = vmatpush.xpose.msra.mxu0 0.0
  %473 = vmatpush.xpose.msra.mxu0 0.0
  %474 = vmatpush.xpose.msra.mxu0 0.0
  %475 = vmatpush.xpose.msra.mxu0 0.0
  %476 = vmatpush.xpose.msra.mxu0 0.0
  %477 = vmatpush.xpose.msra.mxu0 0.0
  %478 = vmatpush.xpose.msra.mxu0 %v461
  %479 = vmatmul.f32.gmra.mxu0 %v459
  %v480 = vpop.f32.mrf.mxu0
  %v481 = vadd.f32 %v161, %v480
  %482 = vdwg.mxu0
  %v483 = vsel %vm169, %v453, -inf
  %484 = vmax.xlane.f32.xlu0 %v483
  %v485 = vpop.xlane.xlu0 %484
  %v486 = vsel %vm169, %v481, -inf
  %487 = vmax.xlane.f32.xlu0 %v486
  %v488 = vpop.xlane.xlu0 %487
  %v489 = vsub.f32 %v453, %v485
  %v490 = vsub.f32 %v481, %v488
  %v491 = vmul.f32 %v489, 1.442695
  %v492 = vpow.pop %v491
  %v493 = vmul.f32 %v490, 1.442695
  %v494 = vpow.pop %v493
  %v495 = vsel %vm169, %v492, 0.0
  %496 = vadd.xlane.f32.xlu0 %v495
  %v497 = vpop.xlane.xlu0 %496
  %v498 = vsel %vm169, %v494, 0.0
  %499 = vadd.xlane.f32.xlu0 %v498
  %v500 = vpop.xlane.xlu0 %499
  %v501 = vrcp.pop %v497
  %v502 = vrcp.pop %v500
  %v503 = vmul.f32 %v492, %v501
  %v504 = vmul.f32 %v494, %v502
  %505 = vrot.lane.b32.xlu0 %v151, 48
  %v506 = vpop.permute.xlu0 %505
  %v509 = vsel %vm169, %v503, 0
  %511 = vmatpush.msra.mxu0 0.0
  %512 = vmatpush.msra.mxu0 0.0
  %513 = vmatpush.msra.mxu0 0.0
  %514 = vmatpush.msra.mxu0 0.0
  %515 = vmatpush.msra.mxu0 0.0
  %516 = vmatpush.msra.mxu0 0.0
  %517 = vmatpush.msra.mxu0 0.0
  %518 = vmatpush.msra.mxu0 0.0
  %519 = vmatpush.msra.mxu0 0.0
  %520 = vmatpush.msra.mxu0 0.0
  %521 = vmatpush.msra.mxu0 0.0
  %522 = vmatpush.msra.mxu0 0.0
  %523 = vmatpush.msra.mxu0 0.0
  %524 = vmatpush.msra.mxu0 0.0
  %525 = vmatpush.msra.mxu0 0.0
  %526 = vmatpush.msra.mxu0 %v506
  %527 = vmatmul.f32.gmra.mxu0 %v509
  %v528 = vpop.f32.mrf.mxu0
  %v529 = vadd.f32 0.0, %v528
  %530 = vdwg.mxu0
  %531 = vrot.lane.b32.xlu0 %v154, 48
  %v532 = vpop.permute.xlu0 %531
  %v535 = vsel %vm169, %v504, 0
  %537 = vmatpush.msra.mxu0 0.0
  %538 = vmatpush.msra.mxu0 0.0
  %539 = vmatpush.msra.mxu0 0.0
  %540 = vmatpush.msra.mxu0 0.0
  %541 = vmatpush.msra.mxu0 0.0
  %542 = vmatpush.msra.mxu0 0.0
  %543 = vmatpush.msra.mxu0 0.0
  %544 = vmatpush.msra.mxu0 0.0
  %545 = vmatpush.msra.mxu0 0.0
  %546 = vmatpush.msra.mxu0 0.0
  %547 = vmatpush.msra.mxu0 0.0
  %548 = vmatpush.msra.mxu0 0.0
  %549 = vmatpush.msra.mxu0 0.0
  %550 = vmatpush.msra.mxu0 0.0
  %551 = vmatpush.msra.mxu0 0.0
  %552 = vmatpush.msra.mxu0 %v532
  %553 = vmatmul.f32.gmra.mxu0 %v535
  %v554 = vpop.f32.mrf.mxu0
  %v555 = vadd.f32 0.0, %v554
  %556 = vdwg.mxu0
  %557 = vrot.lane.b32.xlu0 %v164, 104
  %v558 = vpop.permute.xlu0 %557
  %559 = vrot.lane.b32.xlu0 %v151, 72
  %v560 = vpop.permute.xlu0 %559
  %v561 = vsel %vm169, %v558, 0
  %v563 = vsel %vm169, %v560, 0
  %565 = vmatpush.xpose.msra.mxu0 0.0
  %566 = vmatpush.xpose.msra.mxu0 0.0
  %567 = vmatpush.xpose.msra.mxu0 0.0
  %568 = vmatpush.xpose.msra.mxu0 0.0
  %569 = vmatpush.xpose.msra.mxu0 0.0
  %570 = vmatpush.xpose.msra.mxu0 0.0
  %571 = vmatpush.xpose.msra.mxu0 0.0
  %572 = vmatpush.xpose.msra.mxu0 0.0
  %573 = vmatpush.xpose.msra.mxu0 0.0
  %574 = vmatpush.xpose.msra.mxu0 0.0
  %575 = vmatpush.xpose.msra.mxu0 0.0
  %576 = vmatpush.xpose.msra.mxu0 0.0
  %577 = vmatpush.xpose.msra.mxu0 0.0
  %578 = vmatpush.xpose.msra.mxu0 0.0
  %579 = vmatpush.xpose.msra.mxu0 0.0
  %580 = vmatpush.xpose.msra.mxu0 %v563
  %581 = vmatmul.f32.gmra.mxu0 %v561
  %v582 = vpop.f32.mrf.mxu0
  %v583 = vadd.f32 %v160, %v582
  %584 = vdwg.mxu0
  %585 = vrot.lane.b32.xlu0 %v165, 104
  %v586 = vpop.permute.xlu0 %585
  %587 = vrot.lane.b32.xlu0 %v154, 72
  %v588 = vpop.permute.xlu0 %587
  %v589 = vsel %vm169, %v586, 0
  %v591 = vsel %vm169, %v588, 0
  %593 = vmatpush.xpose.msra.mxu0 0.0
  %594 = vmatpush.xpose.msra.mxu0 0.0
  %595 = vmatpush.xpose.msra.mxu0 0.0
  %596 = vmatpush.xpose.msra.mxu0 0.0
  %597 = vmatpush.xpose.msra.mxu0 0.0
  %598 = vmatpush.xpose.msra.mxu0 0.0
  %599 = vmatpush.xpose.msra.mxu0 0.0
  %600 = vmatpush.xpose.msra.mxu0 0.0
  %601 = vmatpush.xpose.msra.mxu0 0.0
  %602 = vmatpush.xpose.msra.mxu0 0.0
  %603 = vmatpush.xpose.msra.mxu0 0.0
  %604 = vmatpush.xpose.msra.mxu0 0.0
  %605 = vmatpush.xpose.msra.mxu0 0.0
  %606 = vmatpush.xpose.msra.mxu0 0.0
  %607 = vmatpush.xpose.msra.mxu0 0.0
  %608 = vmatpush.xpose.msra.mxu0 %v591
  %609 = vmatmul.f32.gmra.mxu0 %v589
  %v610 = vpop.f32.mrf.mxu0
  %v611 = vadd.f32 %v161, %v610
  %612 = vdwg.mxu0
  %v613 = vsel %vm169, %v583, -inf
  %614 = vmax.xlane.f32.xlu0 %v613
  %v615 = vpop.xlane.xlu0 %614
  %v616 = vsel %vm169, %v611, -inf
  %617 = vmax.xlane.f32.xlu0 %v616
  %v618 = vpop.xlane.xlu0 %617
  %v619 = vsub.f32 %v583, %v615
  %v620 = vsub.f32 %v611, %v618
  %v621 = vmul.f32 %v619, 1.442695
  %v622 = vpow.pop %v621
  %v623 = vmul.f32 %v620, 1.442695
  %v624 = vpow.pop %v623
  %v625 = vsel %vm169, %v622, 0.0
  %626 = vadd.xlane.f32.xlu0 %v625
  %v627 = vpop.xlane.xlu0 %626
  %v628 = vsel %vm169, %v624, 0.0
  %629 = vadd.xlane.f32.xlu0 %v628
  %v630 = vpop.xlane.xlu0 %629
  %v631 = vrcp.pop %v627
  %v632 = vrcp.pop %v630
  %v633 = vmul.f32 %v622, %v631
  %v634 = vmul.f32 %v624, %v632
  %635 = vrot.lane.b32.xlu0 %v151, 40
  %v636 = vpop.permute.xlu0 %635
  %v639 = vsel %vm169, %v633, 0
  %641 = vmatpush.msra.mxu0 0.0
  %642 = vmatpush.msra.mxu0 0.0
  %643 = vmatpush.msra.mxu0 0.0
  %644 = vmatpush.msra.mxu0 0.0
  %645 = vmatpush.msra.mxu0 0.0
  %646 = vmatpush.msra.mxu0 0.0
  %647 = vmatpush.msra.mxu0 0.0
  %648 = vmatpush.msra.mxu0 0.0
  %649 = vmatpush.msra.mxu0 0.0
  %650 = vmatpush.msra.mxu0 0.0
  %651 = vmatpush.msra.mxu0 0.0
  %652 = vmatpush.msra.mxu0 0.0
  %653 = vmatpush.msra.mxu0 0.0
  %654 = vmatpush.msra.mxu0 0.0
  %655 = vmatpush.msra.mxu0 0.0
  %656 = vmatpush.msra.mxu0 %v636
  %657 = vmatmul.f32.gmra.mxu0 %v639
  %v658 = vpop.f32.mrf.mxu0
  %v659 = vadd.f32 0.0, %v658
  %660 = vdwg.mxu0
  %661 = vrot.lane.b32.xlu0 %v154, 40
  %v662 = vpop.permute.xlu0 %661
  %v665 = vsel %vm169, %v634, 0
  %667 = vmatpush.msra.mxu0 0.0
  %668 = vmatpush.msra.mxu0 0.0
  %669 = vmatpush.msra.mxu0 0.0
  %670 = vmatpush.msra.mxu0 0.0
  %671 = vmatpush.msra.mxu0 0.0
  %672 = vmatpush.msra.mxu0 0.0
  %673 = vmatpush.msra.mxu0 0.0
  %674 = vmatpush.msra.mxu0 0.0
  %675 = vmatpush.msra.mxu0 0.0
  %676 = vmatpush.msra.mxu0 0.0
  %677 = vmatpush.msra.mxu0 0.0
  %678 = vmatpush.msra.mxu0 0.0
  %679 = vmatpush.msra.mxu0 0.0
  %680 = vmatpush.msra.mxu0 0.0
  %681 = vmatpush.msra.mxu0 0.0
  %682 = vmatpush.msra.mxu0 %v662
  %683 = vmatmul.f32.gmra.mxu0 %v665
  %v684 = vpop.f32.mrf.mxu0
  %v685 = vadd.f32 0.0, %v684
  %686 = vdwg.mxu0
  %689 = vrot.lane.b32.xlu0 %v399, 8
  %v690 = vpop.permute.xlu0 %689
  %691 = vrot.lane.b32.xlu0 %v425, 8
  %v692 = vpop.permute.xlu0 %691
  %697 = vrot.lane.b32.xlu0 %v529, 16
  %v698 = vpop.permute.xlu0 %697
  %699 = vrot.lane.b32.xlu0 %v555, 16
  %v700 = vpop.permute.xlu0 %699
  %705 = vrot.lane.b32.xlu0 %v659, 24
  %v706 = vpop.permute.xlu0 %705
  %707 = vrot.lane.b32.xlu0 %v685, 24
  %v708 = vpop.permute.xlu0 %707
  %v711 = vsel %vm169, %v269, %v690
  %v712 = vsel %vm169, %v295, %v692
  %vm713 = vcmask 130048
  %v714 = vsel %vm713, %v711, %v698
  %v715 = vsel %vm713, %v712, %v700
  %vm716 = vcmask 195584
  %v717 = vsel %vm716, %v714, %v706
  %v718 = vsel %vm716, %v715, %v708
  %v719 = vld [vmem:[%s4] sm:$0xff]
  %v720 = vld [vmem:[%s4 + $0x8] sm:$0xff]
  %v721 = vld [vmem:[%s4 + $0x10] sm:$0xff]
  %v722 = vld [vmem:[%s4 + $0x18] sm:$0xff]
  %v723 = vld [vmem:[%s5] sm:$0x1]
  %v725 = vperm.slane %v723, 0
  %v728 = vsel %vm57, %v717, 0
  %v731 = vsel %vm57, %v718, 0
  %733 = vmatpush.msra.mxu0 0.0
  %734 = vmatpush.msra.mxu0 0.0
  %735 = vmatpush.msra.mxu0 0.0
  %736 = vmatpush.msra.mxu0 0.0
  %737 = vmatpush.msra.mxu0 0.0
  %738 = vmatpush.msra.mxu0 0.0
  %739 = vmatpush.msra.mxu0 0.0
  %740 = vmatpush.msra.mxu0 0.0
  %741 = vmatpush.msra.mxu0 0.0
  %742 = vmatpush.msra.mxu0 0.0
  %743 = vmatpush.msra.mxu0 0.0
  %744 = vmatpush.msra.mxu0 0.0
  %745 = vmatpush.msra.mxu0 %v722
  %746 = vmatpush.msra.mxu0 %v721
  %747 = vmatpush.msra.mxu0 %v720
  %748 = vmatpush.msra.mxu0 %v719
  %749 = vmatmul.f32.gmra.mxu0 %v728
  %v750 = vpop.f32.mrf.mxu0
  %v751 = vadd.f32 %v725, %v750
  %752 = vmatmul.f32.gmra.mxu0 %v731
  %v753 = vpop.f32.mrf.mxu0
  %v754 = vadd.f32 %v725, %v753
  %755 = vdwg.mxu0
  %v756 = vadd.f32 %v751, %v117
  %v757 = vadd.f32 %v754, %v118
  %v758 = vld [vmem:[%s6] sm:$0x1]
  %v759 = vld [vmem:[%s7] sm:$0x1]
  %v760 = vsel %vm57, %v756, 0.0
  %761 = vadd.xlane.f32.xlu0 %v760
  %v762 = vpop.xlane.xlu0 %761
  %v763 = vsel %vm57, %v757, 0.0
  %764 = vadd.xlane.f32.xlu0 %v763
  %v765 = vpop.xlane.xlu0 %764
  %v766 = vmul.f32 %v762, %v70
  %v767 = vmul.f32 %v765, %v70
  %v768 = vsub.f32 %v756, %v766
  %v769 = vsub.f32 %v757, %v767
  %v770 = vmul.f32 %v768, %v768
  %v771 = vmul.f32 %v769, %v769
  %v772 = vsel %vm57, %v770, 0.0
  %773 = vadd.xlane.f32.xlu0 %v772
  %v774 = vpop.xlane.xlu0 %773
  %v775 = vsel %vm57, %v771, 0.0
  %776 = vadd.xlane.f32.xlu0 %v775
  %v777 = vpop.xlane.xlu0 %776
  %v778 = vmul.f32 %v774, %v70
  %v779 = vmul.f32 %v777, %v70
  %v780 = vadd.f32 %v778, 1e-12
  %v781 = vadd.f32 %v779, 1e-12
  %v782 = vrsqrt.pop %v780
  %v783 = vmul.f32 %v782, %v780
  %v784 = vmul.f32 %v783, %v782
  %v785 = vmul.f32 0.5, %v784
  %v786 = vsub.f32 1.5, %v785
  %v787 = vmul.f32 %v782, %v786
  %vm788 = vweird.f32 %v780
  %vm789 = vweird.f32 %v782
  %vm790 = vmor %vm788, %vm789
  %v791 = vsel %vm790, %v782, %v787
  %v792 = vrsqrt.pop %v781
  %v793 = vmul.f32 %v792, %v781
  %v794 = vmul.f32 %v793, %v792
  %v795 = vmul.f32 0.5, %v794
  %v796 = vsub.f32 1.5, %v795
  %v797 = vmul.f32 %v792, %v796
  %vm798 = vweird.f32 %v781
  %vm799 = vweird.f32 %v792
  %vm800 = vmor %vm798, %vm799
  %v801 = vsel %vm800, %v792, %v797
  %v802 = vmul.f32 %v768, %v791
  %v803 = vmul.f32 %v769, %v801
  %v805 = vperm.slane %v758, 0
  %v807 = vmul.f32 %v802, %v805
  %v808 = vmul.f32 %v803, %v805
  %v810 = vperm.slane %v759, 0
  %v812 = vadd.f32 %v807, %v810
  %v813 = vadd.f32 %v808, %v810
  %v814 = vld [vmem:[%s8] sm:$0xff]
  %v815 = vld [vmem:[%s8 + $0x8] sm:$0xff]
  %v816 = vld [vmem:[%s8 + $0x10] sm:$0xff]
  %v817 = vld [vmem:[%s8 + $0x18] sm:$0xff]
  %v818 = vld [vmem:[%s9] sm:$0x1]
  %v820 = vperm.slane %v818, 0
  %v823 = vsel %vm57, %v812, 0
  %v826 = vsel %vm57, %v813, 0
  %828 = vmatpush.msra.mxu0 0.0
  %829 = vmatpush.msra.mxu0 0.0
  %830 = vmatpush.msra.mxu0 0.0
  %831 = vmatpush.msra.mxu0 0.0
  %832 = vmatpush.msra.mxu0 0.0
  %833 = vmatpush.msra.mxu0 0.0
  %834 = vmatpush.msra.mxu0 0.0
  %835 = vmatpush.msra.mxu0 0.0
  %836 = vmatpush.msra.mxu0 0.0
  %837 = vmatpush.msra.mxu0 0.0
  %838 = vmatpush.msra.mxu0 0.0
  %839 = vmatpush.msra.mxu0 0.0
  %840 = vmatpush.msra.mxu0 %v817
  %841 = vmatpush.msra.mxu0 %v816
  %842 = vmatpush.msra.mxu0 %v815
  %843 = vmatpush.msra.mxu0 %v814
  %844 = vmatmul.f32.gmra.mxu0 %v823
  %v845 = vpop.f32.mrf.mxu0
  %v846 = vadd.f32 %v820, %v845
  %847 = vmatmul.f32.gmra.mxu0 %v826
  %v848 = vpop.f32.mrf.mxu0
  %v849 = vadd.f32 %v820, %v848
  %850 = vdwg.mxu0
  %v851 = vmul.f32 %v846, 0.5
  %v852 = vmul.f32 %v849, 0.5
  %v853 = vmul.f32 %v846, 0.70710677
  %v854 = vmul.f32 %v849, 0.70710677
  %v855 = vmul.f32 %v853, %v853
  %v856 = vmin.f32 16.0, %v855
  %v857 = vmul.f32 %v856, 2.1237322e-06
  %v858 = vadd.f32 %v857, 0.00028619796
  %v859 = vmul.f32 %v856, %v858
  %v860 = vadd.f32 %v859, 0.0036580483
  %v861 = vmul.f32 %v856, %v860
  %v862 = vadd.f32 %v861, 0.05243302
  %v863 = vmul.f32 %v856, %v862
  %v864 = vadd.f32 %v863, 0.18741608
  %v865 = vmul.f32 %v856, %v864
  %v866 = vadd.f32 %v865, 1.1283791
  %v867 = vmul.f32 %v853, %v866
  %v868 = vmul.f32 %v856, 3.8918573e-05
  %v869 = vadd.f32 %v868, 0.001143296
  %v870 = vmul.f32 %v856, %v869
  %v871 = vadd.f32 %v870, 0.014752088
  %v872 = vmul.f32 %v856, %v871
  %v873 = vadd.f32 %v872, 0.112945676
  %v874 = vmul.f32 %v856, %v873
  %v875 = vadd.f32 %v874, 0.4994258
  %v876 = vmul.f32 %v856, %v875
  %v877 = vadd.f32 %v876, 1.0
  %v878 = vrcp.pop %v877
  %v879 = vmul.f32 %v877, %v878
  %v880 = vsub.f32 1.0, %v879
  %v881 = vmul.f32 %v878, %v880
  %v882 = vadd.f32 %v878, %v881
  %vm883 = vweird.f32 %v877
  %vm884 = vweird.f32 %v878
  %vm885 = vmor %vm883, %vm884
  %v886 = vsel %vm885, %v878, %v882
  %v887 = vand.u32 2147483647, %v877
  %vm888 = vcmp.eq.f32.partialorder %v887, 8.507059e+37
  %v889 = vand.u32 %v877, 2147483648
  %v890 = vor.u32 1.1754944e-38, %v889
  %v891 = vsel %vm888, %v890, %v886
  %v892 = vmul.f32 %v867, %v891
  %v893 = vmin.f32 %v892, 1.0
  %v894 = vmax.f32 %v893, -1.0
  %v895 = vmul.f32 %v854, %v854
  %v896 = vmin.f32 16.0, %v895
  %v897 = vmul.f32 %v896, 2.1237322e-06
  %v898 = vadd.f32 %v897, 0.00028619796
  %v899 = vmul.f32 %v896, %v898
  %v900 = vadd.f32 %v899, 0.0036580483
  %v901 = vmul.f32 %v896, %v900
  %v902 = vadd.f32 %v901, 0.05243302
  %v903 = vmul.f32 %v896, %v902
  %v904 = vadd.f32 %v903, 0.18741608
  %v905 = vmul.f32 %v896, %v904
  %v906 = vadd.f32 %v905, 1.1283791
  %v907 = vmul.f32 %v854, %v906
  %v908 = vmul.f32 %v896, 3.8918573e-05
  %v909 = vadd.f32 %v908, 0.001143296
  %v910 = vmul.f32 %v896, %v909
  %v911 = vadd.f32 %v910, 0.014752088
  %v912 = vmul.f32 %v896, %v911
  %v913 = vadd.f32 %v912, 0.112945676
  %v914 = vmul.f32 %v896, %v913
  %v915 = vadd.f32 %v914, 0.4994258
  %v916 = vmul.f32 %v896, %v915
  %v917 = vadd.f32 %v916, 1.0
  %v918 = vrcp.pop %v917
  %v919 = vmul.f32 %v917, %v918
  %v920 = vsub.f32 1.0, %v919
  %v921 = vmul.f32 %v918, %v920
  %v922 = vadd.f32 %v918, %v921
  %vm923 = vweird.f32 %v917
  %vm924 = vweird.f32 %v918
  %vm925 = vmor %vm923, %vm924
  %v926 = vsel %vm925, %v918, %v922
  %v927 = vand.u32 2147483647, %v917
  %vm928 = vcmp.eq.f32.partialorder %v927, 8.507059e+37
  %v929 = vand.u32 %v917, 2147483648
  %v930 = vor.u32 1.1754944e-38, %v929
  %v931 = vsel %vm928, %v930, %v926
  %v932 = vmul.f32 %v907, %v931
  %v933 = vmin.f32 %v932, 1.0
  %v934 = vmax.f32 %v933, -1.0
  %v935 = vadd.f32 %v894, 1.0
  %v936 = vadd.f32 %v934, 1.0
  %v937 = vmul.f32 %v851, %v935
  %v938 = vmul.f32 %v852, %v936
  %v939 = vld [vmem:[%s10] sm:$0xff]
  %v940 = vld [vmem:[%s10 + $0x8] sm:$0xff]
  %v941 = vld [vmem:[%s10 + $0x10] sm:$0xff]
  %v942 = vld [vmem:[%s10 + $0x18] sm:$0xff]
  %v943 = vld [vmem:[%s10 + $0x20] sm:$0xff]
  %v944 = vld [vmem:[%s10 + $0x28] sm:$0xff]
  %v945 = vld [vmem:[%s10 + $0x30] sm:$0xff]
  %v946 = vld [vmem:[%s10 + $0x38] sm:$0xff]
  %v947 = vld [vmem:[%s11] sm:$0x1]
  %v949 = vperm.slane %v947, 0
  %vm951 = vcmask 523264
  %v953 = vsel %vm951, %v937, 0
  %v956 = vsel %vm951, %v938, 0
  %958 = vmatpush.msra.mxu0 0.0
  %959 = vmatpush.msra.mxu0 0.0
  %960 = vmatpush.msra.mxu0 0.0
  %961 = vmatpush.msra.mxu0 0.0
  %962 = vmatpush.msra.mxu0 0.0
  %963 = vmatpush.msra.mxu0 0.0
  %964 = vmatpush.msra.mxu0 0.0
  %965 = vmatpush.msra.mxu0 0.0
  %966 = vmatpush.msra.mxu0 %v946
  %967 = vmatpush.msra.mxu0 %v945
  %968 = vmatpush.msra.mxu0 %v944
  %969 = vmatpush.msra.mxu0 %v943
  %970 = vmatpush.msra.mxu0 %v942
  %971 = vmatpush.msra.mxu0 %v941
  %972 = vmatpush.msra.mxu0 %v940
  %973 = vmatpush.msra.mxu0 %v939
  %974 = vmatmul.f32.gmra.mxu0 %v953
  %v975 = vpop.f32.mrf.mxu0
  %v976 = vadd.f32 %v949, %v975
  %977 = vmatmul.f32.gmra.mxu0 %v956
  %v978 = vpop.f32.mrf.mxu0
  %v979 = vadd.f32 %v949, %v978
  %980 = vdwg.mxu0
  %v981 = vadd.f32 %v976, %v812
  %v982 = vadd.f32 %v979, %v813
  %v983 = vld [vmem:[%s12] sm:$0x1]
  %v984 = vld [vmem:[%s13] sm:$0x1]
  %v985 = vsel %vm57, %v981, 0.0
  %986 = vadd.xlane.f32.xlu0 %v985
  %v987 = vpop.xlane.xlu0 %986
  %v988 = vsel %vm57, %v982, 0.0
  %989 = vadd.xlane.f32.xlu0 %v988
  %v990 = vpop.xlane.xlu0 %989
  %v991 = vmul.f32 %v987, %v70
  %v992 = vmul.f32 %v990, %v70
  %v993 = vsub.f32 %v981, %v991
  %v994 = vsub.f32 %v982, %v992
  %v995 = vmul.f32 %v993, %v993
  %v996 = vmul.f32 %v994, %v994
  %v997 = vsel %vm57, %v995, 0.0
  %998 = vadd.xlane.f32.xlu0 %v997
  %v999 = vpop.xlane.xlu0 %998
  %v1000 = vsel %vm57, %v996, 0.0
  %1001 = vadd.xlane.f32.xlu0 %v1000
  %v1002 = vpop.xlane.xlu0 %1001
  %v1003 = vmul.f32 %v999, %v70
  %v1004 = vmul.f32 %v1002, %v70
  %v1005 = vadd.f32 %v1003, 1e-12
  %v1006 = vadd.f32 %v1004, 1e-12
  %v1007 = vrsqrt.pop %v1005
  %v1008 = vmul.f32 %v1007, %v1005
  %v1009 = vmul.f32 %v1008, %v1007
  %v1010 = vmul.f32 0.5, %v1009
  %v1011 = vsub.f32 1.5, %v1010
  %v1012 = vmul.f32 %v1007, %v1011
  %vm1013 = vweird.f32 %v1005
  %vm1014 = vweird.f32 %v1007
  %vm1015 = vmor %vm1013, %vm1014
  %v1016 = vsel %vm1015, %v1007, %v1012
  %v1017 = vrsqrt.pop %v1006
  %v1018 = vmul.f32 %v1017, %v1006
  %v1019 = vmul.f32 %v1018, %v1017
  %v1020 = vmul.f32 0.5, %v1019
  %v1021 = vsub.f32 1.5, %v1020
  %v1022 = vmul.f32 %v1017, %v1021
  %vm1023 = vweird.f32 %v1006
  %vm1024 = vweird.f32 %v1017
  %vm1025 = vmor %vm1023, %vm1024
  %v1026 = vsel %vm1025, %v1017, %v1022
  %v1027 = vmul.f32 %v993, %v1016
  %v1028 = vmul.f32 %v994, %v1026
  %v1030 = vperm.slane %v983, 0
  %v1032 = vmul.f32 %v1027, %v1030
  %v1033 = vmul.f32 %v1028, %v1030
  %v1035 = vperm.slane %v984, 0
  %v1037 = vadd.f32 %v1032, %v1035
  %v1038 = vadd.f32 %v1033, %v1035
  %1039 = vst.msk [vmem:[%s16] sm:$0xff] %vm57, %v1037
  %1040 = vst.msk [vmem:[%s16 + $0x8] sm:$0xff] %vm57, %v1038
  // Predicated region
  $region66: #{unilm_forward.3} parent=0 // pred_check
    _
  $region67: #{unilm_forward.3} parent=0 // pred_check_branch
    %1042 = sbr.rel (0) target = $region69
  $region68: #{unilm_forward.3} parent=0 // pred_region
    _
  $region69: #{unilm_forward.3} parent=0 // pred_fallthru
    _
  // Predicated region
  $region70: #{unilm_forward.3} parent=0 // pred_check
    _
  $region71: #{unilm_forward.3} parent=0 // pred_check_branch
    %1044 = sbr.rel (0) target = $region73
  $region72: #{unilm_forward.3} parent=0 // pred_region
    _
  $region73: #{unilm_forward.3} parent=0 // pred_fallthru
    _

</llo_original>
